<compile_context>
chip_gen: v7x
topology: tpu7x:2x2x1
jax: 0.10.0
libtpu: 0.0.40
codegen_flags: <defaults>
</compile_context>

<pallas_src>
import math

import jax
import jax.numpy as jnp
from jax.experimental import pallas as pl
from jax.experimental.pallas import tpu as pltpu

EPS = 1e-5  # PyTorch BatchNorm1d default eps


# ----------------------------------------------------------------------------
# Backbone stub kernel (dual branch, branch weights concatenated along F).
# ----------------------------------------------------------------------------
def _backbone_dual_kernel(x_ref, wcat_ref, bcat_ref, y_on_ref, y_tg_ref):
    # x_ref   : (tb*HW, Cin)  bf16   (NHWC-flat tile of the batch)
    # wcat_ref: (Cin, 2F)     bf16   (online ++ momentum weights)
    # bcat_ref: (1, 2F)       f32
    # y_*_ref : (tb, F)       f32
    tb, feat = y_on_ref.shape
    hw = x_ref.shape[0] // tb

    # Single MXU matmul for the whole tile and both branches (M=tb*HW, N=2F).
    h = jnp.dot(x_ref[...], wcat_ref[...],
                preferred_element_type=jnp.float32)          # (tb*HW, 2F) f32
    h = jnp.maximum(h + bcat_ref[...], 0.0)                  # bias + ReLU

    # Global average pool over HW (leading-dim split reshape, then a
    # cross-sublane reduction per batch row).
    pooled = jnp.mean(h.reshape(tb, hw, 2 * feat), axis=1)   # (tb, 2F)

    # Two unmasked, lane-dense whole-block stores (no per-row writes).
    y_on_ref[...] = pooled[:, :feat]
    y_tg_ref[...] = pooled[:, feat:]


def backbone_dual_forward(x_nchw, wc_cat, bc_cat, tb=8):
    """Both backbone branches from one read of x.  Returns (y_on, y_tg)."""
    B, Cin, H, W = x_nchw.shape
    F2 = wc_cat.shape[1]
    F = F2 // 2
    HW = H * W

    # Host-side layout: NHWC-flat + bf16 cast (one fused XLA pass over x) so
    # the in-kernel contraction is a single 2D matmul with K = Cin.
    x_flat = x_nchw.transpose(0, 2, 3, 1).reshape(B * HW, Cin).astype(jnp.bfloat16)

    # Batch tile: multiple of 8 (sublane constraint on the (tb, F) outputs) or
    # the whole batch.
    tb = min(tb, B)
    while tb > 1 and B % tb != 0:
        tb -= 1
    if tb != B and tb % 8 != 0:
        tb = B
    grid = (B // tb,)

    y_on, y_tg = pl.pallas_call(
        _backbone_dual_kernel,
        out_shape=(jax.ShapeDtypeStruct((B, F), jnp.float32),
                   jax.ShapeDtypeStruct((B, F), jnp.float32)),
        grid=grid,
        in_specs=[
            pl.BlockSpec((tb * HW, Cin), lambda i: (i, 0)),
            pl.BlockSpec((Cin, F2), lambda i: (0, 0)),
            pl.BlockSpec((1, F2), lambda i: (0, 0)),
        ],
        out_specs=(pl.BlockSpec((tb, F), lambda i: (i, 0)),
                   pl.BlockSpec((tb, F), lambda i: (i, 0))),
        compiler_params=pltpu.CompilerParams(
            dimension_semantics=("parallel",)),
    )(x_flat, wc_cat, bc_cat)
    return y_on, y_tg


# ----------------------------------------------------------------------------
# Fused MLP head kernel: Linear -> BatchNorm1d (batch stats) -> ReLU -> Linear
# grid = (branch, HID tile); Linear-2 partials accumulate into the resident
# output block (its block index is constant across the HID axis).
# ----------------------------------------------------------------------------
def _mlp_head_kernel(x_ref, w1_ref, g_ref, beta_ref, w2_ref, b2_ref, o_ref):
    j = pl.program_id(1)                      # HID reduction axis (innermost)

    @pl.when(j == 0)
    def _():
        # Initialize the resident output block with the Linear-2 bias; removes
        # both a separate zero-init and a final bias pass.
        o_ref[0] = jnp.broadcast_to(b2_ref[0], o_ref.shape[1:])

    # Linear 1 (bf16 MXU matmul, f32 accumulation).  The Linear-1 bias is
    # omitted: a per-feature constant added before training-mode BatchNorm is
    # exactly cancelled by the mean subtraction.
    h = jnp.dot(x_ref[0], w1_ref[0], preferred_element_type=jnp.float32)

    # Training-mode BatchNorm1d with biased batch statistics.  Stats are
    # per-HID-feature over the batch, so HID tiling is exact.  All BN/ReLU
    # math stays f32 (v5e has no bf16 VPU/EUP); cast to bf16 only at the MXU
    # operand boundary below.
    mu = jnp.mean(h, axis=0, keepdims=True)
    d = h - mu
    var = jnp.mean(d * d, axis=0, keepdims=True)
    hn = d * jax.lax.rsqrt(var + EPS) * g_ref[0] + beta_ref[0]
    hr = jnp.maximum(hn, 0.0)

    # Linear 2: partial contribution of this HID tile, accumulated directly
    # into the resident f32 output block.
    o_ref[0] += jnp.dot(hr.astype(w2_ref.dtype), w2_ref[0],
                        preferred_element_type=jnp.float32)


def _choose_hid_tile(in_dim, hid, out_dim, batch, budget=24 << 20):
    """Largest HID tile whose per-step VMEM footprint fits the budget.

    The 24 MiB budget stays under the default scoped VMEM limit on every
    generation (v5e/v6e default 16/32 MiB scoped of 128 MiB physical, v7x
    32 MiB of 64 MiB), so no vmem_limit_bytes override is needed.  For the
    real BYOL dims (2048 -> 4096 -> 256) this lands on t_h = 2048.
    """
    def need(t):
        return (2 * in_dim * t * 2          # w1 bf16, double-buffered
                + 2 * t * out_dim * 2       # w2 bf16, double-buffered
                + 2 * 2 * 2 * t * 4         # gamma/beta f32, double-buffered
                + 2 * batch * in_dim * 2    # x bf16, double-buffered
                + batch * t * 4             # h f32 intermediate
                + batch * out_dim * 4)      # resident f32 output block

    t = hid
    while need(t) > budget:
        nxt = t // 2
        if t % 2 or nxt % 128 or hid % nxt:
            break
        t = nxt
    assert hid % t == 0 and (t == hid or t % 128 == 0), (hid, t)
    return t


def mlp_heads_forward(x_stacked, head_params):
    """Run NBR fused heads (branch axis "parallel").  x_stacked: (NBR, B, IN)."""
    w1, g, beta, w2, b2 = head_params          # leading dim = NBR on all
    NBR, B, IN = x_stacked.shape
    HID = w1.shape[2]
    OUT = w2.shape[2]
    t_h = _choose_hid_tile(IN, HID, OUT, B)
    n_h = HID // t_h
    x_bf = x_stacked.astype(jnp.bfloat16)

    # TODO(synk): if profiling shows the w1 HBM stream exposed at real dims,
    # add pipeline_mode=pl.Buffered(3) on the w1/w2 BlockSpecs (skip on v7x if
    # it pushes past the VMEM budget).
    return pl.pallas_call(
        _mlp_head_kernel,
        out_shape=jax.ShapeDtypeStruct((NBR, B, OUT), jnp.float32),
        grid=(NBR, n_h),
        in_specs=[
            pl.BlockSpec((1, B, IN), lambda br, j: (br, 0, 0)),
            pl.BlockSpec((1, IN, t_h), lambda br, j: (br, 0, j)),
            pl.BlockSpec((1, 1, t_h), lambda br, j: (br, 0, j)),
            pl.BlockSpec((1, 1, t_h), lambda br, j: (br, 0, j)),
            pl.BlockSpec((1, t_h, OUT), lambda br, j: (br, j, 0)),
            pl.BlockSpec((1, 1, OUT), lambda br, j: (br, 0, 0)),
        ],
        out_specs=pl.BlockSpec((1, B, OUT), lambda br, j: (br, 0, 0)),
        compiler_params=pltpu.CompilerParams(
            dimension_semantics=("parallel", "arbitrary")),
    )(x_bf, w1, g, beta, w2, b2)


# ----------------------------------------------------------------------------
# BYOL forward = (online prediction, detached momentum/target projection)
# ----------------------------------------------------------------------------
@jax.jit
def byol_forward(x, packed):
    # one fused backbone call for both branches (x is read once)
    y_on, y_tg = backbone_dual_forward(x, *packed["backbone_cat"])
    # both projection heads (online + momentum) in one pallas_call
    z_both = mlp_heads_forward(jnp.stack([y_on, y_tg]),
                               packed["projection_stacked"])
    z_on = z_both[0]
    z_tg = jax.lax.stop_gradient(z_both[1])        # .detach()
    # online prediction head (single-branch stack)
    p_on = mlp_heads_forward(z_on[None], packed["prediction_stacked"])[0]
    return p_on, z_tg


# ----------------------------------------------------------------------------
# Deterministic parameter init (PyTorch-style uniform linear init) + packing
# into the kernel-friendly layout (branch concatenation / stacking, bf16 cast)
# done once at construction time, not per forward call.
# ----------------------------------------------------------------------------
def _init_linear(key, fan_in, fan_out):
    kw, kb = jax.random.split(key)
    bound = 1.0 / math.sqrt(fan_in)
    w = jax.random.uniform(kw, (fan_in, fan_out), jnp.float32, -bound, bound)
    b = jax.random.uniform(kb, (1, fan_out), jnp.float32, -bound, bound)
    return w, b


def _init_head(key, in_dim, hid_dim, out_dim):
    k1, k2 = jax.random.split(key)
    w1, _b1 = _init_linear(k1, in_dim, hid_dim)
    # _b1 (Linear-1 bias) is dropped: exactly cancelled by the training-mode
    # BatchNorm mean subtraction.  (Not valid for eval-mode running stats.)
    gamma = jnp.ones((1, hid_dim), jnp.float32)
    beta = jnp.zeros((1, hid_dim), jnp.float32)
    w2, b2 = _init_linear(k2, hid_dim, out_dim)
    return (w1, gamma, beta, w2, b2)            # all f32; pack casts to bf16


def pack_params(base):
    wc_on, bc_on = base["backbone"]
    wc_tg, bc_tg = base["backbone_momentum"]
    wc_cat = jnp.concatenate([wc_on, wc_tg], axis=1).astype(jnp.bfloat16)
    bc_cat = jnp.concatenate([bc_on, bc_tg], axis=1)          # (1, 2F) f32

    def stack_heads(heads):
        w1 = jnp.stack([h[0] for h in heads]).astype(jnp.bfloat16)
        g = jnp.stack([h[1] for h in heads])
        bt = jnp.stack([h[2] for h in heads])
        w2 = jnp.stack([h[3] for h in heads]).astype(jnp.bfloat16)
        b2 = jnp.stack([h[4] for h in heads])
        return (w1, g, bt, w2, b2)

    return {
        "backbone_cat": (wc_cat, bc_cat),
        "projection_stacked": stack_heads([base["projection"],
                                           base["projection_momentum"]]),
        "prediction_stacked": stack_heads([base["prediction"]]),
    }


# ----------------------------------------------------------------------------
# Pure-JAX reference (matches the kernel's bf16-operand / f32-accum math)
# ----------------------------------------------------------------------------
def _ref_forward(x, base):
    def bb(xx, wc, bc):
        B, Cin, H, W = xx.shape
        xf = xx.transpose(0, 2, 3, 1).reshape(B, H * W, Cin).astype(jnp.bfloat16)
        h = jnp.einsum("bsc,cf->bsf", xf, wc.astype(jnp.bfloat16),
                       preferred_element_type=jnp.float32)
        h = jnp.maximum(h + bc, 0.0)
        return jnp.mean(h, axis=1)

    def head(xx, p):
        w1, g, beta, w2, b2 = p
        h = jnp.dot(xx.astype(jnp.bfloat16), w1.astype(jnp.bfloat16),
                    preferred_element_type=jnp.float32)
        mu = h.mean(0, keepdims=True)
        d = h - mu
        var = (d * d).mean(0, keepdims=True)
        hn = d * jax.lax.rsqrt(var + EPS) * g + beta
        hr = jnp.maximum(hn, 0.0)
        return jnp.dot(hr.astype(jnp.bfloat16), w2.astype(jnp.bfloat16),
                       preferred_element_type=jnp.float32) + b2

    y_on = bb(x, *base["backbone"])
    y_tg = bb(x, *base["backbone_momentum"])
    p_on = head(head(y_on, base["projection"]), base["prediction"])
    z_tg = head(y_tg, base["projection_momentum"])
    return p_on, z_tg


if __name__ == "__main__":
    # Small stand-in dims (real BYOL: ResNet50 2048 -> 4096 -> 256)
    B, Cin, H, W = 16, 4, 16, 16
    FEAT, HID, OUT = 128, 512, 128

    key = jax.random.PRNGKey(0)
    kx, kbb, kproj, kpred = jax.random.split(key, 4)

    backbone_params = _init_linear(kbb, Cin, FEAT)        # (wc, bc)
    proj_params = _init_head(kproj, FEAT, HID, OUT)
    pred_params = _init_head(kpred, OUT, HID, OUT)

    base = {
        "backbone": backbone_params,
        "projection": proj_params,
        "prediction": pred_params,
        # copy.deepcopy at construction -> identical initial weights
        "backbone_momentum": backbone_params,
        "projection_momentum": proj_params,
    }
    packed = pack_params(base)

    x = jax.random.normal(kx, (B, Cin, H, W), jnp.float32)

    online, target = jax.block_until_ready(byol_forward(x, packed))
    ref_online, ref_target = _ref_forward(x, base)

    assert online.shape == (B, OUT) and target.shape == (B, OUT)
    assert jnp.allclose(online, ref_online, atol=2e-2, rtol=2e-2), (
        float(jnp.max(jnp.abs(online - ref_online))))
    assert jnp.allclose(target, ref_target, atol=2e-2, rtol=2e-2), (
        float(jnp.max(jnp.abs(target - ref_target))))

    print("KERNEL_OK")
</pallas_src>

<mosaic_0001>
module attributes {stable_mosaic.version = 11 : i64} {
  func.func @_backbone_dual_kernel(%arg0: i32, %arg1: memref<2048x4xbf16, #tpu.memory_space<vmem>>, %arg2: memref<4x256xbf16, #tpu.memory_space<vmem>>, %arg3: memref<1x256xf32, #tpu.memory_space<vmem>>, %arg4: memref<8x128xf32, #tpu.memory_space<vmem>>, %arg5: memref<8x128xf32, #tpu.memory_space<vmem>>) attributes {dimension_semantics = [#tpu.dimension_semantics<parallel>], iteration_bounds = array<i64: 2>, scalar_prefetch = 0 : i64, scratch_operands = 0 : i64, tpu.core_type = #tpu.core_type<tc>, window_params = [{transform_indices = @transform_0, window_bounds = array<i64: 2048, 4>}, {pipeline_mode = #tpu.pipeline_mode<synchronous>, transform_indices = @transform_1, window_bounds = array<i64: 4, 256>}, {pipeline_mode = #tpu.pipeline_mode<synchronous>, transform_indices = @transform_2, window_bounds = array<i64: 1, 256>}, {transform_indices = @transform_3, window_bounds = array<i64: 8, 128>}, {transform_indices = @transform_4, window_bounds = array<i64: 8, 128>}]} {
    %c0 = arith.constant 0 : index
    %c0_0 = arith.constant 0 : index
    %0 = vector.load %arg1[%c0, %c0_0] : memref<2048x4xbf16, #tpu.memory_space<vmem>>, vector<2048x4xbf16>
    %c0_1 = arith.constant 0 : index
    %c0_2 = arith.constant 0 : index
    %1 = vector.load %arg2[%c0_1, %c0_2] : memref<4x256xbf16, #tpu.memory_space<vmem>>, vector<4x256xbf16>
    %cst = arith.constant dense<0.000000e+00> : vector<2048x256xf32>
    %2 = tpu.matmul %0, %1, %cst {dimension_numbers = #tpu.dot_dimension_numbers<[1], [0], [0], [1], [0, 0, 1, 1], [], []>} : vector<2048x4xbf16>, vector<4x256xbf16>, vector<2048x256xf32> -> vector<2048x256xf32>
    %c0_3 = arith.constant 0 : index
    %c0_4 = arith.constant 0 : index
    %3 = vector.load %arg3[%c0_3, %c0_4] : memref<1x256xf32, #tpu.memory_space<vmem>>, vector<1x256xf32>
    %4 = vector.broadcast %3 : vector<1x256xf32> to vector<2048x256xf32>
    %5 = arith.addf %2, %4 : vector<2048x256xf32>
    %cst_5 = arith.constant 0.000000e+00 : f32
    %6 = vector.broadcast %cst_5 : f32 to vector<2048x256xf32>
    %7 = arith.maximumf %5, %6 : vector<2048x256xf32>
    %8 = vector.shape_cast %7 : vector<2048x256xf32> to vector<8x256x256xf32>
    %cst_6 = arith.constant dense<0.000000e+00> : vector<8x256xf32>
    %9 = vector.multi_reduction <add>, %8, %cst_6 [1] : vector<8x256x256xf32> to vector<8x256xf32>
    %cst_7 = arith.constant 2.560000e+02 : f32
    %10 = vector.broadcast %cst_7 : f32 to vector<8x256xf32>
    %11 = arith.divf %9, %10 : vector<8x256xf32>
    %12 = vector.extract_strided_slice %11 {offsets = [0, 0], sizes = [8, 128], strides = [1, 1]} : vector<8x256xf32> to vector<8x128xf32>
    %c0_8 = arith.constant 0 : index
    %c0_9 = arith.constant 0 : index
    %13 = vector.load %arg4[%c0_8, %c0_9] : memref<8x128xf32, #tpu.memory_space<vmem>>, vector<8x128xf32>
    tpu.vector_store %arg4[%c0_8, %c0_9], %12 {strides = array<i32>} : memref<8x128xf32, #tpu.memory_space<vmem>>, vector<8x128xf32>,
    %14 = vector.extract_strided_slice %11 {offsets = [0, 128], sizes = [8, 128], strides = [1, 1]} : vector<8x256xf32> to vector<8x128xf32>
    %c0_10 = arith.constant 0 : index
    %c0_11 = arith.constant 0 : index
    %15 = vector.load %arg5[%c0_10, %c0_11] : memref<8x128xf32, #tpu.memory_space<vmem>>, vector<8x128xf32>
    tpu.vector_store %arg5[%c0_10, %c0_11], %14 {strides = array<i32>} : memref<8x128xf32, #tpu.memory_space<vmem>>, vector<8x128xf32>,
    return
  }
  func.func @transform_0(%arg0: i32) -> (i32, i32) {
    %c0_i32 = arith.constant 0 : i32
    %c0_i32_0 = arith.constant 0 : i32
    return %arg0, %c0_i32 : i32, i32
  }
  func.func @transform_1(%arg0: i32) -> (i32, i32) {
    %c0_i32 = arith.constant 0 : i32
    %c0_i32_0 = arith.constant 0 : i32
    %c0_i32_1 = arith.constant 0 : i32
    return %c0_i32, %c0_i32_0 : i32, i32
  }
  func.func @transform_2(%arg0: i32) -> (i32, i32) {
    %c0_i32 = arith.constant 0 : i32
    %c0_i32_0 = arith.constant 0 : i32
    %c0_i32_1 = arith.constant 0 : i32
    return %c0_i32, %c0_i32_0 : i32, i32
  }
  func.func @transform_3(%arg0: i32) -> (i32, i32) {
    %c0_i32 = arith.constant 0 : i32
    %c0_i32_0 = arith.constant 0 : i32
    return %arg0, %c0_i32 : i32, i32
  }
  func.func @transform_4(%arg0: i32) -> (i32, i32) {
    %c0_i32 = arith.constant 0 : i32
    %c0_i32_0 = arith.constant 0 : i32
    return %arg0, %c0_i32 : i32, i32
  }
}

module attributes {stable_mosaic.version = 11 : i64} {
  func.func @_mlp_head_kernel(%arg0: i32, %arg1: i32, %arg2: memref<1x16x128xbf16, #tpu.memory_space<vmem>>, %arg3: memref<1x128x512xbf16, #tpu.memory_space<vmem>>, %arg4: memref<1x1x512xf32, #tpu.memory_space<vmem>>, %arg5: memref<1x1x512xf32, #tpu.memory_space<vmem>>, %arg6: memref<1x512x128xbf16, #tpu.memory_space<vmem>>, %arg7: memref<1x1x128xf32, #tpu.memory_space<vmem>>, %arg8: memref<1x16x128xf32, #tpu.memory_space<vmem>>) attributes {dimension_semantics = [#tpu.dimension_semantics<parallel>, #tpu.dimension_semantics<arbitrary>], iteration_bounds = array<i64: 2, 1>, scalar_prefetch = 0 : i64, scratch_operands = 0 : i64, tpu.core_type = #tpu.core_type<tc>, window_params = [{transform_indices = @transform_0, window_bounds = array<i64: 1, 16, 128>}, {transform_indices = @transform_1, window_bounds = array<i64: 1, 128, 512>}, {transform_indices = @transform_2, window_bounds = array<i64: 1, 1, 512>}, {transform_indices = @transform_3, window_bounds = array<i64: 1, 1, 512>}, {transform_indices = @transform_4, window_bounds = array<i64: 1, 512, 128>}, {transform_indices = @transform_5, window_bounds = array<i64: 1, 1, 128>}, {transform_indices = @transform_6, window_bounds = array<i64: 1, 16, 128>}]} {
    %c0_i32 = arith.constant 0 : i32
    %0 = arith.cmpi eq, %arg1, %c0_i32 : i32
    %1 = arith.extui %0 : i1 to i32
    %c0_i32_0 = arith.constant 0 : i32
    %2 = arith.cmpi ne, %1, %c0_i32_0 : i32
    scf.if %2 {
      %c0_28 = arith.constant 0 : index
      %c0_29 = arith.constant 0 : index
      %c0_30 = arith.constant 0 : index
      %44 = vector.load %arg7[%c0_28, %c0_29, %c0_30] : memref<1x1x128xf32, #tpu.memory_space<vmem>>, vector<1x1x128xf32>
      %45 = vector.shape_cast %44 : vector<1x1x128xf32> to vector<1x128xf32>
      %46 = vector.shape_cast %45 : vector<1x128xf32> to vector<1x128xf32>
      %47 = vector.broadcast %46 : vector<1x128xf32> to vector<16x128xf32>
      %c0_31 = arith.constant 0 : index
      %c0_32 = arith.constant 0 : index
      %c0_33 = arith.constant 0 : index
      %48 = vector.load %arg8[%c0_31, %c0_32, %c0_33] : memref<1x16x128xf32, #tpu.memory_space<vmem>>, vector<1x16x128xf32>
      %49 = vector.shape_cast %48 : vector<1x16x128xf32> to vector<16x128xf32>
      %50 = vector.shape_cast %47 : vector<16x128xf32> to vector<1x16x128xf32>
      tpu.vector_store %arg8[%c0_31, %c0_32, %c0_33], %50 {strides = array<i32>} : memref<1x16x128xf32, #tpu.memory_space<vmem>>, vector<1x16x128xf32>,
    } else {
    }
    %c0 = arith.constant 0 : index
    %c0_1 = arith.constant 0 : index
    %c0_2 = arith.constant 0 : index
    %3 = vector.load %arg2[%c0, %c0_1, %c0_2] : memref<1x16x128xbf16, #tpu.memory_space<vmem>>, vector<1x16x128xbf16>
    %4 = vector.shape_cast %3 : vector<1x16x128xbf16> to vector<16x128xbf16>
    %c0_3 = arith.constant 0 : index
    %c0_4 = arith.constant 0 : index
    %c0_5 = arith.constant 0 : index
    %5 = vector.load %arg3[%c0_3, %c0_4, %c0_5] : memref<1x128x512xbf16, #tpu.memory_space<vmem>>, vector<1x128x512xbf16>
    %6 = vector.shape_cast %5 : vector<1x128x512xbf16> to vector<128x512xbf16>
    %cst = arith.constant dense<0.000000e+00> : vector<16x512xf32>
    %7 = tpu.matmul %4, %6, %cst {dimension_numbers = #tpu.dot_dimension_numbers<[1], [0], [0], [1], [0, 0, 1, 1], [], []>} : vector<16x128xbf16>, vector<128x512xbf16>, vector<16x512xf32> -> vector<16x512xf32>
    %cst_6 = arith.constant dense<0.000000e+00> : vector<512xf32>
    %8 = vector.multi_reduction <add>, %7, %cst_6 [0] : vector<16x512xf32> to vector<512xf32>
    %9 = vector.shape_cast %8 : vector<512xf32> to vector<1x512xf32>
    %cst_7 = arith.constant 1.600000e+01 : f32
    %10 = vector.broadcast %cst_7 : f32 to vector<1x512xf32>
    %11 = arith.divf %9, %10 : vector<1x512xf32>
    %12 = vector.broadcast %11 : vector<1x512xf32> to vector<16x512xf32>
    %13 = arith.subf %7, %12 : vector<16x512xf32>
    %14 = arith.mulf %13, %13 : vector<16x512xf32>
    %cst_8 = arith.constant dense<0.000000e+00> : vector<512xf32>
    %15 = vector.multi_reduction <add>, %14, %cst_8 [0] : vector<16x512xf32> to vector<512xf32>
    %16 = vector.shape_cast %15 : vector<512xf32> to vector<1x512xf32>
    %cst_9 = arith.constant 1.600000e+01 : f32
    %17 = vector.broadcast %cst_9 : f32 to vector<1x512xf32>
    %18 = arith.divf %16, %17 : vector<1x512xf32>
    %cst_10 = arith.constant 9.99999974E-6 : f32
    %19 = vector.broadcast %cst_10 : f32 to vector<1x512xf32>
    %20 = arith.addf %18, %19 : vector<1x512xf32>
    %21 = math.rsqrt %20 : vector<1x512xf32>
    %22 = vector.broadcast %21 : vector<1x512xf32> to vector<16x512xf32>
    %23 = arith.mulf %13, %22 : vector<16x512xf32>
    %c0_11 = arith.constant 0 : index
    %c0_12 = arith.constant 0 : index
    %c0_13 = arith.constant 0 : index
    %24 = vector.load %arg4[%c0_11, %c0_12, %c0_13] : memref<1x1x512xf32, #tpu.memory_space<vmem>>, vector<1x1x512xf32>
    %25 = vector.shape_cast %24 : vector<1x1x512xf32> to vector<1x512xf32>
    %26 = vector.broadcast %25 : vector<1x512xf32> to vector<16x512xf32>
    %27 = arith.mulf %23, %26 : vector<16x512xf32>
    %c0_14 = arith.constant 0 : index
    %c0_15 = arith.constant 0 : index
    %c0_16 = arith.constant 0 : index
    %28 = vector.load %arg5[%c0_14, %c0_15, %c0_16] : memref<1x1x512xf32, #tpu.memory_space<vmem>>, vector<1x1x512xf32>
    %29 = vector.shape_cast %28 : vector<1x1x512xf32> to vector<1x512xf32>
    %30 = vector.broadcast %29 : vector<1x512xf32> to vector<16x512xf32>
    %31 = arith.addf %27, %30 : vector<16x512xf32>
    %cst_17 = arith.constant 0.000000e+00 : f32
    %32 = vector.broadcast %cst_17 : f32 to vector<16x512xf32>
    %33 = arith.maximumf %31, %32 : vector<16x512xf32>
    %c0_18 = arith.constant 0 : index
    %c0_19 = arith.constant 0 : index
    %c0_20 = arith.constant 0 : index
    %34 = vector.load %arg8[%c0_18, %c0_19, %c0_20] : memref<1x16x128xf32, #tpu.memory_space<vmem>>, vector<1x16x128xf32>
    %35 = vector.shape_cast %34 : vector<1x16x128xf32> to vector<16x128xf32>
    %36 = arith.truncf %33 : vector<16x512xf32> to vector<16x512xbf16>
    %c0_21 = arith.constant 0 : index
    %c0_22 = arith.constant 0 : index
    %c0_23 = arith.constant 0 : index
    %37 = vector.load %arg6[%c0_21, %c0_22, %c0_23] : memref<1x512x128xbf16, #tpu.memory_space<vmem>>, vector<1x512x128xbf16>
    %38 = vector.shape_cast %37 : vector<1x512x128xbf16> to vector<512x128xbf16>
    %cst_24 = arith.constant dense<0.000000e+00> : vector<16x128xf32>
    %39 = tpu.matmul %36, %38, %cst_24 {dimension_numbers = #tpu.dot_dimension_numbers<[1], [0], [0], [1], [0, 0, 1, 1], [], []>} : vector<16x512xbf16>, vector<512x128xbf16>, vector<16x128xf32> -> vector<16x128xf32>
    %40 = arith.addf %35, %39 : vector<16x128xf32>
    %c0_25 = arith.constant 0 : index
    %c0_26 = arith.constant 0 : index
    %c0_27 = arith.constant 0 : index
    %41 = vector.load %arg8[%c0_25, %c0_26, %c0_27] : memref<1x16x128xf32, #tpu.memory_space<vmem>>, vector<1x16x128xf32>
    %42 = vector.shape_cast %41 : vector<1x16x128xf32> to vector<16x128xf32>
    %43 = vector.shape_cast %40 : vector<16x128xf32> to vector<1x16x128xf32>
    tpu.vector_store %arg8[%c0_25, %c0_26, %c0_27], %43 {strides = array<i32>} : memref<1x16x128xf32, #tpu.memory_space<vmem>>, vector<1x16x128xf32>,
    return
  }
  func.func @transform_0(%arg0: i32, %arg1: i32) -> (i32, i32, i32) {
    %c0_i32 = arith.constant 0 : i32
    %c0_i32_0 = arith.constant 0 : i32
    %c0_i32_1 = arith.constant 0 : i32
    return %arg0, %c0_i32, %c0_i32_0 : i32, i32, i32
  }
  func.func @transform_1(%arg0: i32, %arg1: i32) -> (i32, i32, i32) {
    %c0_i32 = arith.constant 0 : i32
    %c0_i32_0 = arith.constant 0 : i32
    return %arg0, %c0_i32, %arg1 : i32, i32, i32
  }
  func.func @transform_2(%arg0: i32, %arg1: i32) -> (i32, i32, i32) {
    %c0_i32 = arith.constant 0 : i32
    %c0_i32_0 = arith.constant 0 : i32
    return %arg0, %c0_i32, %arg1 : i32, i32, i32
  }
  func.func @transform_3(%arg0: i32, %arg1: i32) -> (i32, i32, i32) {
    %c0_i32 = arith.constant 0 : i32
    %c0_i32_0 = arith.constant 0 : i32
    return %arg0, %c0_i32, %arg1 : i32, i32, i32
  }
  func.func @transform_4(%arg0: i32, %arg1: i32) -> (i32, i32, i32) {
    %c0_i32 = arith.constant 0 : i32
    %c0_i32_0 = arith.constant 0 : i32
    return %arg0, %arg1, %c0_i32 : i32, i32, i32
  }
  func.func @transform_5(%arg0: i32, %arg1: i32) -> (i32, i32, i32) {
    %c0_i32 = arith.constant 0 : i32
    %c0_i32_0 = arith.constant 0 : i32
    %c0_i32_1 = arith.constant 0 : i32
    return %arg0, %c0_i32, %c0_i32_0 : i32, i32, i32
  }
  func.func @transform_6(%arg0: i32, %arg1: i32) -> (i32, i32, i32) {
    %c0_i32 = arith.constant 0 : i32
    %c0_i32_0 = arith.constant 0 : i32
    %c0_i32_1 = arith.constant 0 : i32
    return %arg0, %c0_i32, %c0_i32_0 : i32, i32, i32
  }
}

module attributes {stable_mosaic.version = 11 : i64} {
  func.func @_mlp_head_kernel(%arg0: i32, %arg1: i32, %arg2: memref<1x16x128xbf16, #tpu.memory_space<vmem>>, %arg3: memref<1x128x512xbf16, #tpu.memory_space<vmem>>, %arg4: memref<1x1x512xf32, #tpu.memory_space<vmem>>, %arg5: memref<1x1x512xf32, #tpu.memory_space<vmem>>, %arg6: memref<1x512x128xbf16, #tpu.memory_space<vmem>>, %arg7: memref<1x1x128xf32, #tpu.memory_space<vmem>>, %arg8: memref<1x16x128xf32, #tpu.memory_space<vmem>>) attributes {dimension_semantics = [#tpu.dimension_semantics<parallel>, #tpu.dimension_semantics<arbitrary>], iteration_bounds = array<i64: 1, 1>, scalar_prefetch = 0 : i64, scratch_operands = 0 : i64, tpu.core_type = #tpu.core_type<tc>, window_params = [{transform_indices = @transform_0, window_bounds = array<i64: 1, 16, 128>}, {transform_indices = @transform_1, window_bounds = array<i64: 1, 128, 512>}, {transform_indices = @transform_2, window_bounds = array<i64: 1, 1, 512>}, {transform_indices = @transform_3, window_bounds = array<i64: 1, 1, 512>}, {transform_indices = @transform_4, window_bounds = array<i64: 1, 512, 128>}, {transform_indices = @transform_5, window_bounds = array<i64: 1, 1, 128>}, {transform_indices = @transform_6, window_bounds = array<i64: 1, 16, 128>}]} {
    %c0_i32 = arith.constant 0 : i32
    %0 = arith.cmpi eq, %arg1, %c0_i32 : i32
    %1 = arith.extui %0 : i1 to i32
    %c0_i32_0 = arith.constant 0 : i32
    %2 = arith.cmpi ne, %1, %c0_i32_0 : i32
    scf.if %2 {
      %c0_28 = arith.constant 0 : index
      %c0_29 = arith.constant 0 : index
      %c0_30 = arith.constant 0 : index
      %44 = vector.load %arg7[%c0_28, %c0_29, %c0_30] : memref<1x1x128xf32, #tpu.memory_space<vmem>>, vector<1x1x128xf32>
      %45 = vector.shape_cast %44 : vector<1x1x128xf32> to vector<1x128xf32>
      %46 = vector.shape_cast %45 : vector<1x128xf32> to vector<1x128xf32>
      %47 = vector.broadcast %46 : vector<1x128xf32> to vector<16x128xf32>
      %c0_31 = arith.constant 0 : index
      %c0_32 = arith.constant 0 : index
      %c0_33 = arith.constant 0 : index
      %48 = vector.load %arg8[%c0_31, %c0_32, %c0_33] : memref<1x16x128xf32, #tpu.memory_space<vmem>>, vector<1x16x128xf32>
      %49 = vector.shape_cast %48 : vector<1x16x128xf32> to vector<16x128xf32>
      %50 = vector.shape_cast %47 : vector<16x128xf32> to vector<1x16x128xf32>
      tpu.vector_store %arg8[%c0_31, %c0_32, %c0_33], %50 {strides = array<i32>} : memref<1x16x128xf32, #tpu.memory_space<vmem>>, vector<1x16x128xf32>,
    } else {
    }
    %c0 = arith.constant 0 : index
    %c0_1 = arith.constant 0 : index
    %c0_2 = arith.constant 0 : index
    %3 = vector.load %arg2[%c0, %c0_1, %c0_2] : memref<1x16x128xbf16, #tpu.memory_space<vmem>>, vector<1x16x128xbf16>
    %4 = vector.shape_cast %3 : vector<1x16x128xbf16> to vector<16x128xbf16>
    %c0_3 = arith.constant 0 : index
    %c0_4 = arith.constant 0 : index
    %c0_5 = arith.constant 0 : index
    %5 = vector.load %arg3[%c0_3, %c0_4, %c0_5] : memref<1x128x512xbf16, #tpu.memory_space<vmem>>, vector<1x128x512xbf16>
    %6 = vector.shape_cast %5 : vector<1x128x512xbf16> to vector<128x512xbf16>
    %cst = arith.constant dense<0.000000e+00> : vector<16x512xf32>
    %7 = tpu.matmul %4, %6, %cst {dimension_numbers = #tpu.dot_dimension_numbers<[1], [0], [0], [1], [0, 0, 1, 1], [], []>} : vector<16x128xbf16>, vector<128x512xbf16>, vector<16x512xf32> -> vector<16x512xf32>
    %cst_6 = arith.constant dense<0.000000e+00> : vector<512xf32>
    %8 = vector.multi_reduction <add>, %7, %cst_6 [0] : vector<16x512xf32> to vector<512xf32>
    %9 = vector.shape_cast %8 : vector<512xf32> to vector<1x512xf32>
    %cst_7 = arith.constant 1.600000e+01 : f32
    %10 = vector.broadcast %cst_7 : f32 to vector<1x512xf32>
    %11 = arith.divf %9, %10 : vector<1x512xf32>
    %12 = vector.broadcast %11 : vector<1x512xf32> to vector<16x512xf32>
    %13 = arith.subf %7, %12 : vector<16x512xf32>
    %14 = arith.mulf %13, %13 : vector<16x512xf32>
    %cst_8 = arith.constant dense<0.000000e+00> : vector<512xf32>
    %15 = vector.multi_reduction <add>, %14, %cst_8 [0] : vector<16x512xf32> to vector<512xf32>
    %16 = vector.shape_cast %15 : vector<512xf32> to vector<1x512xf32>
    %cst_9 = arith.constant 1.600000e+01 : f32
    %17 = vector.broadcast %cst_9 : f32 to vector<1x512xf32>
    %18 = arith.divf %16, %17 : vector<1x512xf32>
    %cst_10 = arith.constant 9.99999974E-6 : f32
    %19 = vector.broadcast %cst_10 : f32 to vector<1x512xf32>
    %20 = arith.addf %18, %19 : vector<1x512xf32>
    %21 = math.rsqrt %20 : vector<1x512xf32>
    %22 = vector.broadcast %21 : vector<1x512xf32> to vector<16x512xf32>
    %23 = arith.mulf %13, %22 : vector<16x512xf32>
    %c0_11 = arith.constant 0 : index
    %c0_12 = arith.constant 0 : index
    %c0_13 = arith.constant 0 : index
    %24 = vector.load %arg4[%c0_11, %c0_12, %c0_13] : memref<1x1x512xf32, #tpu.memory_space<vmem>>, vector<1x1x512xf32>
    %25 = vector.shape_cast %24 : vector<1x1x512xf32> to vector<1x512xf32>
    %26 = vector.broadcast %25 : vector<1x512xf32> to vector<16x512xf32>
    %27 = arith.mulf %23, %26 : vector<16x512xf32>
    %c0_14 = arith.constant 0 : index
    %c0_15 = arith.constant 0 : index
    %c0_16 = arith.constant 0 : index
    %28 = vector.load %arg5[%c0_14, %c0_15, %c0_16] : memref<1x1x512xf32, #tpu.memory_space<vmem>>, vector<1x1x512xf32>
    %29 = vector.shape_cast %28 : vector<1x1x512xf32> to vector<1x512xf32>
    %30 = vector.broadcast %29 : vector<1x512xf32> to vector<16x512xf32>
    %31 = arith.addf %27, %30 : vector<16x512xf32>
    %cst_17 = arith.constant 0.000000e+00 : f32
    %32 = vector.broadcast %cst_17 : f32 to vector<16x512xf32>
    %33 = arith.maximumf %31, %32 : vector<16x512xf32>
    %c0_18 = arith.constant 0 : index
    %c0_19 = arith.constant 0 : index
    %c0_20 = arith.constant 0 : index
    %34 = vector.load %arg8[%c0_18, %c0_19, %c0_20] : memref<1x16x128xf32, #tpu.memory_space<vmem>>, vector<1x16x128xf32>
    %35 = vector.shape_cast %34 : vector<1x16x128xf32> to vector<16x128xf32>
    %36 = arith.truncf %33 : vector<16x512xf32> to vector<16x512xbf16>
    %c0_21 = arith.constant 0 : index
    %c0_22 = arith.constant 0 : index
    %c0_23 = arith.constant 0 : index
    %37 = vector.load %arg6[%c0_21, %c0_22, %c0_23] : memref<1x512x128xbf16, #tpu.memory_space<vmem>>, vector<1x512x128xbf16>
    %38 = vector.shape_cast %37 : vector<1x512x128xbf16> to vector<512x128xbf16>
    %cst_24 = arith.constant dense<0.000000e+00> : vector<16x128xf32>
    %39 = tpu.matmul %36, %38, %cst_24 {dimension_numbers = #tpu.dot_dimension_numbers<[1], [0], [0], [1], [0, 0, 1, 1], [], []>} : vector<16x512xbf16>, vector<512x128xbf16>, vector<16x128xf32> -> vector<16x128xf32>
    %40 = arith.addf %35, %39 : vector<16x128xf32>
    %c0_25 = arith.constant 0 : index
    %c0_26 = arith.constant 0 : index
    %c0_27 = arith.constant 0 : index
    %41 = vector.load %arg8[%c0_25, %c0_26, %c0_27] : memref<1x16x128xf32, #tpu.memory_space<vmem>>, vector<1x16x128xf32>
    %42 = vector.shape_cast %41 : vector<1x16x128xf32> to vector<16x128xf32>
    %43 = vector.shape_cast %40 : vector<16x128xf32> to vector<1x16x128xf32>
    tpu.vector_store %arg8[%c0_25, %c0_26, %c0_27], %43 {strides = array<i32>} : memref<1x16x128xf32, #tpu.memory_space<vmem>>, vector<1x16x128xf32>,
    return
  }
  func.func @transform_0(%arg0: i32, %arg1: i32) -> (i32, i32, i32) {
    %c0_i32 = arith.constant 0 : i32
    %c0_i32_0 = arith.constant 0 : i32
    %c0_i32_1 = arith.constant 0 : i32
    return %arg0, %c0_i32, %c0_i32_0 : i32, i32, i32
  }
  func.func @transform_1(%arg0: i32, %arg1: i32) -> (i32, i32, i32) {
    %c0_i32 = arith.constant 0 : i32
    %c0_i32_0 = arith.constant 0 : i32
    return %arg0, %c0_i32, %arg1 : i32, i32, i32
  }
  func.func @transform_2(%arg0: i32, %arg1: i32) -> (i32, i32, i32) {
    %c0_i32 = arith.constant 0 : i32
    %c0_i32_0 = arith.constant 0 : i32
    return %arg0, %c0_i32, %arg1 : i32, i32, i32
  }
  func.func @transform_3(%arg0: i32, %arg1: i32) -> (i32, i32, i32) {
    %c0_i32 = arith.constant 0 : i32
    %c0_i32_0 = arith.constant 0 : i32
    return %arg0, %c0_i32, %arg1 : i32, i32, i32
  }
  func.func @transform_4(%arg0: i32, %arg1: i32) -> (i32, i32, i32) {
    %c0_i32 = arith.constant 0 : i32
    %c0_i32_0 = arith.constant 0 : i32
    return %arg0, %arg1, %c0_i32 : i32, i32, i32
  }
  func.func @transform_5(%arg0: i32, %arg1: i32) -> (i32, i32, i32) {
    %c0_i32 = arith.constant 0 : i32
    %c0_i32_0 = arith.constant 0 : i32
    %c0_i32_1 = arith.constant 0 : i32
    return %arg0, %c0_i32, %c0_i32_0 : i32, i32, i32
  }
  func.func @transform_6(%arg0: i32, %arg1: i32) -> (i32, i32, i32) {
    %c0_i32 = arith.constant 0 : i32
    %c0_i32_0 = arith.constant 0 : i32
    %c0_i32_1 = arith.constant 0 : i32
    return %arg0, %c0_i32, %c0_i32_0 : i32, i32, i32
  }
}

</mosaic_0001>

<llo_original>
// kernel: byol_forward.5
$region0: #{byol_forward.5}
  #allocation0 [shape = 'u32[]', space=smem, size = 0x4, offset = 0x4, fixed_abs, tag = 'smem constant byte address 0x4 - core index']
  #allocation1 [shape = 'u32[144,128]{1,0:T(1,128)}', space=vmem, size = 0x12000, scoped, tag = 'internal scratch']
  %s0 = inlined_call_operand.vmem [shape: bf16[1,16,128], index: 0, kind: input, shape index: {}]
  %s1 = inlined_call_operand.vmem [shape: bf16[1,128,512], index: 1, kind: input, shape index: {}]
  %s2 = inlined_call_operand.vmem [shape: f32[1,1,512], index: 2, kind: input, shape index: {}]
  %s3 = inlined_call_operand.vmem [shape: f32[1,1,512], index: 3, kind: input, shape index: {}]
  %s4 = inlined_call_operand.vmem [shape: bf16[1,512,128], index: 4, kind: input, shape index: {}]
  %s5 = inlined_call_operand.vmem [shape: f32[1,1,128], index: 5, kind: input, shape index: {}]
  %s6 = inlined_call_operand.hbm [shape: f32[1,16,128], index: 6, kind: output, shape index: {}]
  %s7 = sld [smem:[#allocation0]]
  $region38: #{byol_forward.5} parent=0
    _
  %s9 = ssub.s32 1, %s7
  %s10 = scalar_select 0, %s9, %s7
  $region1: #{byol_forward.5} parent=0
    #allocation2 [shape = 'u8[8192]{0}', space=vmem, size = 0x2000, scoped, tag = 'output window, operand 0, single buffered']
    #allocation3 [shape = 's32[1]{0}', space=sflag, size = 0x4, scoped, tag = 'scoped memory for byol_forward.5']
    %11 = vsyncpa [#allocation3], 0
    // Predicated region
    $region2: #{byol_forward.5} parent=1 // pred_check
      _
    $region3: #{byol_forward.5} parent=1 // pred_check_branch
      %13 = sbr.rel (0) target = $region5
    $region4: #{byol_forward.5} parent=1 // pred_region
      _
    $region5: #{byol_forward.5} parent=1 // pred_fallthru
      _
    // Predicated region
    $region6: #{byol_forward.5} parent=1 // pred_check
      _
    $region7: #{byol_forward.5} parent=1 // pred_check_branch
      %15 = sbr.rel (0) target = $region9
    $region8: #{byol_forward.5} parent=1 // pred_region
      _
    $region9: #{byol_forward.5} parent=1 // pred_fallthru
      _
    // Predicated region
    $region10: #{byol_forward.5} parent=1 // pred_check
      _
    $region11: #{byol_forward.5} parent=1 // pred_check_branch
      %17 = sbr.rel (0) target = $region13
    $region12: #{byol_forward.5} parent=1 // pred_region
      _
    $region13: #{byol_forward.5} parent=1 // pred_fallthru
      _
    // Predicated region
    $region14: #{byol_forward.5} parent=1 // pred_check
      _
    $region15: #{byol_forward.5} parent=1 // pred_check_branch
      %19 = sbr.rel (0) target = $region17
    $region16: #{byol_forward.5} parent=1 // pred_region
      _
    $region17: #{byol_forward.5} parent=1 // pred_fallthru
      _
    // Predicated region
    $region18: #{byol_forward.5} parent=1 // pred_check
      _
    $region19: #{byol_forward.5} parent=1 // pred_check_branch
      %21 = sbr.rel (0) target = $region21
    $region20: #{byol_forward.5} parent=1 // pred_region
      _
    $region21: #{byol_forward.5} parent=1 // pred_fallthru
      _
    // Predicated region
    $region22: #{byol_forward.5} parent=1 // pred_check
      _
    $region23: #{byol_forward.5} parent=1 // pred_check_branch
      %23 = sbr.rel (0) target = $region25
    $region24: #{byol_forward.5} parent=1 // pred_region
      _
    $region25: #{byol_forward.5} parent=1 // pred_fallthru
      _
    %p25 = scmp.eq.s32.totalorder 0, 0
    // Predicated region
    $region26: #{byol_forward.5} parent=1 // pred_check
      %p26 = pneg %p25
    $region27: #{byol_forward.5} parent=1 // pred_check_branch
      %28 = sbr.rel (%p26) target = $region29
    $region28: #{byol_forward.5} parent=1 // pred_region
      %v29 = vld [vmem:[%s5] sm:$0x1]
      %v31 = vlaneseq
      %v32 = vshrl.u32 %v31, 7
      %v33 = vsub.s32 0, %v32
      %v34 = vrot.slane %v29, %v33
      %36 = vst [vmem:[#allocation2] sm:$0xff] %v34
      %37 = vst [vmem:[#allocation2 + $0x8] sm:$0xff] %v34
    $region29: #{byol_forward.5} parent=1 // pred_fallthru
      _
    %v38 = vld [vmem:[%s0] sm:$0xf]
    %v39 = vld [vmem:[%s0 + $0x4] sm:$0xf]
    %v40 = vld [vmem:[%s1] sm:$0xff]
    %v41 = vld [vmem:[%s1 + $0x8] sm:$0xff]
    %v42 = vld [vmem:[%s1 + $0x10] sm:$0xff]
    %v43 = vld [vmem:[%s1 + $0x18] sm:$0xff]
    %v44 = vld [vmem:[%s1 + $0x20] sm:$0xff]
    %v45 = vld [vmem:[%s1 + $0x28] sm:$0xff]
    %v46 = vld [vmem:[%s1 + $0x30] sm:$0xff]
    %v47 = vld [vmem:[%s1 + $0x38] sm:$0xff]
    %v48 = vld [vmem:[%s1 + $0x40] sm:$0xff]
    %v49 = vld [vmem:[%s1 + $0x48] sm:$0xff]
    %v50 = vld [vmem:[%s1 + $0x50] sm:$0xff]
    %v51 = vld [vmem:[%s1 + $0x58] sm:$0xff]
    %v52 = vld [vmem:[%s1 + $0x60] sm:$0xff]
    %v53 = vld [vmem:[%s1 + $0x68] sm:$0xff]
    %v54 = vld [vmem:[%s1 + $0x70] sm:$0xff]
    %v55 = vld [vmem:[%s1 + $0x78] sm:$0xff]
    %v56 = vld [vmem:[%s1 + $0x80] sm:$0xff]
    %v57 = vld [vmem:[%s1 + $0x88] sm:$0xff]
    %v58 = vld [vmem:[%s1 + $0x90] sm:$0xff]
    %v59 = vld [vmem:[%s1 + $0x98] sm:$0xff]
    %v60 = vld [vmem:[%s1 + $0xa0] sm:$0xff]
    %v61 = vld [vmem:[%s1 + $0xa8] sm:$0xff]
    %v62 = vld [vmem:[%s1 + $0xb0] sm:$0xff]
    %v63 = vld [vmem:[%s1 + $0xb8] sm:$0xff]
    %v64 = vld [vmem:[%s1 + $0xc0] sm:$0xff]
    %v65 = vld [vmem:[%s1 + $0xc8] sm:$0xff]
    %v66 = vld [vmem:[%s1 + $0xd0] sm:$0xff]
    %v67 = vld [vmem:[%s1 + $0xd8] sm:$0xff]
    %v68 = vld [vmem:[%s1 + $0xe0] sm:$0xff]
    %v69 = vld [vmem:[%s1 + $0xe8] sm:$0xff]
    %v70 = vld [vmem:[%s1 + $0xf0] sm:$0xff]
    %v71 = vld [vmem:[%s1 + $0xf8] sm:$0xff]
    %v74 = vunpack.c.l.b16 %v38
    %v75 = vunpack.c.l.b16 %v39
    %v76 = vpack.c.b16 %v75, %v74
    %v110 = vunpack.c.l.b16 %v40
    %v111 = vunpack.c.h.b16 %v40
    %v112 = vunpack.c.l.b16 %v41
    %v113 = vunpack.c.h.b16 %v41
    %v114 = vunpack.c.l.b16 %v42
    %v115 = vunpack.c.h.b16 %v42
    %v116 = vunpack.c.l.b16 %v43
    %v117 = vunpack.c.h.b16 %v43
    %v118 = vunpack.c.l.b16 %v44
    %v119 = vunpack.c.h.b16 %v44
    %v120 = vunpack.c.l.b16 %v45
    %v121 = vunpack.c.h.b16 %v45
    %v122 = vunpack.c.l.b16 %v46
    %v123 = vunpack.c.h.b16 %v46
    %v124 = vunpack.c.l.b16 %v47
    %v125 = vunpack.c.h.b16 %v47
    %v126 = vunpack.c.l.b16 %v48
    %v127 = vunpack.c.h.b16 %v48
    %v128 = vunpack.c.l.b16 %v49
    %v129 = vunpack.c.h.b16 %v49
    %v130 = vunpack.c.l.b16 %v50
    %v131 = vunpack.c.h.b16 %v50
    %v132 = vunpack.c.l.b16 %v51
    %v133 = vunpack.c.h.b16 %v51
    %v134 = vunpack.c.l.b16 %v52
    %v135 = vunpack.c.h.b16 %v52
    %v136 = vunpack.c.l.b16 %v53
    %v137 = vunpack.c.h.b16 %v53
    %v138 = vunpack.c.l.b16 %v54
    %v139 = vunpack.c.h.b16 %v54
    %v140 = vunpack.c.l.b16 %v55
    %v141 = vunpack.c.h.b16 %v55
    %v142 = vunpack.c.l.b16 %v56
    %v143 = vunpack.c.h.b16 %v56
    %v144 = vunpack.c.l.b16 %v57
    %v145 = vunpack.c.h.b16 %v57
    %v146 = vunpack.c.l.b16 %v58
    %v147 = vunpack.c.h.b16 %v58
    %v148 = vunpack.c.l.b16 %v59
    %v149 = vunpack.c.h.b16 %v59
    %v150 = vunpack.c.l.b16 %v60
    %v151 = vunpack.c.h.b16 %v60
    %v152 = vunpack.c.l.b16 %v61
    %v153 = vunpack.c.h.b16 %v61
    %v154 = vunpack.c.l.b16 %v62
    %v155 = vunpack.c.h.b16 %v62
    %v156 = vunpack.c.l.b16 %v63
    %v157 = vunpack.c.h.b16 %v63
    %v158 = vunpack.c.l.b16 %v64
    %v159 = vunpack.c.h.b16 %v64
    %v160 = vunpack.c.l.b16 %v65
    %v161 = vunpack.c.h.b16 %v65
    %v162 = vunpack.c.l.b16 %v66
    %v163 = vunpack.c.h.b16 %v66
    %v164 = vunpack.c.l.b16 %v67
    %v165 = vunpack.c.h.b16 %v67
    %v166 = vunpack.c.l.b16 %v68
    %v167 = vunpack.c.h.b16 %v68
    %v168 = vunpack.c.l.b16 %v69
    %v169 = vunpack.c.h.b16 %v69
    %v170 = vunpack.c.l.b16 %v70
    %v171 = vunpack.c.h.b16 %v70
    %v172 = vunpack.c.l.b16 %v71
    %v173 = vunpack.c.h.b16 %v71
    %v174 = vpack.c.b16 %v114, %v110
    %v175 = vpack.c.b16 %v115, %v111
    %v176 = vpack.c.b16 %v116, %v112
    %v177 = vpack.c.b16 %v117, %v113
    %v178 = vpack.c.b16 %v122, %v118
    %v179 = vpack.c.b16 %v123, %v119
    %v180 = vpack.c.b16 %v124, %v120
    %v181 = vpack.c.b16 %v125, %v121
    %v182 = vpack.c.b16 %v130, %v126
    %v183 = vpack.c.b16 %v131, %v127
    %v184 = vpack.c.b16 %v132, %v128
    %v185 = vpack.c.b16 %v133, %v129
    %v186 = vpack.c.b16 %v138, %v134
    %v187 = vpack.c.b16 %v139, %v135
    %v188 = vpack.c.b16 %v140, %v136
    %v189 = vpack.c.b16 %v141, %v137
    %v190 = vpack.c.b16 %v146, %v142
    %v191 = vpack.c.b16 %v147, %v143
    %v192 = vpack.c.b16 %v148, %v144
    %v193 = vpack.c.b16 %v149, %v145
    %v194 = vpack.c.b16 %v154, %v150
    %v195 = vpack.c.b16 %v155, %v151
    %v196 = vpack.c.b16 %v156, %v152
    %v197 = vpack.c.b16 %v157, %v153
    %v198 = vpack.c.b16 %v162, %v158
    %v199 = vpack.c.b16 %v163, %v159
    %v200 = vpack.c.b16 %v164, %v160
    %v201 = vpack.c.b16 %v165, %v161
    %v202 = vpack.c.b16 %v170, %v166
    %v203 = vpack.c.b16 %v171, %v167
    %v204 = vpack.c.b16 %v172, %v168
    %v205 = vpack.c.b16 %v173, %v169
    %238 = vmatprep.subr.bf16.mxu0 %v175
    %239 = vmatpush1.bf16.msra.mxu0 %v174
    %240 = vmatprep.subr.bf16.mxu0 %v179
    %241 = vmatpush1.bf16.msra.mxu0 %v178
    %242 = vmatprep.subr.bf16.mxu0 %v183
    %243 = vmatpush1.bf16.msra.mxu0 %v182
    %244 = vmatprep.subr.bf16.mxu0 %v187
    %245 = vmatpush1.bf16.msra.mxu0 %v186
    %246 = vmatprep.subr.bf16.mxu0 %v191
    %247 = vmatpush1.bf16.msra.mxu0 %v190
    %248 = vmatprep.subr.bf16.mxu0 %v195
    %249 = vmatpush1.bf16.msra.mxu0 %v194
    %250 = vmatprep.subr.bf16.mxu0 %v199
    %251 = vmatpush1.bf16.msra.mxu0 %v198
    %252 = vmatprep.subr.bf16.mxu0 %v203
    %253 = vmatpush1.bf16.msra.mxu0 %v202
    %254 = vmatprep.subr.bf16.mxu0 0
    %255 = vmatpush1.bf16.msra.mxu0 0
    %256 = vmatprep.subr.bf16.mxu0 0
    %257 = vmatpush1.bf16.msra.mxu0 0
    %258 = vmatprep.subr.bf16.mxu0 0
    %259 = vmatpush1.bf16.msra.mxu0 0
    %260 = vmatprep.subr.bf16.mxu0 0
    %261 = vmatpush1.bf16.msra.mxu0 0
    %262 = vmatprep.subr.bf16.mxu0 0
    %263 = vmatpush1.bf16.msra.mxu0 0
    %264 = vmatprep.subr.bf16.mxu0 0
    %265 = vmatpush1.bf16.msra.mxu0 0
    %266 = vmatprep.subr.bf16.mxu0 0
    %267 = vmatpush1.bf16.msra.mxu0 0
    %268 = vmatprep.subr.bf16.mxu0 0
    %269 = vmatpush1.bf16.msra.mxu0 0
    %270 = vmatprep.mubr.bf16.mxu0 0
    %271 = vmatmul.mubr.bf16.gmra.mrb[0].mxu0 %v76
    %v272 = vpop.f32.mrb[0].mxu0
    %v273 = vadd.f32 0.0, %v272
    %v274 = vpop.f32.mrb[0].mxu0
    %v275 = vadd.f32 0.0, %v274
    %v276 = vpop.f32.mrb[0].mxu0
    %v277 = vadd.f32 0.0, %v276
    %v278 = vpop.f32.mrb[0].mxu0
    %v279 = vadd.f32 0.0, %v278
    %280 = vdwg.mxu0
    %281 = vmatprep.subr.bf16.mxu0 %v177
    %282 = vmatpush1.bf16.msra.mxu0 %v176
    %283 = vmatprep.subr.bf16.mxu0 %v181
    %284 = vmatpush1.bf16.msra.mxu0 %v180
    %285 = vmatprep.subr.bf16.mxu0 %v185
    %286 = vmatpush1.bf16.msra.mxu0 %v184
    %287 = vmatprep.subr.bf16.mxu0 %v189
    %288 = vmatpush1.bf16.msra.mxu0 %v188
    %289 = vmatprep.subr.bf16.mxu0 %v193
    %290 = vmatpush1.bf16.msra.mxu0 %v192
    %291 = vmatprep.subr.bf16.mxu0 %v197
    %292 = vmatpush1.bf16.msra.mxu0 %v196
    %293 = vmatprep.subr.bf16.mxu0 %v201
    %294 = vmatpush1.bf16.msra.mxu0 %v200
    %295 = vmatprep.subr.bf16.mxu0 %v205
    %296 = vmatpush1.bf16.msra.mxu0 %v204
    %297 = vmatprep.subr.bf16.mxu0 0
    %298 = vmatpush1.bf16.msra.mxu0 0
    %299 = vmatprep.subr.bf16.mxu0 0
    %300 = vmatpush1.bf16.msra.mxu0 0
    %301 = vmatprep.subr.bf16.mxu0 0
    %302 = vmatpush1.bf16.msra.mxu0 0
    %303 = vmatprep.subr.bf16.mxu0 0
    %304 = vmatpush1.bf16.msra.mxu0 0
    %305 = vmatprep.subr.bf16.mxu0 0
    %306 = vmatpush1.bf16.msra.mxu0 0
    %307 = vmatprep.subr.bf16.mxu0 0
    %308 = vmatpush1.bf16.msra.mxu0 0
    %309 = vmatprep.subr.bf16.mxu0 0
    %310 = vmatpush1.bf16.msra.mxu0 0
    %311 = vmatprep.subr.bf16.mxu0 0
    %312 = vmatpush1.bf16.msra.mxu0 0
    %313 = vmatprep.mubr.bf16.mxu0 0
    %314 = vmatmul.mubr.bf16.gmra.mrb[0].mxu0 %v76
    %v315 = vpop.f32.mrb[0].mxu0
    %v316 = vadd.f32 0.0, %v315
    %v317 = vpop.f32.mrb[0].mxu0
    %v318 = vadd.f32 0.0, %v317
    %v319 = vpop.f32.mrb[0].mxu0
    %v320 = vadd.f32 0.0, %v319
    %v321 = vpop.f32.mrb[0].mxu0
    %v322 = vadd.f32 0.0, %v321
    %323 = vdwg.mxu0
    %v324 = vadd.f32 %v273, %v277
    %v325 = vrot.slane %v324, 4
    %v326 = vadd.f32 %v324, %v325
    %v327 = vrot.slane %v326, 2
    %v328 = vadd.f32 %v326, %v327
    %v329 = vrot.slane %v328, 1
    %v330 = vadd.f32 %v328, %v329
    %v331 = vadd.f32 %v275, %v279
    %v332 = vrot.slane %v331, 4
    %v333 = vadd.f32 %v331, %v332
    %v334 = vrot.slane %v333, 2
    %v335 = vadd.f32 %v333, %v334
    %v336 = vrot.slane %v335, 1
    %v337 = vadd.f32 %v335, %v336
    %v338 = vadd.f32 %v316, %v320
    %v339 = vrot.slane %v338, 4
    %v340 = vadd.f32 %v338, %v339
    %v341 = vrot.slane %v340, 2
    %v342 = vadd.f32 %v340, %v341
    %v343 = vrot.slane %v342, 1
    %v344 = vadd.f32 %v342, %v343
    %v345 = vadd.f32 %v318, %v322
    %v346 = vrot.slane %v345, 4
    %v347 = vadd.f32 %v345, %v346
    %v348 = vrot.slane %v347, 2
    %v349 = vadd.f32 %v347, %v348
    %v350 = vrot.slane %v349, 1
    %v351 = vadd.f32 %v349, %v350
    %v352 = vrcp.pop 16.0
    %v353 = vmul.f32 %v330, %v352
    %v354 = vmul.f32 %v337, %v352
    %v355 = vmul.f32 %v344, %v352
    %v356 = vmul.f32 %v351, %v352
    %v357 = vsub.f32 %v273, %v353
    %v358 = vsub.f32 %v275, %v354
    %v359 = vsub.f32 %v316, %v355
    %v360 = vsub.f32 %v318, %v356
    %v361 = vsub.f32 %v277, %v353
    %v362 = vsub.f32 %v279, %v354
    %v363 = vsub.f32 %v320, %v355
    %v364 = vsub.f32 %v322, %v356
    %v365 = vmul.f32 %v357, %v357
    %v366 = vmul.f32 %v358, %v358
    %v367 = vmul.f32 %v359, %v359
    %v368 = vmul.f32 %v360, %v360
    %v369 = vmul.f32 %v361, %v361
    %v370 = vmul.f32 %v362, %v362
    %v371 = vmul.f32 %v363, %v363
    %v372 = vmul.f32 %v364, %v364
    %v373 = vadd.f32 %v365, %v369
    %v374 = vrot.slane %v373, 4
    %v375 = vadd.f32 %v373, %v374
    %v376 = vrot.slane %v375, 2
    %v377 = vadd.f32 %v375, %v376
    %v378 = vrot.slane %v377, 1
    %v379 = vadd.f32 %v377, %v378
    %v380 = vadd.f32 %v366, %v370
    %v381 = vrot.slane %v380, 4
    %v382 = vadd.f32 %v380, %v381
    %v383 = vrot.slane %v382, 2
    %v384 = vadd.f32 %v382, %v383
    %v385 = vrot.slane %v384, 1
    %v386 = vadd.f32 %v384, %v385
    %v387 = vadd.f32 %v367, %v371
    %v388 = vrot.slane %v387, 4
    %v389 = vadd.f32 %v387, %v388
    %v390 = vrot.slane %v389, 2
    %v391 = vadd.f32 %v389, %v390
    %v392 = vrot.slane %v391, 1
    %v393 = vadd.f32 %v391, %v392
    %v394 = vadd.f32 %v368, %v372
    %v395 = vrot.slane %v394, 4
    %v396 = vadd.f32 %v394, %v395
    %v397 = vrot.slane %v396, 2
    %v398 = vadd.f32 %v396, %v397
    %v399 = vrot.slane %v398, 1
    %v400 = vadd.f32 %v398, %v399
    %v401 = vmul.f32 %v379, %v352
    %v402 = vmul.f32 %v386, %v352
    %v403 = vmul.f32 %v393, %v352
    %v404 = vmul.f32 %v400, %v352
    %v405 = vadd.f32 %v401, 1e-05
    %v406 = vadd.f32 %v402, 1e-05
    %v407 = vadd.f32 %v403, 1e-05
    %v408 = vadd.f32 %v404, 1e-05
    %v409 = vrsqrt.pop %v405
    %v410 = vrsqrt.pop %v406
    %v411 = vrsqrt.pop %v407
    %v412 = vrsqrt.pop %v408
    %v413 = vmul.f32 %v357, %v409
    %v414 = vmul.f32 %v358, %v410
    %v415 = vmul.f32 %v359, %v411
    %v416 = vmul.f32 %v360, %v412
    %v417 = vmul.f32 %v361, %v409
    %v418 = vmul.f32 %v362, %v410
    %v419 = vmul.f32 %v363, %v411
    %v420 = vmul.f32 %v364, %v412
    %v421 = vld [vmem:[%s2] sm:$0xf]
    %v423 = vlaneseq
    %v424 = vshrl.u32 %v423, 7
    %v425 = vsub.s32 0, %v424
    %v426 = vrot.slane %v421, %v425
    %v427 = vlaneseq
    %v428 = vshrl.u32 %v427, 7
    %v429 = vsub.s32 1, %v428
    %v430 = vrot.slane %v421, %v429
    %v431 = vlaneseq
    %v432 = vshrl.u32 %v431, 7
    %v433 = vsub.s32 2, %v432
    %v434 = vrot.slane %v421, %v433
    %v435 = vlaneseq
    %v436 = vshrl.u32 %v435, 7
    %v437 = vsub.s32 3, %v436
    %v438 = vrot.slane %v421, %v437
    %v443 = vmul.f32 %v413, %v426
    %v444 = vmul.f32 %v414, %v430
    %v445 = vmul.f32 %v415, %v434
    %v446 = vmul.f32 %v416, %v438
    %v447 = vmul.f32 %v417, %v426
    %v448 = vmul.f32 %v418, %v430
    %v449 = vmul.f32 %v419, %v434
    %v450 = vmul.f32 %v420, %v438
    %v451 = vld [vmem:[%s3] sm:$0xf]
    %v453 = vlaneseq
    %v454 = vshrl.u32 %v453, 7
    %v455 = vsub.s32 0, %v454
    %v456 = vrot.slane %v451, %v455
    %v457 = vlaneseq
    %v458 = vshrl.u32 %v457, 7
    %v459 = vsub.s32 1, %v458
    %v460 = vrot.slane %v451, %v459
    %v461 = vlaneseq
    %v462 = vshrl.u32 %v461, 7
    %v463 = vsub.s32 2, %v462
    %v464 = vrot.slane %v451, %v463
    %v465 = vlaneseq
    %v466 = vshrl.u32 %v465, 7
    %v467 = vsub.s32 3, %v466
    %v468 = vrot.slane %v451, %v467
    %v473 = vadd.f32 %v443, %v456
    %v474 = vadd.f32 %v444, %v460
    %v475 = vadd.f32 %v445, %v464
    %v476 = vadd.f32 %v446, %v468
    %v477 = vadd.f32 %v447, %v456
    %v478 = vadd.f32 %v448, %v460
    %v479 = vadd.f32 %v449, %v464
    %v480 = vadd.f32 %v450, %v468
    %v481 = vmax.f32 %v473, 0.0
    %v482 = vmax.f32 %v474, 0.0
    %v483 = vmax.f32 %v475, 0.0
    %v484 = vmax.f32 %v476, 0.0
    %v485 = vmax.f32 %v477, 0.0
    %v486 = vmax.f32 %v478, 0.0
    %v487 = vmax.f32 %v479, 0.0
    %v488 = vmax.f32 %v480, 0.0
    %v489 = vld [vmem:[#allocation2] sm:$0xff]
    %v490 = vld [vmem:[#allocation2 + $0x8] sm:$0xff]
    %v491 = vpack.c.bf16 %v485, %v481
    %v492 = vpack.c.bf16 %v486, %v482
    %v493 = vpack.c.bf16 %v487, %v483
    %v494 = vpack.c.bf16 %v488, %v484
    %v495 = vld [vmem:[%s4] sm:$0xf]
    %v496 = vld [vmem:[%s4 + $0x4] sm:$0xf]
    %v497 = vld [vmem:[%s4 + $0x8] sm:$0xf]
    %v498 = vld [vmem:[%s4 + $0xc] sm:$0xf]
    %v499 = vld [vmem:[%s4 + $0x10] sm:$0xf]
    %v500 = vld [vmem:[%s4 + $0x14] sm:$0xf]
    %v501 = vld [vmem:[%s4 + $0x18] sm:$0xf]
    %v502 = vld [vmem:[%s4 + $0x1c] sm:$0xf]
    %v503 = vld [vmem:[%s4 + $0x20] sm:$0xf]
    %v504 = vld [vmem:[%s4 + $0x24] sm:$0xf]
    %v505 = vld [vmem:[%s4 + $0x28] sm:$0xf]
    %v506 = vld [vmem:[%s4 + $0x2c] sm:$0xf]
    %v507 = vld [vmem:[%s4 + $0x30] sm:$0xf]
    %v508 = vld [vmem:[%s4 + $0x34] sm:$0xf]
    %v509 = vld [vmem:[%s4 + $0x38] sm:$0xf]
    %v510 = vld [vmem:[%s4 + $0x3c] sm:$0xf]
    %v511 = vld [vmem:[%s4 + $0x40] sm:$0xf]
    %v512 = vld [vmem:[%s4 + $0x44] sm:$0xf]
    %v513 = vld [vmem:[%s4 + $0x48] sm:$0xf]
    %v514 = vld [vmem:[%s4 + $0x4c] sm:$0xf]
    %v515 = vld [vmem:[%s4 + $0x50] sm:$0xf]
    %v516 = vld [vmem:[%s4 + $0x54] sm:$0xf]
    %v517 = vld [vmem:[%s4 + $0x58] sm:$0xf]
    %v518 = vld [vmem:[%s4 + $0x5c] sm:$0xf]
    %v519 = vld [vmem:[%s4 + $0x60] sm:$0xf]
    %v520 = vld [vmem:[%s4 + $0x64] sm:$0xf]
    %v521 = vld [vmem:[%s4 + $0x68] sm:$0xf]
    %v522 = vld [vmem:[%s4 + $0x6c] sm:$0xf]
    %v523 = vld [vmem:[%s4 + $0x70] sm:$0xf]
    %v524 = vld [vmem:[%s4 + $0x74] sm:$0xf]
    %v525 = vld [vmem:[%s4 + $0x78] sm:$0xf]
    %v526 = vld [vmem:[%s4 + $0x7c] sm:$0xf]
    %v527 = vld [vmem:[%s4 + $0x80] sm:$0xf]
    %v528 = vld [vmem:[%s4 + $0x84] sm:$0xf]
    %v529 = vld [vmem:[%s4 + $0x88] sm:$0xf]
    %v530 = vld [vmem:[%s4 + $0x8c] sm:$0xf]
    %v531 = vld [vmem:[%s4 + $0x90] sm:$0xf]
    %v532 = vld [vmem:[%s4 + $0x94] sm:$0xf]
    %v533 = vld [vmem:[%s4 + $0x98] sm:$0xf]
    %v534 = vld [vmem:[%s4 + $0x9c] sm:$0xf]
    %v535 = vld [vmem:[%s4 + $0xa0] sm:$0xf]
    %v536 = vld [vmem:[%s4 + $0xa4] sm:$0xf]
    %v537 = vld [vmem:[%s4 + $0xa8] sm:$0xf]
    %v538 = vld [vmem:[%s4 + $0xac] sm:$0xf]
    %v539 = vld [vmem:[%s4 + $0xb0] sm:$0xf]
    %v540 = vld [vmem:[%s4 + $0xb4] sm:$0xf]
    %v541 = vld [vmem:[%s4 + $0xb8] sm:$0xf]
    %v542 = vld [vmem:[%s4 + $0xbc] sm:$0xf]
    %v543 = vld [vmem:[%s4 + $0xc0] sm:$0xf]
    %v544 = vld [vmem:[%s4 + $0xc4] sm:$0xf]
    %v545 = vld [vmem:[%s4 + $0xc8] sm:$0xf]
    %v546 = vld [vmem:[%s4 + $0xcc] sm:$0xf]
    %v547 = vld [vmem:[%s4 + $0xd0] sm:$0xf]
    %v548 = vld [vmem:[%s4 + $0xd4] sm:$0xf]
    %v549 = vld [vmem:[%s4 + $0xd8] sm:$0xf]
    %v550 = vld [vmem:[%s4 + $0xdc] sm:$0xf]
    %v551 = vld [vmem:[%s4 + $0xe0] sm:$0xf]
    %v552 = vld [vmem:[%s4 + $0xe4] sm:$0xf]
    %v553 = vld [vmem:[%s4 + $0xe8] sm:$0xf]
    %v554 = vld [vmem:[%s4 + $0xec] sm:$0xf]
    %v555 = vld [vmem:[%s4 + $0xf0] sm:$0xf]
    %v556 = vld [vmem:[%s4 + $0xf4] sm:$0xf]
    %v557 = vld [vmem:[%s4 + $0xf8] sm:$0xf]
    %v558 = vld [vmem:[%s4 + $0xfc] sm:$0xf]
    %v623 = vunpack.c.l.b16 %v495
    %v624 = vunpack.c.l.b16 %v496
    %v625 = vunpack.c.l.b16 %v497
    %v626 = vunpack.c.l.b16 %v498
    %v627 = vunpack.c.l.b16 %v499
    %v628 = vunpack.c.l.b16 %v500
    %v629 = vunpack.c.l.b16 %v501
    %v630 = vunpack.c.l.b16 %v502
    %v631 = vunpack.c.l.b16 %v503
    %v632 = vunpack.c.l.b16 %v504
    %v633 = vunpack.c.l.b16 %v505
    %v634 = vunpack.c.l.b16 %v506
    %v635 = vunpack.c.l.b16 %v507
    %v636 = vunpack.c.l.b16 %v508
    %v637 = vunpack.c.l.b16 %v509
    %v638 = vunpack.c.l.b16 %v510
    %v639 = vunpack.c.l.b16 %v511
    %v640 = vunpack.c.l.b16 %v512
    %v641 = vunpack.c.l.b16 %v513
    %v642 = vunpack.c.l.b16 %v514
    %v643 = vunpack.c.l.b16 %v515
    %v644 = vunpack.c.l.b16 %v516
    %v645 = vunpack.c.l.b16 %v517
    %v646 = vunpack.c.l.b16 %v518
    %v647 = vunpack.c.l.b16 %v519
    %v648 = vunpack.c.l.b16 %v520
    %v649 = vunpack.c.l.b16 %v521
    %v650 = vunpack.c.l.b16 %v522
    %v651 = vunpack.c.l.b16 %v523
    %v652 = vunpack.c.l.b16 %v524
    %v653 = vunpack.c.l.b16 %v525
    %v654 = vunpack.c.l.b16 %v526
    %v655 = vunpack.c.l.b16 %v527
    %v656 = vunpack.c.l.b16 %v528
    %v657 = vunpack.c.l.b16 %v529
    %v658 = vunpack.c.l.b16 %v530
    %v659 = vunpack.c.l.b16 %v531
    %v660 = vunpack.c.l.b16 %v532
    %v661 = vunpack.c.l.b16 %v533
    %v662 = vunpack.c.l.b16 %v534
    %v663 = vunpack.c.l.b16 %v535
    %v664 = vunpack.c.l.b16 %v536
    %v665 = vunpack.c.l.b16 %v537
    %v666 = vunpack.c.l.b16 %v538
    %v667 = vunpack.c.l.b16 %v539
    %v668 = vunpack.c.l.b16 %v540
    %v669 = vunpack.c.l.b16 %v541
    %v670 = vunpack.c.l.b16 %v542
    %v671 = vunpack.c.l.b16 %v543
    %v672 = vunpack.c.l.b16 %v544
    %v673 = vunpack.c.l.b16 %v545
    %v674 = vunpack.c.l.b16 %v546
    %v675 = vunpack.c.l.b16 %v547
    %v676 = vunpack.c.l.b16 %v548
    %v677 = vunpack.c.l.b16 %v549
    %v678 = vunpack.c.l.b16 %v550
    %v679 = vunpack.c.l.b16 %v551
    %v680 = vunpack.c.l.b16 %v552
    %v681 = vunpack.c.l.b16 %v553
    %v682 = vunpack.c.l.b16 %v554
    %v683 = vunpack.c.l.b16 %v555
    %v684 = vunpack.c.l.b16 %v556
    %v685 = vunpack.c.l.b16 %v557
    %v686 = vunpack.c.l.b16 %v558
    %v687 = vpack.c.b16 %v624, %v623
    %v688 = vpack.c.b16 %v626, %v625
    %v689 = vpack.c.b16 %v628, %v627
    %v690 = vpack.c.b16 %v630, %v629
    %v691 = vpack.c.b16 %v632, %v631
    %v692 = vpack.c.b16 %v634, %v633
    %v693 = vpack.c.b16 %v636, %v635
    %v694 = vpack.c.b16 %v638, %v637
    %v695 = vpack.c.b16 %v640, %v639
    %v696 = vpack.c.b16 %v642, %v641
    %v697 = vpack.c.b16 %v644, %v643
    %v698 = vpack.c.b16 %v646, %v645
    %v699 = vpack.c.b16 %v648, %v647
    %v700 = vpack.c.b16 %v650, %v649
    %v701 = vpack.c.b16 %v652, %v651
    %v702 = vpack.c.b16 %v654, %v653
    %v703 = vpack.c.b16 %v656, %v655
    %v704 = vpack.c.b16 %v658, %v657
    %v705 = vpack.c.b16 %v660, %v659
    %v706 = vpack.c.b16 %v662, %v661
    %v707 = vpack.c.b16 %v664, %v663
    %v708 = vpack.c.b16 %v666, %v665
    %v709 = vpack.c.b16 %v668, %v667
    %v710 = vpack.c.b16 %v670, %v669
    %v711 = vpack.c.b16 %v672, %v671
    %v712 = vpack.c.b16 %v674, %v673
    %v713 = vpack.c.b16 %v676, %v675
    %v714 = vpack.c.b16 %v678, %v677
    %v715 = vpack.c.b16 %v680, %v679
    %v716 = vpack.c.b16 %v682, %v681
    %v717 = vpack.c.b16 %v684, %v683
    %v718 = vpack.c.b16 %v686, %v685
    %751 = vmatprep.subr.bf16.mxu0 0
    %752 = vmatpush1.bf16.msra.mxu0 %v687
    %753 = vmatprep.subr.bf16.mxu0 0
    %754 = vmatpush1.bf16.msra.mxu0 %v688
    %755 = vmatprep.subr.bf16.mxu0 0
    %756 = vmatpush1.bf16.msra.mxu0 %v689
    %757 = vmatprep.subr.bf16.mxu0 0
    %758 = vmatpush1.bf16.msra.mxu0 %v690
    %759 = vmatprep.subr.bf16.mxu0 0
    %760 = vmatpush1.bf16.msra.mxu0 %v691
    %761 = vmatprep.subr.bf16.mxu0 0
    %762 = vmatpush1.bf16.msra.mxu0 %v692
    %763 = vmatprep.subr.bf16.mxu0 0
    %764 = vmatpush1.bf16.msra.mxu0 %v693
    %765 = vmatprep.subr.bf16.mxu0 0
    %766 = vmatpush1.bf16.msra.mxu0 %v694
    %767 = vmatprep.subr.bf16.mxu0 0
    %768 = vmatpush1.bf16.msra.mxu0 %v695
    %769 = vmatprep.subr.bf16.mxu0 0
    %770 = vmatpush1.bf16.msra.mxu0 %v696
    %771 = vmatprep.subr.bf16.mxu0 0
    %772 = vmatpush1.bf16.msra.mxu0 %v697
    %773 = vmatprep.subr.bf16.mxu0 0
    %774 = vmatpush1.bf16.msra.mxu0 %v698
    %775 = vmatprep.subr.bf16.mxu0 0
    %776 = vmatpush1.bf16.msra.mxu0 %v699
    %777 = vmatprep.subr.bf16.mxu0 0
    %778 = vmatpush1.bf16.msra.mxu0 %v700
    %779 = vmatprep.subr.bf16.mxu0 0
    %780 = vmatpush1.bf16.msra.mxu0 %v701
    %781 = vmatprep.subr.bf16.mxu0 0
    %782 = vmatpush1.bf16.msra.mxu0 %v702
    %783 = vmatprep.mubr.bf16.mxu0 %v492
    %784 = vmatmul.mubr.bf16.gmra.mrb[0].mxu0 %v491
    %v785 = vpop.f32.mrb[0].mxu0
    %v786 = vadd.f32 0.0, %v785
    %v787 = vpop.f32.mrb[0].mxu0
    %v788 = vpop.f32.mrb[0].mxu0
    %v789 = vadd.f32 0.0, %v788
    %v790 = vpop.f32.mrb[0].mxu0
    %791 = vdwg.mxu0
    %792 = vmatprep.subr.bf16.mxu0 0
    %793 = vmatpush1.bf16.msra.mxu0 %v703
    %794 = vmatprep.subr.bf16.mxu0 0
    %795 = vmatpush1.bf16.msra.mxu0 %v704
    %796 = vmatprep.subr.bf16.mxu0 0
    %797 = vmatpush1.bf16.msra.mxu0 %v705
    %798 = vmatprep.subr.bf16.mxu0 0
    %799 = vmatpush1.bf16.msra.mxu0 %v706
    %800 = vmatprep.subr.bf16.mxu0 0
    %801 = vmatpush1.bf16.msra.mxu0 %v707
    %802 = vmatprep.subr.bf16.mxu0 0
    %803 = vmatpush1.bf16.msra.mxu0 %v708
    %804 = vmatprep.subr.bf16.mxu0 0
    %805 = vmatpush1.bf16.msra.mxu0 %v709
    %806 = vmatprep.subr.bf16.mxu0 0
    %807 = vmatpush1.bf16.msra.mxu0 %v710
    %808 = vmatprep.subr.bf16.mxu0 0
    %809 = vmatpush1.bf16.msra.mxu0 %v711
    %810 = vmatprep.subr.bf16.mxu0 0
    %811 = vmatpush1.bf16.msra.mxu0 %v712
    %812 = vmatprep.subr.bf16.mxu0 0
    %813 = vmatpush1.bf16.msra.mxu0 %v713
    %814 = vmatprep.subr.bf16.mxu0 0
    %815 = vmatpush1.bf16.msra.mxu0 %v714
    %816 = vmatprep.subr.bf16.mxu0 0
    %817 = vmatpush1.bf16.msra.mxu0 %v715
    %818 = vmatprep.subr.bf16.mxu0 0
    %819 = vmatpush1.bf16.msra.mxu0 %v716
    %820 = vmatprep.subr.bf16.mxu0 0
    %821 = vmatpush1.bf16.msra.mxu0 %v717
    %822 = vmatprep.subr.bf16.mxu0 0
    %823 = vmatpush1.bf16.msra.mxu0 %v718
    %824 = vmatprep.mubr.bf16.mxu0 %v494
    %825 = vmatmul.mubr.bf16.gmra.mrb[0].mxu0 %v493
    %v826 = vpop.f32.mrb[0].mxu0
    %v827 = vadd.f32 %v786, %v826
    %v828 = vpop.f32.mrb[0].mxu0
    %v829 = vpop.f32.mrb[0].mxu0
    %v830 = vadd.f32 %v789, %v829
    %v831 = vpop.f32.mrb[0].mxu0
    %832 = vdwg.mxu0
    %v833 = vadd.f32 %v489, %v827
    %v834 = vadd.f32 %v490, %v830
    %835 = vst [vmem:[#allocation2] sm:$0xff] %v833
    %836 = vst [vmem:[#allocation2 + $0x8] sm:$0xff] %v834
    // Predicated region
    $region30: #{byol_forward.5} parent=1 // pred_check
      _
    $region31: #{byol_forward.5} parent=1 // pred_check_branch
      %838 = sbr.rel (0) target = $region33
    $region32: #{byol_forward.5} parent=1 // pred_region
      %s840 = ssub.s32 256, 256
      %841 = vsyncadd [#allocation3], %s840
      %s842 = sshll.u32 [#allocation2], 4
      %s843 = int_to_ptr.vmem [resolvable:$true] %s842
      %848 = dma.vmem_to_hbm [thread:$0]  %s843, 256, %s6, [#allocation3], 128, 128, 8
    $region33: #{byol_forward.5} parent=1 // pred_fallthru
      _
    // Predicated region
    $region34: #{byol_forward.5} parent=1 // pred_check
      _
    $region35: #{byol_forward.5} parent=1 // pred_check_branch
      %850 = sbr.rel (0) target = $region37
    $region36: #{byol_forward.5} parent=1 // pred_region
      %851 = dma.done [#allocation3], 256
    $region37: #{byol_forward.5} parent=1 // pred_fallthru
      _
    %852 = vsyncpa [#allocation3], 1

// kernel: byol_forward.4
$region0: #{byol_forward.4}
  #allocation0 [shape = 'u32[]', space=smem, size = 0x4, offset = 0x4, fixed_abs, tag = 'smem constant byte address 0x4 - core index']
  #allocation1 [shape = 'u32[144,128]{1,0:T(1,128)}', space=vmem, size = 0x12000, scoped, tag = 'internal scratch']
  %s0 = inlined_call_operand.vmem [shape: bf16[2,16,128], index: 0, kind: input, shape index: {}]
  %s1 = inlined_call_operand.vmem [shape: bf16[2,128,512], index: 1, kind: input, shape index: {}]
  %s2 = inlined_call_operand.vmem [shape: f32[2,1,512], index: 2, kind: input, shape index: {}]
  %s3 = inlined_call_operand.vmem [shape: f32[2,1,512], index: 3, kind: input, shape index: {}]
  %s4 = inlined_call_operand.vmem [shape: bf16[2,512,128], index: 4, kind: input, shape index: {}]
  %s5 = inlined_call_operand.vmem [shape: f32[2,1,128], index: 5, kind: input, shape index: {}]
  %s6 = inlined_call_operand.vmem [shape: f32[2,16,128], index: 6, kind: output, shape index: {}]
  %s7 = sld [smem:[#allocation0]]
  $region61: #{byol_forward.4} parent=0
    _
  %s9 = ssub.s32 1, %s7
  %s10 = scalar_select 0, %s9, %s7
  loop: start=0, step=1, limit=4
  $region2: #{byol_forward.4} parent=0 // loop_pre_header
    _
  $region3: #{byol_forward.4} parent=0 // loop_header
    %s12 = sphi 0, %s16
    %p13 = scmp.ge.s32.totalorder %s12, 4
    %s19 = sphi 0, %s31
    %s20 = sphi 0, %s27
    %s21 = sphi 0, %s19
    %s22 = sphi 0, %s20
    %s23 = sphi 0, %s21
    %s24 = sphi 0, %s22
    %s34 = sphi 0, %s36
    %s37 = sphi 0, %s34
    %s38 = sphi 0, %s37
    %s54 = sphi 0, %s38
    %s62 = sphi 0, %s64
    %s65 = sphi 0, %s62
    %s66 = sphi 0, %s65
    %s82 = sphi 0, %s66
    %s90 = sphi 0, %s92
    %s93 = sphi 0, %s90
    %s94 = sphi 0, %s93
    %s110 = sphi 0, %s94
    %s118 = sphi 0, %s120
    %s121 = sphi 0, %s118
    %s122 = sphi 0, %s121
    %s138 = sphi 0, %s122
    %s146 = sphi 0, %s148
    %s149 = sphi 0, %s146
    %s150 = sphi 0, %s149
    %s166 = sphi 0, %s150
    %s172 = sphi 0, %s174
    %s175 = sphi 0, %s172
    %s176 = sphi 0, %s175
    %s192 = sphi 0, %s176
    %s198 = sphi 0, %s200
    %s201 = sphi 0, %s198
    %s202 = sphi 0, %s201
    %s218 = sphi 0, %s202
  $region4: #{byol_forward.4} parent=0 // loop_header_branch
    %15 = sbr.rel (%p13) target = $region8
  $region5: #{byol_forward.4} parent=0 // loop_body
    %s17 = ssub.s32 %s12, 1
    %s18 = ssub.s32 %s12, 2
    %s25 = sadd.s32 1, %s20
    %p26 = scmp.ge.s32.totalorder %s25, 1
    %s27 = scalar_select %p26, 0, %s25
    %s28 = sadd.s32 1, %s19
    %s29 = scalar_select %p26, %s28, %s19
    %p30 = scmp.ge.s32.totalorder %s29, 2
    %s31 = scalar_select %p30, 0, %s29
    %s32 = ssub.s32 %s19, %s31
    %p33 = scmp.eq.s32.totalorder %s32, 0
    %s35 = sadd.s32 %s34, 1
    %s36 = scalar_select %p33, %s34, %s35
    %p39 = pneg %p33
    %p40 = scmp.eq.s32.totalorder %s12, 1
    %p41 = por %p39, %p40
    %p42 = scmp.ne.s32.totalorder %s34, %s37
    %p43 = scmp.eq.s32.totalorder %s12, 0
    %p44 = por %p42, %p43
    %p45 = scmp.ne.s32.totalorder %s34, %s37
    %p46 = scmp.eq.s32.totalorder %s17, 1
    %p47 = por %p45, %p46
    %p48 = scmp.ne.s32.totalorder %s37, %s38
    %p49 = scmp.eq.s32.totalorder %s17, 0
    %p50 = por %p48, %p49
    %p51 = scmp.ne.s32.totalorder %s37, %s38
    %p52 = scmp.eq.s32.totalorder %s18, 1
    %p53 = por %p51, %p52
    %p55 = scmp.ne.s32.totalorder %s38, %s54
    %p56 = scmp.eq.s32.totalorder %s18, 0
    %p57 = por %p55, %p56
    %s58 = ssub.s32 %s19, %s31
    %s59 = ssub.s32 %s20, %s27
    %s60 = sor.u32 %s58, %s59
    %p61 = scmp.eq.s32.totalorder %s60, 0
    %s63 = sadd.s32 %s62, 1
    %s64 = scalar_select %p61, %s62, %s63
    %p67 = pneg %p61
    %p68 = scmp.eq.s32.totalorder %s12, 1
    %p69 = por %p67, %p68
    %p70 = scmp.ne.s32.totalorder %s62, %s65
    %p71 = scmp.eq.s32.totalorder %s12, 0
    %p72 = por %p70, %p71
    %p73 = scmp.ne.s32.totalorder %s62, %s65
    %p74 = scmp.eq.s32.totalorder %s17, 1
    %p75 = por %p73, %p74
    %p76 = scmp.ne.s32.totalorder %s65, %s66
    %p77 = scmp.eq.s32.totalorder %s17, 0
    %p78 = por %p76, %p77
    %p79 = scmp.ne.s32.totalorder %s65, %s66
    %p80 = scmp.eq.s32.totalorder %s18, 1
    %p81 = por %p79, %p80
    %p83 = scmp.ne.s32.totalorder %s66, %s82
    %p84 = scmp.eq.s32.totalorder %s18, 0
    %p85 = por %p83, %p84
    %s86 = ssub.s32 %s19, %s31
    %s87 = ssub.s32 %s20, %s27
    %s88 = sor.u32 %s86, %s87
    %p89 = scmp.eq.s32.totalorder %s88, 0
    %s91 = sadd.s32 %s90, 1
    %s92 = scalar_select %p89, %s90, %s91
    %p95 = pneg %p89
    %p96 = scmp.eq.s32.totalorder %s12, 1
    %p97 = por %p95, %p96
    %p98 = scmp.ne.s32.totalorder %s90, %s93
    %p99 = scmp.eq.s32.totalorder %s12, 0
    %p100 = por %p98, %p99
    %p101 = scmp.ne.s32.totalorder %s90, %s93
    %p102 = scmp.eq.s32.totalorder %s17, 1
    %p103 = por %p101, %p102
    %p104 = scmp.ne.s32.totalorder %s93, %s94
    %p105 = scmp.eq.s32.totalorder %s17, 0
    %p106 = por %p104, %p105
    %p107 = scmp.ne.s32.totalorder %s93, %s94
    %p108 = scmp.eq.s32.totalorder %s18, 1
    %p109 = por %p107, %p108
    %p111 = scmp.ne.s32.totalorder %s94, %s110
    %p112 = scmp.eq.s32.totalorder %s18, 0
    %p113 = por %p111, %p112
    %s114 = ssub.s32 %s19, %s31
    %s115 = ssub.s32 %s20, %s27
    %s116 = sor.u32 %s114, %s115
    %p117 = scmp.eq.s32.totalorder %s116, 0
    %s119 = sadd.s32 %s118, 1
    %s120 = scalar_select %p117, %s118, %s119
    %p123 = pneg %p117
    %p124 = scmp.eq.s32.totalorder %s12, 1
    %p125 = por %p123, %p124
    %p126 = scmp.ne.s32.totalorder %s118, %s121
    %p127 = scmp.eq.s32.totalorder %s12, 0
    %p128 = por %p126, %p127
    %p129 = scmp.ne.s32.totalorder %s118, %s121
    %p130 = scmp.eq.s32.totalorder %s17, 1
    %p131 = por %p129, %p130
    %p132 = scmp.ne.s32.totalorder %s121, %s122
    %p133 = scmp.eq.s32.totalorder %s17, 0
    %p134 = por %p132, %p133
    %p135 = scmp.ne.s32.totalorder %s121, %s122
    %p136 = scmp.eq.s32.totalorder %s18, 1
    %p137 = por %p135, %p136
    %p139 = scmp.ne.s32.totalorder %s122, %s138
    %p140 = scmp.eq.s32.totalorder %s18, 0
    %p141 = por %p139, %p140
    %s142 = ssub.s32 %s19, %s31
    %s143 = ssub.s32 %s20, %s27
    %s144 = sor.u32 %s142, %s143
    %p145 = scmp.eq.s32.totalorder %s144, 0
    %s147 = sadd.s32 %s146, 1
    %s148 = scalar_select %p145, %s146, %s147
    %p151 = pneg %p145
    %p152 = scmp.eq.s32.totalorder %s12, 1
    %p153 = por %p151, %p152
    %p154 = scmp.ne.s32.totalorder %s146, %s149
    %p155 = scmp.eq.s32.totalorder %s12, 0
    %p156 = por %p154, %p155
    %p157 = scmp.ne.s32.totalorder %s146, %s149
    %p158 = scmp.eq.s32.totalorder %s17, 1
    %p159 = por %p157, %p158
    %p160 = scmp.ne.s32.totalorder %s149, %s150
    %p161 = scmp.eq.s32.totalorder %s17, 0
    %p162 = por %p160, %p161
    %p163 = scmp.ne.s32.totalorder %s149, %s150
    %p164 = scmp.eq.s32.totalorder %s18, 1
    %p165 = por %p163, %p164
    %p167 = scmp.ne.s32.totalorder %s150, %s166
    %p168 = scmp.eq.s32.totalorder %s18, 0
    %p169 = por %p167, %p168
    %s170 = ssub.s32 %s19, %s31
    %p171 = scmp.eq.s32.totalorder %s170, 0
    %s173 = sadd.s32 %s172, 1
    %s174 = scalar_select %p171, %s172, %s173
    %p177 = pneg %p171
    %p178 = scmp.eq.s32.totalorder %s12, 1
    %p179 = por %p177, %p178
    %p180 = scmp.ne.s32.totalorder %s172, %s175
    %p181 = scmp.eq.s32.totalorder %s12, 0
    %p182 = por %p180, %p181
    %p183 = scmp.ne.s32.totalorder %s172, %s175
    %p184 = scmp.eq.s32.totalorder %s17, 1
    %p185 = por %p183, %p184
    %p186 = scmp.ne.s32.totalorder %s175, %s176
    %p187 = scmp.eq.s32.totalorder %s17, 0
    %p188 = por %p186, %p187
    %p189 = scmp.ne.s32.totalorder %s175, %s176
    %p190 = scmp.eq.s32.totalorder %s18, 1
    %p191 = por %p189, %p190
    %p193 = scmp.ne.s32.totalorder %s176, %s192
    %p194 = scmp.eq.s32.totalorder %s18, 0
    %p195 = por %p193, %p194
    %s196 = ssub.s32 %s19, %s31
    %p197 = scmp.eq.s32.totalorder %s196, 0
    %s199 = sadd.s32 %s198, 1
    %s200 = scalar_select %p197, %s198, %s199
    %p203 = pneg %p197
    %p204 = scmp.eq.s32.totalorder %s12, 1
    %p205 = por %p203, %p204
    %p206 = scmp.ne.s32.totalorder %s198, %s201
    %p207 = scmp.eq.s32.totalorder %s12, 0
    %p208 = por %p206, %p207
    %p209 = scmp.ne.s32.totalorder %s198, %s201
    %p210 = scmp.eq.s32.totalorder %s17, 1
    %p211 = por %p209, %p210
    %p212 = scmp.ne.s32.totalorder %s201, %s202
    %p213 = scmp.eq.s32.totalorder %s17, 0
    %p214 = por %p212, %p213
    %p215 = scmp.ne.s32.totalorder %s201, %s202
    %p216 = scmp.eq.s32.totalorder %s18, 1
    %p217 = por %p215, %p216
    %p219 = scmp.ne.s32.totalorder %s202, %s218
    %p220 = scmp.eq.s32.totalorder %s18, 0
    %p221 = por %p219, %p220
    %p222 = scmp.le.s32.totalorder 1, %s12
    %p223 = scmp.lt.s32.totalorder %s12, 3
    %p224 = pnand %p222, %p223
    %p225 = pneg %p224
    // Predicated region
    $region9: #{byol_forward.4} parent=5 // pred_check
      _
    $region10: #{byol_forward.4} parent=5 // pred_check_branch
      %227 = sbr.rel (%p224) target = $region12
    $region11: #{byol_forward.4} parent=5 // pred_region
      %s228 = ssub.s32 %s12, 1
    $region12: #{byol_forward.4} parent=5 // pred_fallthru
      _
    %p229 = scmp.lt.s32.totalorder %s12, 2
    // Predicated region
    $region13: #{byol_forward.4} parent=5 // pred_check
      %p230 = pneg %p229
    $region14: #{byol_forward.4} parent=5 // pred_check_branch
      %232 = sbr.rel (%p230) target = $region16
    $region15: #{byol_forward.4} parent=5 // pred_region
      // Predicated region
      $region17: #{byol_forward.4} parent=15 // pred_check
        %p233 = pneg %p44
      $region18: #{byol_forward.4} parent=15 // pred_check_branch
        %235 = sbr.rel (%p233) target = $region20
      $region19: #{byol_forward.4} parent=15 // pred_region
        %p236 = scmp.lt.s32.totalorder %s19, 1
        %s237 = scalar_select %p236, %s19, 1
        %s238 = smul.addr %s237, 2
        %s239 = smul.addr %s238, 4
        %s240 = scalar_lea.vmem %s0, %s239
      $region20: #{byol_forward.4} parent=15 // pred_fallthru
        _
      // Predicated region
      $region21: #{byol_forward.4} parent=15 // pred_check
        %p241 = pneg %p72
      $region22: #{byol_forward.4} parent=15 // pred_check_branch
        %243 = sbr.rel (%p241) target = $region24
      $region23: #{byol_forward.4} parent=15 // pred_region
        %s244 = smul.u32 4, %s20
        %p245 = scmp.lt.s32.totalorder %s19, 1
        %s246 = scalar_select %p245, %s19, 1
        %p247 = scmp.lt.s32.totalorder %s244, 3
        %s248 = scalar_select %p247, %s244, 3
        %s249 = smul.addr %s246, 64
        %s250 = sadd.s32 %s248, %s249
        %s251 = smul.addr %s250, 4
        %s252 = scalar_lea.vmem %s1, %s251
        %s253 = smul.u32 4, %s20
      $region24: #{byol_forward.4} parent=15 // pred_fallthru
        _
      // Predicated region
      $region25: #{byol_forward.4} parent=15 // pred_check
        %p254 = pneg %p100
      $region26: #{byol_forward.4} parent=15 // pred_check_branch
        %256 = sbr.rel (%p254) target = $region28
      $region27: #{byol_forward.4} parent=15 // pred_region
        %s257 = smul.u32 4, %s20
        %p258 = scmp.lt.s32.totalorder %s19, 1
        %s259 = scalar_select %p258, %s19, 1
        %p260 = scmp.lt.s32.totalorder %s257, 3
        %s261 = scalar_select %p260, %s257, 3
        %s262 = smul.addr %s259, 4
        %s263 = sadd.s32 %s261, %s262
        %s264 = scalar_lea.vmem %s2, %s263
        %s265 = smul.u32 4, %s20
      $region28: #{byol_forward.4} parent=15 // pred_fallthru
        _
      // Predicated region
      $region29: #{byol_forward.4} parent=15 // pred_check
        %p266 = pneg %p128
      $region30: #{byol_forward.4} parent=15 // pred_check_branch
        %268 = sbr.rel (%p266) target = $region32
      $region31: #{byol_forward.4} parent=15 // pred_region
        %s269 = smul.u32 4, %s20
        %p270 = scmp.lt.s32.totalorder %s19, 1
        %s271 = scalar_select %p270, %s19, 1
        %p272 = scmp.lt.s32.totalorder %s269, 3
        %s273 = scalar_select %p272, %s269, 3
        %s274 = smul.addr %s271, 4
        %s275 = sadd.s32 %s273, %s274
        %s276 = scalar_lea.vmem %s3, %s275
        %s277 = smul.u32 4, %s20
      $region32: #{byol_forward.4} parent=15 // pred_fallthru
        _
      // Predicated region
      $region33: #{byol_forward.4} parent=15 // pred_check
        %p278 = pneg %p156
      $region34: #{byol_forward.4} parent=15 // pred_check_branch
        %280 = sbr.rel (%p278) target = $region36
      $region35: #{byol_forward.4} parent=15 // pred_region
        %s281 = smul.u32 64, %s20
        %p282 = scmp.lt.s32.totalorder %s19, 1
        %s283 = scalar_select %p282, %s19, 1
        %p284 = scmp.lt.s32.totalorder %s281, 63
        %s285 = scalar_select %p284, %s281, 63
        %s286 = smul.addr %s283, 64
        %s287 = sadd.s32 %s285, %s286
        %s288 = smul.addr %s287, 4
        %s289 = scalar_lea.vmem %s4, %s288
        %s290 = smul.u32 64, %s20
      $region36: #{byol_forward.4} parent=15 // pred_fallthru
        _
      // Predicated region
      $region37: #{byol_forward.4} parent=15 // pred_check
        %p291 = pneg %p182
      $region38: #{byol_forward.4} parent=15 // pred_check_branch
        %293 = sbr.rel (%p291) target = $region40
      $region39: #{byol_forward.4} parent=15 // pred_region
        %p294 = scmp.lt.s32.totalorder %s19, 1
        %s295 = scalar_select %p294, %s19, 1
        %s296 = scalar_lea.vmem %s5, %s295
      $region40: #{byol_forward.4} parent=15 // pred_fallthru
        _
    $region16: #{byol_forward.4} parent=5 // pred_fallthru
      _
    %p297 = scmp.le.s32.totalorder 1, %s12
    %p298 = scmp.lt.s32.totalorder %s12, 3
    %p299 = pnand %p297, %p298
    %p300 = pneg %p299
    // Predicated region
    $region41: #{byol_forward.4} parent=5 // pred_check
      _
    $region42: #{byol_forward.4} parent=5 // pred_check_branch
      %302 = sbr.rel (%p299) target = $region44
    $region43: #{byol_forward.4} parent=5 // pred_region
      %s303 = ssub.s32 %s12, 1
      %p304 = scmp.lt.s32.totalorder %s21, 1
      %s305 = scalar_select %p304, %s21, 1
      %s306 = smul.addr %s305, 2
      %s307 = smul.addr %s306, 4
      %s308 = scalar_lea.vmem %s0, %s307
      %p309 = pneg %p50
      %p310 = pneg %p47
      %s311 = smul.u32 4, %s22
      %p312 = scmp.lt.s32.totalorder %s21, 1
      %s313 = scalar_select %p312, %s21, 1
      %p314 = scmp.lt.s32.totalorder %s311, 3
      %s315 = scalar_select %p314, %s311, 3
      %s316 = smul.addr %s313, 64
      %s317 = sadd.s32 %s315, %s316
      %s318 = smul.addr %s317, 4
      %s319 = scalar_lea.vmem %s1, %s318
      %p320 = pneg %p78
      %p321 = pneg %p75
      %s322 = smul.u32 4, %s22
      %p323 = scmp.lt.s32.totalorder %s21, 1
      %s324 = scalar_select %p323, %s21, 1
      %p325 = scmp.lt.s32.totalorder %s322, 3
      %s326 = scalar_select %p325, %s322, 3
      %s327 = smul.addr %s324, 4
      %s328 = sadd.s32 %s326, %s327
      %s329 = scalar_lea.vmem %s2, %s328
      %p330 = pneg %p106
      %p331 = pneg %p103
      %s332 = smul.u32 4, %s22
      %p333 = scmp.lt.s32.totalorder %s21, 1
      %s334 = scalar_select %p333, %s21, 1
      %p335 = scmp.lt.s32.totalorder %s332, 3
      %s336 = scalar_select %p335, %s332, 3
      %s337 = smul.addr %s334, 4
      %s338 = sadd.s32 %s336, %s337
      %s339 = scalar_lea.vmem %s3, %s338
      %p340 = pneg %p134
      %p341 = pneg %p131
      %s342 = smul.u32 64, %s22
      %p343 = scmp.lt.s32.totalorder %s21, 1
      %s344 = scalar_select %p343, %s21, 1
      %p345 = scmp.lt.s32.totalorder %s342, 63
      %s346 = scalar_select %p345, %s342, 63
      %s347 = smul.addr %s344, 64
      %s348 = sadd.s32 %s346, %s347
      %s349 = smul.addr %s348, 4
      %s350 = scalar_lea.vmem %s4, %s349
      %p351 = pneg %p162
      %p352 = pneg %p159
      %p353 = scmp.lt.s32.totalorder %s21, 1
      %s354 = scalar_select %p353, %s21, 1
      %s355 = scalar_lea.vmem %s5, %s354
      %p356 = pneg %p188
      %p357 = pneg %p185
      %p358 = pneg %p214
      %p359 = pneg %p211
      %p360 = scmp.lt.s32.totalorder %s21, 1
      %s361 = scalar_select %p360, %s21, 1
      %s362 = smul.addr %s361, 2
      %s363 = smul.addr %s362, 8
      %s364 = scalar_lea.vmem %s6, %s363
      %p365 = scmp.lt.s32.totalorder %s21, 1
      %s366 = scalar_select %p365, %s21, 1
      %s367 = smul.addr %s366, 2
      %s368 = smul.addr %s367, 4
      %s369 = scalar_lea.vmem %s0, %s368
      %s370 = smul.u32 4, %s22
      %p371 = scmp.lt.s32.totalorder %s21, 1
      %s372 = scalar_select %p371, %s21, 1
      %p373 = scmp.lt.s32.totalorder %s370, 3
      %s374 = scalar_select %p373, %s370, 3
      %s375 = smul.addr %s372, 64
      %s376 = sadd.s32 %s374, %s375
      %s377 = smul.addr %s376, 4
      %s378 = scalar_lea.vmem %s1, %s377
      %s379 = smul.u32 4, %s22
      %s380 = smul.u32 4, %s22
      %p381 = scmp.lt.s32.totalorder %s21, 1
      %s382 = scalar_select %p381, %s21, 1
      %p383 = scmp.lt.s32.totalorder %s380, 3
      %s384 = scalar_select %p383, %s380, 3
      %s385 = smul.addr %s382, 4
      %s386 = sadd.s32 %s384, %s385
      %s387 = scalar_lea.vmem %s2, %s386
      %s388 = smul.u32 4, %s22
      %s389 = smul.u32 4, %s22
      %p390 = scmp.lt.s32.totalorder %s21, 1
      %s391 = scalar_select %p390, %s21, 1
      %p392 = scmp.lt.s32.totalorder %s389, 3
      %s393 = scalar_select %p392, %s389, 3
      %s394 = smul.addr %s391, 4
      %s395 = sadd.s32 %s393, %s394
      %s396 = scalar_lea.vmem %s3, %s395
      %s397 = smul.u32 4, %s22
      %s398 = smul.u32 64, %s22
      %p399 = scmp.lt.s32.totalorder %s21, 1
      %s400 = scalar_select %p399, %s21, 1
      %p401 = scmp.lt.s32.totalorder %s398, 63
      %s402 = scalar_select %p401, %s398, 63
      %s403 = smul.addr %s400, 64
      %s404 = sadd.s32 %s402, %s403
      %s405 = smul.addr %s404, 4
      %s406 = scalar_lea.vmem %s4, %s405
      %s407 = smul.u32 64, %s22
      %p408 = scmp.lt.s32.totalorder %s21, 1
      %s409 = scalar_select %p408, %s21, 1
      %s410 = scalar_lea.vmem %s5, %s409
      %p411 = scmp.lt.s32.totalorder %s21, 1
      %s412 = scalar_select %p411, %s21, 1
      %s413 = smul.addr %s412, 2
      %s414 = smul.addr %s413, 8
      %s415 = scalar_lea.vmem %s6, %s414
      %p417 = scmp.eq.s32.totalorder %s22, 0
      // Predicated region
      $region45: #{byol_forward.4} parent=43 // pred_check
        %p418 = pneg %p417
      $region46: #{byol_forward.4} parent=43 // pred_check_branch
        %420 = sbr.rel (%p418) target = $region48
      $region47: #{byol_forward.4} parent=43 // pred_region
        %v421 = vld [vmem:[%s410] sm:$0x1]
        %v423 = vlaneseq
        %v424 = vshrl.u32 %v423, 7
        %v425 = vsub.s32 0, %v424
        %v426 = vrot.slane %v421, %v425
        %428 = vst [vmem:[%s415] sm:$0xff] %v426
        %429 = vst [vmem:[%s415 + $0x8] sm:$0xff] %v426
      $region48: #{byol_forward.4} parent=43 // pred_fallthru
        _
      %v430 = vld [vmem:[%s369] sm:$0xf]
      %v431 = vld [vmem:[%s369 + $0x4] sm:$0xf]
      %v432 = vld [vmem:[%s378] sm:$0xff]
      %v433 = vld [vmem:[%s378 + $0x8] sm:$0xff]
      %v434 = vld [vmem:[%s378 + $0x10] sm:$0xff]
      %v435 = vld [vmem:[%s378 + $0x18] sm:$0xff]
      %v436 = vld [vmem:[%s378 + $0x20] sm:$0xff]
      %v437 = vld [vmem:[%s378 + $0x28] sm:$0xff]
      %v438 = vld [vmem:[%s378 + $0x30] sm:$0xff]
      %v439 = vld [vmem:[%s378 + $0x38] sm:$0xff]
      %v440 = vld [vmem:[%s378 + $0x40] sm:$0xff]
      %v441 = vld [vmem:[%s378 + $0x48] sm:$0xff]
      %v442 = vld [vmem:[%s378 + $0x50] sm:$0xff]
      %v443 = vld [vmem:[%s378 + $0x58] sm:$0xff]
      %v444 = vld [vmem:[%s378 + $0x60] sm:$0xff]
      %v445 = vld [vmem:[%s378 + $0x68] sm:$0xff]
      %v446 = vld [vmem:[%s378 + $0x70] sm:$0xff]
      %v447 = vld [vmem:[%s378 + $0x78] sm:$0xff]
      %v448 = vld [vmem:[%s378 + $0x80] sm:$0xff]
      %v449 = vld [vmem:[%s378 + $0x88] sm:$0xff]
      %v450 = vld [vmem:[%s378 + $0x90] sm:$0xff]
      %v451 = vld [vmem:[%s378 + $0x98] sm:$0xff]
      %v452 = vld [vmem:[%s378 + $0xa0] sm:$0xff]
      %v453 = vld [vmem:[%s378 + $0xa8] sm:$0xff]
      %v454 = vld [vmem:[%s378 + $0xb0] sm:$0xff]
      %v455 = vld [vmem:[%s378 + $0xb8] sm:$0xff]
      %v456 = vld [vmem:[%s378 + $0xc0] sm:$0xff]
      %v457 = vld [vmem:[%s378 + $0xc8] sm:$0xff]
      %v458 = vld [vmem:[%s378 + $0xd0] sm:$0xff]
      %v459 = vld [vmem:[%s378 + $0xd8] sm:$0xff]
      %v460 = vld [vmem:[%s378 + $0xe0] sm:$0xff]
      %v461 = vld [vmem:[%s378 + $0xe8] sm:$0xff]
      %v462 = vld [vmem:[%s378 + $0xf0] sm:$0xff]
      %v463 = vld [vmem:[%s378 + $0xf8] sm:$0xff]
      %v466 = vunpack.c.l.b16 %v430
      %v467 = vunpack.c.l.b16 %v431
      %v468 = vpack.c.b16 %v467, %v466
      %v502 = vunpack.c.l.b16 %v432
      %v503 = vunpack.c.h.b16 %v432
      %v504 = vunpack.c.l.b16 %v433
      %v505 = vunpack.c.h.b16 %v433
      %v506 = vunpack.c.l.b16 %v434
      %v507 = vunpack.c.h.b16 %v434
      %v508 = vunpack.c.l.b16 %v435
      %v509 = vunpack.c.h.b16 %v435
      %v510 = vunpack.c.l.b16 %v436
      %v511 = vunpack.c.h.b16 %v436
      %v512 = vunpack.c.l.b16 %v437
      %v513 = vunpack.c.h.b16 %v437
      %v514 = vunpack.c.l.b16 %v438
      %v515 = vunpack.c.h.b16 %v438
      %v516 = vunpack.c.l.b16 %v439
      %v517 = vunpack.c.h.b16 %v439
      %v518 = vunpack.c.l.b16 %v440
      %v519 = vunpack.c.h.b16 %v440
      %v520 = vunpack.c.l.b16 %v441
      %v521 = vunpack.c.h.b16 %v441
      %v522 = vunpack.c.l.b16 %v442
      %v523 = vunpack.c.h.b16 %v442
      %v524 = vunpack.c.l.b16 %v443
      %v525 = vunpack.c.h.b16 %v443
      %v526 = vunpack.c.l.b16 %v444
      %v527 = vunpack.c.h.b16 %v444
      %v528 = vunpack.c.l.b16 %v445
      %v529 = vunpack.c.h.b16 %v445
      %v530 = vunpack.c.l.b16 %v446
      %v531 = vunpack.c.h.b16 %v446
      %v532 = vunpack.c.l.b16 %v447
      %v533 = vunpack.c.h.b16 %v447
      %v534 = vunpack.c.l.b16 %v448
      %v535 = vunpack.c.h.b16 %v448
      %v536 = vunpack.c.l.b16 %v449
      %v537 = vunpack.c.h.b16 %v449
      %v538 = vunpack.c.l.b16 %v450
      %v539 = vunpack.c.h.b16 %v450
      %v540 = vunpack.c.l.b16 %v451
      %v541 = vunpack.c.h.b16 %v451
      %v542 = vunpack.c.l.b16 %v452
      %v543 = vunpack.c.h.b16 %v452
      %v544 = vunpack.c.l.b16 %v453
      %v545 = vunpack.c.h.b16 %v453
      %v546 = vunpack.c.l.b16 %v454
      %v547 = vunpack.c.h.b16 %v454
      %v548 = vunpack.c.l.b16 %v455
      %v549 = vunpack.c.h.b16 %v455
      %v550 = vunpack.c.l.b16 %v456
      %v551 = vunpack.c.h.b16 %v456
      %v552 = vunpack.c.l.b16 %v457
      %v553 = vunpack.c.h.b16 %v457
      %v554 = vunpack.c.l.b16 %v458
      %v555 = vunpack.c.h.b16 %v458
      %v556 = vunpack.c.l.b16 %v459
      %v557 = vunpack.c.h.b16 %v459
      %v558 = vunpack.c.l.b16 %v460
      %v559 = vunpack.c.h.b16 %v460
      %v560 = vunpack.c.l.b16 %v461
      %v561 = vunpack.c.h.b16 %v461
      %v562 = vunpack.c.l.b16 %v462
      %v563 = vunpack.c.h.b16 %v462
      %v564 = vunpack.c.l.b16 %v463
      %v565 = vunpack.c.h.b16 %v463
      %v566 = vpack.c.b16 %v506, %v502
      %v567 = vpack.c.b16 %v507, %v503
      %v568 = vpack.c.b16 %v508, %v504
      %v569 = vpack.c.b16 %v509, %v505
      %v570 = vpack.c.b16 %v514, %v510
      %v571 = vpack.c.b16 %v515, %v511
      %v572 = vpack.c.b16 %v516, %v512
      %v573 = vpack.c.b16 %v517, %v513
      %v574 = vpack.c.b16 %v522, %v518
      %v575 = vpack.c.b16 %v523, %v519
      %v576 = vpack.c.b16 %v524, %v520
      %v577 = vpack.c.b16 %v525, %v521
      %v578 = vpack.c.b16 %v530, %v526
      %v579 = vpack.c.b16 %v531, %v527
      %v580 = vpack.c.b16 %v532, %v528
      %v581 = vpack.c.b16 %v533, %v529
      %v582 = vpack.c.b16 %v538, %v534
      %v583 = vpack.c.b16 %v539, %v535
      %v584 = vpack.c.b16 %v540, %v536
      %v585 = vpack.c.b16 %v541, %v537
      %v586 = vpack.c.b16 %v546, %v542
      %v587 = vpack.c.b16 %v547, %v543
      %v588 = vpack.c.b16 %v548, %v544
      %v589 = vpack.c.b16 %v549, %v545
      %v590 = vpack.c.b16 %v554, %v550
      %v591 = vpack.c.b16 %v555, %v551
      %v592 = vpack.c.b16 %v556, %v552
      %v593 = vpack.c.b16 %v557, %v553
      %v594 = vpack.c.b16 %v562, %v558
      %v595 = vpack.c.b16 %v563, %v559
      %v596 = vpack.c.b16 %v564, %v560
      %v597 = vpack.c.b16 %v565, %v561
      %630 = vmatprep.subr.bf16.mxu0 %v567
      %631 = vmatpush1.bf16.msra.mxu0 %v566
      %632 = vmatprep.subr.bf16.mxu0 %v571
      %633 = vmatpush1.bf16.msra.mxu0 %v570
      %634 = vmatprep.subr.bf16.mxu0 %v575
      %635 = vmatpush1.bf16.msra.mxu0 %v574
      %636 = vmatprep.subr.bf16.mxu0 %v579
      %637 = vmatpush1.bf16.msra.mxu0 %v578
      %638 = vmatprep.subr.bf16.mxu0 %v583
      %639 = vmatpush1.bf16.msra.mxu0 %v582
      %640 = vmatprep.subr.bf16.mxu0 %v587
      %641 = vmatpush1.bf16.msra.mxu0 %v586
      %642 = vmatprep.subr.bf16.mxu0 %v591
      %643 = vmatpush1.bf16.msra.mxu0 %v590
      %644 = vmatprep.subr.bf16.mxu0 %v595
      %645 = vmatpush1.bf16.msra.mxu0 %v594
      %646 = vmatprep.subr.bf16.mxu0 0
      %647 = vmatpush1.bf16.msra.mxu0 0
      %648 = vmatprep.subr.bf16.mxu0 0
      %649 = vmatpush1.bf16.msra.mxu0 0
      %650 = vmatprep.subr.bf16.mxu0 0
      %651 = vmatpush1.bf16.msra.mxu0 0
      %652 = vmatprep.subr.bf16.mxu0 0
      %653 = vmatpush1.bf16.msra.mxu0 0
      %654 = vmatprep.subr.bf16.mxu0 0
      %655 = vmatpush1.bf16.msra.mxu0 0
      %656 = vmatprep.subr.bf16.mxu0 0
      %657 = vmatpush1.bf16.msra.mxu0 0
      %658 = vmatprep.subr.bf16.mxu0 0
      %659 = vmatpush1.bf16.msra.mxu0 0
      %660 = vmatprep.subr.bf16.mxu0 0
      %661 = vmatpush1.bf16.msra.mxu0 0
      %662 = vmatprep.mubr.bf16.mxu0 0
      %663 = vmatmul.mubr.bf16.gmra.mrb[0].mxu0 %v468
      %v664 = vpop.f32.mrb[0].mxu0
      %v665 = vadd.f32 0.0, %v664
      %v666 = vpop.f32.mrb[0].mxu0
      %v667 = vadd.f32 0.0, %v666
      %v668 = vpop.f32.mrb[0].mxu0
      %v669 = vadd.f32 0.0, %v668
      %v670 = vpop.f32.mrb[0].mxu0
      %v671 = vadd.f32 0.0, %v670
      %672 = vdwg.mxu0
      %673 = vmatprep.subr.bf16.mxu0 %v569
      %674 = vmatpush1.bf16.msra.mxu0 %v568
      %675 = vmatprep.subr.bf16.mxu0 %v573
      %676 = vmatpush1.bf16.msra.mxu0 %v572
      %677 = vmatprep.subr.bf16.mxu0 %v577
      %678 = vmatpush1.bf16.msra.mxu0 %v576
      %679 = vmatprep.subr.bf16.mxu0 %v581
      %680 = vmatpush1.bf16.msra.mxu0 %v580
      %681 = vmatprep.subr.bf16.mxu0 %v585
      %682 = vmatpush1.bf16.msra.mxu0 %v584
      %683 = vmatprep.subr.bf16.mxu0 %v589
      %684 = vmatpush1.bf16.msra.mxu0 %v588
      %685 = vmatprep.subr.bf16.mxu0 %v593
      %686 = vmatpush1.bf16.msra.mxu0 %v592
      %687 = vmatprep.subr.bf16.mxu0 %v597
      %688 = vmatpush1.bf16.msra.mxu0 %v596
      %689 = vmatprep.subr.bf16.mxu0 0
      %690 = vmatpush1.bf16.msra.mxu0 0
      %691 = vmatprep.subr.bf16.mxu0 0
      %692 = vmatpush1.bf16.msra.mxu0 0
      %693 = vmatprep.subr.bf16.mxu0 0
      %694 = vmatpush1.bf16.msra.mxu0 0
      %695 = vmatprep.subr.bf16.mxu0 0
      %696 = vmatpush1.bf16.msra.mxu0 0
      %697 = vmatprep.subr.bf16.mxu0 0
      %698 = vmatpush1.bf16.msra.mxu0 0
      %699 = vmatprep.subr.bf16.mxu0 0
      %700 = vmatpush1.bf16.msra.mxu0 0
      %701 = vmatprep.subr.bf16.mxu0 0
      %702 = vmatpush1.bf16.msra.mxu0 0
      %703 = vmatprep.subr.bf16.mxu0 0
      %704 = vmatpush1.bf16.msra.mxu0 0
      %705 = vmatprep.mubr.bf16.mxu0 0
      %706 = vmatmul.mubr.bf16.gmra.mrb[0].mxu0 %v468
      %v707 = vpop.f32.mrb[0].mxu0
      %v708 = vadd.f32 0.0, %v707
      %v709 = vpop.f32.mrb[0].mxu0
      %v710 = vadd.f32 0.0, %v709
      %v711 = vpop.f32.mrb[0].mxu0
      %v712 = vadd.f32 0.0, %v711
      %v713 = vpop.f32.mrb[0].mxu0
      %v714 = vadd.f32 0.0, %v713
      %715 = vdwg.mxu0
      %v716 = vadd.f32 %v665, %v669
      %v717 = vrot.slane %v716, 4
      %v718 = vadd.f32 %v716, %v717
      %v719 = vrot.slane %v718, 2
      %v720 = vadd.f32 %v718, %v719
      %v721 = vrot.slane %v720, 1
      %v722 = vadd.f32 %v720, %v721
      %v723 = vadd.f32 %v667, %v671
      %v724 = vrot.slane %v723, 4
      %v725 = vadd.f32 %v723, %v724
      %v726 = vrot.slane %v725, 2
      %v727 = vadd.f32 %v725, %v726
      %v728 = vrot.slane %v727, 1
      %v729 = vadd.f32 %v727, %v728
      %v730 = vadd.f32 %v708, %v712
      %v731 = vrot.slane %v730, 4
      %v732 = vadd.f32 %v730, %v731
      %v733 = vrot.slane %v732, 2
      %v734 = vadd.f32 %v732, %v733
      %v735 = vrot.slane %v734, 1
      %v736 = vadd.f32 %v734, %v735
      %v737 = vadd.f32 %v710, %v714
      %v738 = vrot.slane %v737, 4
      %v739 = vadd.f32 %v737, %v738
      %v740 = vrot.slane %v739, 2
      %v741 = vadd.f32 %v739, %v740
      %v742 = vrot.slane %v741, 1
      %v743 = vadd.f32 %v741, %v742
      %v744 = vrcp.pop 16.0
      %v745 = vmul.f32 %v722, %v744
      %v746 = vmul.f32 %v729, %v744
      %v747 = vmul.f32 %v736, %v744
      %v748 = vmul.f32 %v743, %v744
      %v749 = vsub.f32 %v665, %v745
      %v750 = vsub.f32 %v667, %v746
      %v751 = vsub.f32 %v708, %v747
      %v752 = vsub.f32 %v710, %v748
      %v753 = vsub.f32 %v669, %v745
      %v754 = vsub.f32 %v671, %v746
      %v755 = vsub.f32 %v712, %v747
      %v756 = vsub.f32 %v714, %v748
      %v757 = vmul.f32 %v749, %v749
      %v758 = vmul.f32 %v750, %v750
      %v759 = vmul.f32 %v751, %v751
      %v760 = vmul.f32 %v752, %v752
      %v761 = vmul.f32 %v753, %v753
      %v762 = vmul.f32 %v754, %v754
      %v763 = vmul.f32 %v755, %v755
      %v764 = vmul.f32 %v756, %v756
      %v765 = vadd.f32 %v757, %v761
      %v766 = vrot.slane %v765, 4
      %v767 = vadd.f32 %v765, %v766
      %v768 = vrot.slane %v767, 2
      %v769 = vadd.f32 %v767, %v768
      %v770 = vrot.slane %v769, 1
      %v771 = vadd.f32 %v769, %v770
      %v772 = vadd.f32 %v758, %v762
      %v773 = vrot.slane %v772, 4
      %v774 = vadd.f32 %v772, %v773
      %v775 = vrot.slane %v774, 2
      %v776 = vadd.f32 %v774, %v775
      %v777 = vrot.slane %v776, 1
      %v778 = vadd.f32 %v776, %v777
      %v779 = vadd.f32 %v759, %v763
      %v780 = vrot.slane %v779, 4
      %v781 = vadd.f32 %v779, %v780
      %v782 = vrot.slane %v781, 2
      %v783 = vadd.f32 %v781, %v782
      %v784 = vrot.slane %v783, 1
      %v785 = vadd.f32 %v783, %v784
      %v786 = vadd.f32 %v760, %v764
      %v787 = vrot.slane %v786, 4
      %v788 = vadd.f32 %v786, %v787
      %v789 = vrot.slane %v788, 2
      %v790 = vadd.f32 %v788, %v789
      %v791 = vrot.slane %v790, 1
      %v792 = vadd.f32 %v790, %v791
      %v793 = vmul.f32 %v771, %v744
      %v794 = vmul.f32 %v778, %v744
      %v795 = vmul.f32 %v785, %v744
      %v796 = vmul.f32 %v792, %v744
      %v797 = vadd.f32 %v793, 1e-05
      %v798 = vadd.f32 %v794, 1e-05
      %v799 = vadd.f32 %v795, 1e-05
      %v800 = vadd.f32 %v796, 1e-05
      %v801 = vrsqrt.pop %v797
      %v802 = vrsqrt.pop %v798
      %v803 = vrsqrt.pop %v799
      %v804 = vrsqrt.pop %v800
      %v805 = vmul.f32 %v749, %v801
      %v806 = vmul.f32 %v750, %v802
      %v807 = vmul.f32 %v751, %v803
      %v808 = vmul.f32 %v752, %v804
      %v809 = vmul.f32 %v753, %v801
      %v810 = vmul.f32 %v754, %v802
      %v811 = vmul.f32 %v755, %v803
      %v812 = vmul.f32 %v756, %v804
      %v813 = vld [vmem:[%s387] sm:$0xf]
      %v815 = vlaneseq
      %v816 = vshrl.u32 %v815, 7
      %v817 = vsub.s32 0, %v816
      %v818 = vrot.slane %v813, %v817
      %v819 = vlaneseq
      %v820 = vshrl.u32 %v819, 7
      %v821 = vsub.s32 1, %v820
      %v822 = vrot.slane %v813, %v821
      %v823 = vlaneseq
      %v824 = vshrl.u32 %v823, 7
      %v825 = vsub.s32 2, %v824
      %v826 = vrot.slane %v813, %v825
      %v827 = vlaneseq
      %v828 = vshrl.u32 %v827, 7
      %v829 = vsub.s32 3, %v828
      %v830 = vrot.slane %v813, %v829
      %v835 = vmul.f32 %v805, %v818
      %v836 = vmul.f32 %v806, %v822
      %v837 = vmul.f32 %v807, %v826
      %v838 = vmul.f32 %v808, %v830
      %v839 = vmul.f32 %v809, %v818
      %v840 = vmul.f32 %v810, %v822
      %v841 = vmul.f32 %v811, %v826
      %v842 = vmul.f32 %v812, %v830
      %v843 = vld [vmem:[%s396] sm:$0xf]
      %v845 = vlaneseq
      %v846 = vshrl.u32 %v845, 7
      %v847 = vsub.s32 0, %v846
      %v848 = vrot.slane %v843, %v847
      %v849 = vlaneseq
      %v850 = vshrl.u32 %v849, 7
      %v851 = vsub.s32 1, %v850
      %v852 = vrot.slane %v843, %v851
      %v853 = vlaneseq
      %v854 = vshrl.u32 %v853, 7
      %v855 = vsub.s32 2, %v854
      %v856 = vrot.slane %v843, %v855
      %v857 = vlaneseq
      %v858 = vshrl.u32 %v857, 7
      %v859 = vsub.s32 3, %v858
      %v860 = vrot.slane %v843, %v859
      %v865 = vadd.f32 %v835, %v848
      %v866 = vadd.f32 %v836, %v852
      %v867 = vadd.f32 %v837, %v856
      %v868 = vadd.f32 %v838, %v860
      %v869 = vadd.f32 %v839, %v848
      %v870 = vadd.f32 %v840, %v852
      %v871 = vadd.f32 %v841, %v856
      %v872 = vadd.f32 %v842, %v860
      %v873 = vmax.f32 %v865, 0.0
      %v874 = vmax.f32 %v866, 0.0
      %v875 = vmax.f32 %v867, 0.0
      %v876 = vmax.f32 %v868, 0.0
      %v877 = vmax.f32 %v869, 0.0
      %v878 = vmax.f32 %v870, 0.0
      %v879 = vmax.f32 %v871, 0.0
      %v880 = vmax.f32 %v872, 0.0
      %v881 = vld [vmem:[%s415] sm:$0xff]
      %v882 = vld [vmem:[%s415 + $0x8] sm:$0xff]
      %v883 = vpack.c.bf16 %v877, %v873
      %v884 = vpack.c.bf16 %v878, %v874
      %v885 = vpack.c.bf16 %v879, %v875
      %v886 = vpack.c.bf16 %v880, %v876
      %v887 = vld [vmem:[%s406] sm:$0xf]
      %v888 = vld [vmem:[%s406 + $0x4] sm:$0xf]
      %v889 = vld [vmem:[%s406 + $0x8] sm:$0xf]
      %v890 = vld [vmem:[%s406 + $0xc] sm:$0xf]
      %v891 = vld [vmem:[%s406 + $0x10] sm:$0xf]
      %v892 = vld [vmem:[%s406 + $0x14] sm:$0xf]
      %v893 = vld [vmem:[%s406 + $0x18] sm:$0xf]
      %v894 = vld [vmem:[%s406 + $0x1c] sm:$0xf]
      %v895 = vld [vmem:[%s406 + $0x20] sm:$0xf]
      %v896 = vld [vmem:[%s406 + $0x24] sm:$0xf]
      %v897 = vld [vmem:[%s406 + $0x28] sm:$0xf]
      %v898 = vld [vmem:[%s406 + $0x2c] sm:$0xf]
      %v899 = vld [vmem:[%s406 + $0x30] sm:$0xf]
      %v900 = vld [vmem:[%s406 + $0x34] sm:$0xf]
      %v901 = vld [vmem:[%s406 + $0x38] sm:$0xf]
      %v902 = vld [vmem:[%s406 + $0x3c] sm:$0xf]
      %v903 = vld [vmem:[%s406 + $0x40] sm:$0xf]
      %v904 = vld [vmem:[%s406 + $0x44] sm:$0xf]
      %v905 = vld [vmem:[%s406 + $0x48] sm:$0xf]
      %v906 = vld [vmem:[%s406 + $0x4c] sm:$0xf]
      %v907 = vld [vmem:[%s406 + $0x50] sm:$0xf]
      %v908 = vld [vmem:[%s406 + $0x54] sm:$0xf]
      %v909 = vld [vmem:[%s406 + $0x58] sm:$0xf]
      %v910 = vld [vmem:[%s406 + $0x5c] sm:$0xf]
      %v911 = vld [vmem:[%s406 + $0x60] sm:$0xf]
      %v912 = vld [vmem:[%s406 + $0x64] sm:$0xf]
      %v913 = vld [vmem:[%s406 + $0x68] sm:$0xf]
      %v914 = vld [vmem:[%s406 + $0x6c] sm:$0xf]
      %v915 = vld [vmem:[%s406 + $0x70] sm:$0xf]
      %v916 = vld [vmem:[%s406 + $0x74] sm:$0xf]
      %v917 = vld [vmem:[%s406 + $0x78] sm:$0xf]
      %v918 = vld [vmem:[%s406 + $0x7c] sm:$0xf]
      %v919 = vld [vmem:[%s406 + $0x80] sm:$0xf]
      %v920 = vld [vmem:[%s406 + $0x84] sm:$0xf]
      %v921 = vld [vmem:[%s406 + $0x88] sm:$0xf]
      %v922 = vld [vmem:[%s406 + $0x8c] sm:$0xf]
      %v923 = vld [vmem:[%s406 + $0x90] sm:$0xf]
      %v924 = vld [vmem:[%s406 + $0x94] sm:$0xf]
      %v925 = vld [vmem:[%s406 + $0x98] sm:$0xf]
      %v926 = vld [vmem:[%s406 + $0x9c] sm:$0xf]
      %v927 = vld [vmem:[%s406 + $0xa0] sm:$0xf]
      %v928 = vld [vmem:[%s406 + $0xa4] sm:$0xf]
      %v929 = vld [vmem:[%s406 + $0xa8] sm:$0xf]
      %v930 = vld [vmem:[%s406 + $0xac] sm:$0xf]
      %v931 = vld [vmem:[%s406 + $0xb0] sm:$0xf]
      %v932 = vld [vmem:[%s406 + $0xb4] sm:$0xf]
      %v933 = vld [vmem:[%s406 + $0xb8] sm:$0xf]
      %v934 = vld [vmem:[%s406 + $0xbc] sm:$0xf]
      %v935 = vld [vmem:[%s406 + $0xc0] sm:$0xf]
      %v936 = vld [vmem:[%s406 + $0xc4] sm:$0xf]
      %v937 = vld [vmem:[%s406 + $0xc8] sm:$0xf]
      %v938 = vld [vmem:[%s406 + $0xcc] sm:$0xf]
      %v939 = vld [vmem:[%s406 + $0xd0] sm:$0xf]
      %v940 = vld [vmem:[%s406 + $0xd4] sm:$0xf]
      %v941 = vld [vmem:[%s406 + $0xd8] sm:$0xf]
      %v942 = vld [vmem:[%s406 + $0xdc] sm:$0xf]
      %v943 = vld [vmem:[%s406 + $0xe0] sm:$0xf]
      %v944 = vld [vmem:[%s406 + $0xe4] sm:$0xf]
      %v945 = vld [vmem:[%s406 + $0xe8] sm:$0xf]
      %v946 = vld [vmem:[%s406 + $0xec] sm:$0xf]
      %v947 = vld [vmem:[%s406 + $0xf0] sm:$0xf]
      %v948 = vld [vmem:[%s406 + $0xf4] sm:$0xf]
      %v949 = vld [vmem:[%s406 + $0xf8] sm:$0xf]
      %v950 = vld [vmem:[%s406 + $0xfc] sm:$0xf]
      %v1015 = vunpack.c.l.b16 %v887
      %v1016 = vunpack.c.l.b16 %v888
      %v1017 = vunpack.c.l.b16 %v889
      %v1018 = vunpack.c.l.b16 %v890
      %v1019 = vunpack.c.l.b16 %v891
      %v1020 = vunpack.c.l.b16 %v892
      %v1021 = vunpack.c.l.b16 %v893
      %v1022 = vunpack.c.l.b16 %v894
      %v1023 = vunpack.c.l.b16 %v895
      %v1024 = vunpack.c.l.b16 %v896
      %v1025 = vunpack.c.l.b16 %v897
      %v1026 = vunpack.c.l.b16 %v898
      %v1027 = vunpack.c.l.b16 %v899
      %v1028 = vunpack.c.l.b16 %v900
      %v1029 = vunpack.c.l.b16 %v901
      %v1030 = vunpack.c.l.b16 %v902
      %v1031 = vunpack.c.l.b16 %v903
      %v1032 = vunpack.c.l.b16 %v904
      %v1033 = vunpack.c.l.b16 %v905
      %v1034 = vunpack.c.l.b16 %v906
      %v1035 = vunpack.c.l.b16 %v907
      %v1036 = vunpack.c.l.b16 %v908
      %v1037 = vunpack.c.l.b16 %v909
      %v1038 = vunpack.c.l.b16 %v910
      %v1039 = vunpack.c.l.b16 %v911
      %v1040 = vunpack.c.l.b16 %v912
      %v1041 = vunpack.c.l.b16 %v913
      %v1042 = vunpack.c.l.b16 %v914
      %v1043 = vunpack.c.l.b16 %v915
      %v1044 = vunpack.c.l.b16 %v916
      %v1045 = vunpack.c.l.b16 %v917
      %v1046 = vunpack.c.l.b16 %v918
      %v1047 = vunpack.c.l.b16 %v919
      %v1048 = vunpack.c.l.b16 %v920
      %v1049 = vunpack.c.l.b16 %v921
      %v1050 = vunpack.c.l.b16 %v922
      %v1051 = vunpack.c.l.b16 %v923
      %v1052 = vunpack.c.l.b16 %v924
      %v1053 = vunpack.c.l.b16 %v925
      %v1054 = vunpack.c.l.b16 %v926
      %v1055 = vunpack.c.l.b16 %v927
      %v1056 = vunpack.c.l.b16 %v928
      %v1057 = vunpack.c.l.b16 %v929
      %v1058 = vunpack.c.l.b16 %v930
      %v1059 = vunpack.c.l.b16 %v931
      %v1060 = vunpack.c.l.b16 %v932
      %v1061 = vunpack.c.l.b16 %v933
      %v1062 = vunpack.c.l.b16 %v934
      %v1063 = vunpack.c.l.b16 %v935
      %v1064 = vunpack.c.l.b16 %v936
      %v1065 = vunpack.c.l.b16 %v937
      %v1066 = vunpack.c.l.b16 %v938
      %v1067 = vunpack.c.l.b16 %v939
      %v1068 = vunpack.c.l.b16 %v940
      %v1069 = vunpack.c.l.b16 %v941
      %v1070 = vunpack.c.l.b16 %v942
      %v1071 = vunpack.c.l.b16 %v943
      %v1072 = vunpack.c.l.b16 %v944
      %v1073 = vunpack.c.l.b16 %v945
      %v1074 = vunpack.c.l.b16 %v946
      %v1075 = vunpack.c.l.b16 %v947
      %v1076 = vunpack.c.l.b16 %v948
      %v1077 = vunpack.c.l.b16 %v949
      %v1078 = vunpack.c.l.b16 %v950
      %v1079 = vpack.c.b16 %v1016, %v1015
      %v1080 = vpack.c.b16 %v1018, %v1017
      %v1081 = vpack.c.b16 %v1020, %v1019
      %v1082 = vpack.c.b16 %v1022, %v1021
      %v1083 = vpack.c.b16 %v1024, %v1023
      %v1084 = vpack.c.b16 %v1026, %v1025
      %v1085 = vpack.c.b16 %v1028, %v1027
      %v1086 = vpack.c.b16 %v1030, %v1029
      %v1087 = vpack.c.b16 %v1032, %v1031
      %v1088 = vpack.c.b16 %v1034, %v1033
      %v1089 = vpack.c.b16 %v1036, %v1035
      %v1090 = vpack.c.b16 %v1038, %v1037
      %v1091 = vpack.c.b16 %v1040, %v1039
      %v1092 = vpack.c.b16 %v1042, %v1041
      %v1093 = vpack.c.b16 %v1044, %v1043
      %v1094 = vpack.c.b16 %v1046, %v1045
      %v1095 = vpack.c.b16 %v1048, %v1047
      %v1096 = vpack.c.b16 %v1050, %v1049
      %v1097 = vpack.c.b16 %v1052, %v1051
      %v1098 = vpack.c.b16 %v1054, %v1053
      %v1099 = vpack.c.b16 %v1056, %v1055
      %v1100 = vpack.c.b16 %v1058, %v1057
      %v1101 = vpack.c.b16 %v1060, %v1059
      %v1102 = vpack.c.b16 %v1062, %v1061
      %v1103 = vpack.c.b16 %v1064, %v1063
      %v1104 = vpack.c.b16 %v1066, %v1065
      %v1105 = vpack.c.b16 %v1068, %v1067
      %v1106 = vpack.c.b16 %v1070, %v1069
      %v1107 = vpack.c.b16 %v1072, %v1071
      %v1108 = vpack.c.b16 %v1074, %v1073
      %v1109 = vpack.c.b16 %v1076, %v1075
      %v1110 = vpack.c.b16 %v1078, %v1077
      %1143 = vmatprep.subr.bf16.mxu0 0
      %1144 = vmatpush1.bf16.msra.mxu0 %v1079
      %1145 = vmatprep.subr.bf16.mxu0 0
      %1146 = vmatpush1.bf16.msra.mxu0 %v1080
      %1147 = vmatprep.subr.bf16.mxu0 0
      %1148 = vmatpush1.bf16.msra.mxu0 %v1081
      %1149 = vmatprep.subr.bf16.mxu0 0
      %1150 = vmatpush1.bf16.msra.mxu0 %v1082
      %1151 = vmatprep.subr.bf16.mxu0 0
      %1152 = vmatpush1.bf16.msra.mxu0 %v1083
      %1153 = vmatprep.subr.bf16.mxu0 0
      %1154 = vmatpush1.bf16.msra.mxu0 %v1084
      %1155 = vmatprep.subr.bf16.mxu0 0
      %1156 = vmatpush1.bf16.msra.mxu0 %v1085
      %1157 = vmatprep.subr.bf16.mxu0 0
      %1158 = vmatpush1.bf16.msra.mxu0 %v1086
      %1159 = vmatprep.subr.bf16.mxu0 0
      %1160 = vmatpush1.bf16.msra.mxu0 %v1087
      %1161 = vmatprep.subr.bf16.mxu0 0
      %1162 = vmatpush1.bf16.msra.mxu0 %v1088
      %1163 = vmatprep.subr.bf16.mxu0 0
      %1164 = vmatpush1.bf16.msra.mxu0 %v1089
      %1165 = vmatprep.subr.bf16.mxu0 0
      %1166 = vmatpush1.bf16.msra.mxu0 %v1090
      %1167 = vmatprep.subr.bf16.mxu0 0
      %1168 = vmatpush1.bf16.msra.mxu0 %v1091
      %1169 = vmatprep.subr.bf16.mxu0 0
      %1170 = vmatpush1.bf16.msra.mxu0 %v1092
      %1171 = vmatprep.subr.bf16.mxu0 0
      %1172 = vmatpush1.bf16.msra.mxu0 %v1093
      %1173 = vmatprep.subr.bf16.mxu0 0
      %1174 = vmatpush1.bf16.msra.mxu0 %v1094
      %1175 = vmatprep.mubr.bf16.mxu0 %v884
      %1176 = vmatmul.mubr.bf16.gmra.mrb[0].mxu0 %v883
      %v1177 = vpop.f32.mrb[0].mxu0
      %v1178 = vadd.f32 0.0, %v1177
      %v1179 = vpop.f32.mrb[0].mxu0
      %v1180 = vpop.f32.mrb[0].mxu0
      %v1181 = vadd.f32 0.0, %v1180
      %v1182 = vpop.f32.mrb[0].mxu0
      %1183 = vdwg.mxu0
      %1184 = vmatprep.subr.bf16.mxu0 0
      %1185 = vmatpush1.bf16.msra.mxu0 %v1095
      %1186 = vmatprep.subr.bf16.mxu0 0
      %1187 = vmatpush1.bf16.msra.mxu0 %v1096
      %1188 = vmatprep.subr.bf16.mxu0 0
      %1189 = vmatpush1.bf16.msra.mxu0 %v1097
      %1190 = vmatprep.subr.bf16.mxu0 0
      %1191 = vmatpush1.bf16.msra.mxu0 %v1098
      %1192 = vmatprep.subr.bf16.mxu0 0
      %1193 = vmatpush1.bf16.msra.mxu0 %v1099
      %1194 = vmatprep.subr.bf16.mxu0 0
      %1195 = vmatpush1.bf16.msra.mxu0 %v1100
      %1196 = vmatprep.subr.bf16.mxu0 0
      %1197 = vmatpush1.bf16.msra.mxu0 %v1101
      %1198 = vmatprep.subr.bf16.mxu0 0
      %1199 = vmatpush1.bf16.msra.mxu0 %v1102
      %1200 = vmatprep.subr.bf16.mxu0 0
      %1201 = vmatpush1.bf16.msra.mxu0 %v1103
      %1202 = vmatprep.subr.bf16.mxu0 0
      %1203 = vmatpush1.bf16.msra.mxu0 %v1104
      %1204 = vmatprep.subr.bf16.mxu0 0
      %1205 = vmatpush1.bf16.msra.mxu0 %v1105
      %1206 = vmatprep.subr.bf16.mxu0 0
      %1207 = vmatpush1.bf16.msra.mxu0 %v1106
      %1208 = vmatprep.subr.bf16.mxu0 0
      %1209 = vmatpush1.bf16.msra.mxu0 %v1107
      %1210 = vmatprep.subr.bf16.mxu0 0
      %1211 = vmatpush1.bf16.msra.mxu0 %v1108
      %1212 = vmatprep.subr.bf16.mxu0 0
      %1213 = vmatpush1.bf16.msra.mxu0 %v1109
      %1214 = vmatprep.subr.bf16.mxu0 0
      %1215 = vmatpush1.bf16.msra.mxu0 %v1110
      %1216 = vmatprep.mubr.bf16.mxu0 %v886
      %1217 = vmatmul.mubr.bf16.gmra.mrb[0].mxu0 %v885
      %v1218 = vpop.f32.mrb[0].mxu0
      %v1219 = vadd.f32 %v1178, %v1218
      %v1220 = vpop.f32.mrb[0].mxu0
      %v1221 = vpop.f32.mrb[0].mxu0
      %v1222 = vadd.f32 %v1181, %v1221
      %v1223 = vpop.f32.mrb[0].mxu0
      %1224 = vdwg.mxu0
      %v1225 = vadd.f32 %v881, %v1219
      %v1226 = vadd.f32 %v882, %v1222
      %1227 = vst [vmem:[%s415] sm:$0xff] %v1225
      %1228 = vst [vmem:[%s415 + $0x8] sm:$0xff] %v1226
      %p1229 = scmp.lt.s32.totalorder %s21, 1
      %s1230 = scalar_select %p1229, %s21, 1
      %s1231 = smul.addr %s1230, 2
      %s1232 = smul.addr %s1231, 8
      %s1233 = scalar_lea.vmem %s6, %s1232
      // Predicated region
      $region49: #{byol_forward.4} parent=43 // pred_check
        %p1234 = pneg %p211
      $region50: #{byol_forward.4} parent=43 // pred_check_branch
        %1236 = sbr.rel (%p1234) target = $region52
      $region51: #{byol_forward.4} parent=43 // pred_region
        _
      $region52: #{byol_forward.4} parent=43 // pred_fallthru
        _
    $region44: #{byol_forward.4} parent=5 // pred_fallthru
      _
    %p1237 = scmp.le.s32.totalorder 2, %s12
    // Predicated region
    $region53: #{byol_forward.4} parent=5 // pred_check
      %p1238 = pneg %p1237
    $region54: #{byol_forward.4} parent=5 // pred_check_branch
      %1240 = sbr.rel (%p1238) target = $region56
    $region55: #{byol_forward.4} parent=5 // pred_region
      %s1241 = ssub.s32 %s12, 2
      // Predicated region
      $region57: #{byol_forward.4} parent=55 // pred_check
        %p1242 = pneg %p217
      $region58: #{byol_forward.4} parent=55 // pred_check_branch
        %1244 = sbr.rel (%p1242) target = $region60
      $region59: #{byol_forward.4} parent=55 // pred_region
        %p1245 = scmp.lt.s32.totalorder %s23, 1
        %s1246 = scalar_select %p1245, %s23, 1
        %s1247 = smul.addr %s1246, 2
        %s1248 = smul.addr %s1247, 8
        %s1249 = scalar_lea.vmem %s6, %s1248
      $region60: #{byol_forward.4} parent=55 // pred_fallthru
        _
    $region56: #{byol_forward.4} parent=5 // pred_fallthru
      _
  $region6: #{byol_forward.4} parent=0 // loop_footer
    %s16 = sadd.s32 1, %s12
  $region7: #{byol_forward.4} parent=0 // loop_footer_branch
    %11 = sbr.rel target = $region3
  $region8: #{byol_forward.4} parent=0 // loop_exit
    _

// kernel: byol_forward.3
$region0: #{byol_forward.3}
  #allocation0 [shape = 'u32[]', space=smem, size = 0x4, offset = 0x4, fixed_abs, tag = 'smem constant byte address 0x4 - core index']
  #allocation1 [shape = 'u32[144,128]{1,0:T(1,128)}', space=vmem, size = 0x12000, scoped, tag = 'internal scratch']
  %s0 = inlined_call_operand.vmem [shape: bf16[4096,4], index: 0, kind: input, shape index: {}]
  %s1 = inlined_call_operand.vmem [shape: bf16[4,256], index: 1, kind: input, shape index: {}]
  %s2 = inlined_call_operand.vmem [shape: f32[1,256], index: 2, kind: input, shape index: {}]
  %s3 = inlined_call_operand.vmem [shape: f32[16,128], index: 3, kind: output, shape index: {0}]
  %s4 = inlined_call_operand.vmem [shape: f32[16,128], index: 4, kind: output, shape index: {1}]
  %5 = xla_tuple %s3, %s4
  %s6 = sld [smem:[#allocation0]]
  $region53: #{byol_forward.3} parent=0
    _
  %s8 = ssub.s32 1, %s6
  %s9 = scalar_select 0, %s8, %s6
  loop: start=0, step=1, limit=4
  $region2: #{byol_forward.3} parent=0 // loop_pre_header
    _
  $region3: #{byol_forward.3} parent=0 // loop_header
    %s11 = sphi 0, %s15
    %p12 = scmp.ge.s32.totalorder %s11, 4
    %s21 = sphi 0, %s23
    %s24 = sphi 0, %s21
    %s25 = sphi 0, %s24
    %s41 = sphi 0, %s25
    %s45 = sphi 0, %s45
    %s47 = sphi 0, %s45
    %s48 = sphi 0, %s47
    %s62 = sphi 0, %s48
    %s66 = sphi 0, %s66
    %s68 = sphi 0, %s66
    %s69 = sphi 0, %s68
    %s83 = sphi 0, %s69
    %s89 = sphi 0, %s91
    %s92 = sphi 0, %s89
    %s93 = sphi 0, %s92
    %s109 = sphi 0, %s93
    %s115 = sphi 0, %s117
    %s118 = sphi 0, %s115
    %s119 = sphi 0, %s118
    %s135 = sphi 0, %s119
  $region4: #{byol_forward.3} parent=0 // loop_header_branch
    %14 = sbr.rel (%p12) target = $region8
  $region5: #{byol_forward.3} parent=0 // loop_body
    %s16 = ssub.s32 %s11, 1
    %s17 = ssub.s32 %s11, 2
    %s18 = sadd.s32 %s11, 1
    %s19 = ssub.s32 %s11, %s18
    %p20 = scmp.eq.s32.totalorder %s19, 0
    %s22 = sadd.s32 %s21, 1
    %s23 = scalar_select %p20, %s21, %s22
    %p26 = pneg %p20
    %p27 = scmp.eq.s32.totalorder %s11, 1
    %p28 = por %p26, %p27
    %p29 = scmp.ne.s32.totalorder %s21, %s24
    %p30 = scmp.eq.s32.totalorder %s11, 0
    %p31 = por %p29, %p30
    %p32 = scmp.ne.s32.totalorder %s21, %s24
    %p33 = scmp.eq.s32.totalorder %s16, 1
    %p34 = por %p32, %p33
    %p35 = scmp.ne.s32.totalorder %s24, %s25
    %p36 = scmp.eq.s32.totalorder %s16, 0
    %p37 = por %p35, %p36
    %p38 = scmp.ne.s32.totalorder %s24, %s25
    %p39 = scmp.eq.s32.totalorder %s17, 1
    %p40 = por %p38, %p39
    %p42 = scmp.ne.s32.totalorder %s25, %s41
    %p43 = scmp.eq.s32.totalorder %s17, 0
    %p44 = por %p42, %p43
    %s46 = sadd.s32 %s45, 1
    %p49 = scmp.eq.s32.totalorder %s11, 1
    %p50 = scmp.ne.s32.totalorder %s45, %s47
    %p51 = scmp.eq.s32.totalorder %s11, 0
    %p52 = por %p50, %p51
    %p53 = scmp.ne.s32.totalorder %s45, %s47
    %p54 = scmp.eq.s32.totalorder %s16, 1
    %p55 = por %p53, %p54
    %p56 = scmp.ne.s32.totalorder %s47, %s48
    %p57 = scmp.eq.s32.totalorder %s16, 0
    %p58 = por %p56, %p57
    %p59 = scmp.ne.s32.totalorder %s47, %s48
    %p60 = scmp.eq.s32.totalorder %s17, 1
    %p61 = por %p59, %p60
    %p63 = scmp.ne.s32.totalorder %s48, %s62
    %p64 = scmp.eq.s32.totalorder %s17, 0
    %p65 = por %p63, %p64
    %s67 = sadd.s32 %s66, 1
    %p70 = scmp.eq.s32.totalorder %s11, 1
    %p71 = scmp.ne.s32.totalorder %s66, %s68
    %p72 = scmp.eq.s32.totalorder %s11, 0
    %p73 = por %p71, %p72
    %p74 = scmp.ne.s32.totalorder %s66, %s68
    %p75 = scmp.eq.s32.totalorder %s16, 1
    %p76 = por %p74, %p75
    %p77 = scmp.ne.s32.totalorder %s68, %s69
    %p78 = scmp.eq.s32.totalorder %s16, 0
    %p79 = por %p77, %p78
    %p80 = scmp.ne.s32.totalorder %s68, %s69
    %p81 = scmp.eq.s32.totalorder %s17, 1
    %p82 = por %p80, %p81
    %p84 = scmp.ne.s32.totalorder %s69, %s83
    %p85 = scmp.eq.s32.totalorder %s17, 0
    %p86 = por %p84, %p85
    %s87 = ssub.s32 %s11, %s18
    %p88 = scmp.eq.s32.totalorder %s87, 0
    %s90 = sadd.s32 %s89, 1
    %s91 = scalar_select %p88, %s89, %s90
    %p94 = pneg %p88
    %p95 = scmp.eq.s32.totalorder %s11, 1
    %p96 = por %p94, %p95
    %p97 = scmp.ne.s32.totalorder %s89, %s92
    %p98 = scmp.eq.s32.totalorder %s11, 0
    %p99 = por %p97, %p98
    %p100 = scmp.ne.s32.totalorder %s89, %s92
    %p101 = scmp.eq.s32.totalorder %s16, 1
    %p102 = por %p100, %p101
    %p103 = scmp.ne.s32.totalorder %s92, %s93
    %p104 = scmp.eq.s32.totalorder %s16, 0
    %p105 = por %p103, %p104
    %p106 = scmp.ne.s32.totalorder %s92, %s93
    %p107 = scmp.eq.s32.totalorder %s17, 1
    %p108 = por %p106, %p107
    %p110 = scmp.ne.s32.totalorder %s93, %s109
    %p111 = scmp.eq.s32.totalorder %s17, 0
    %p112 = por %p110, %p111
    %s113 = ssub.s32 %s11, %s18
    %p114 = scmp.eq.s32.totalorder %s113, 0
    %s116 = sadd.s32 %s115, 1
    %s117 = scalar_select %p114, %s115, %s116
    %p120 = pneg %p114
    %p121 = scmp.eq.s32.totalorder %s11, 1
    %p122 = por %p120, %p121
    %p123 = scmp.ne.s32.totalorder %s115, %s118
    %p124 = scmp.eq.s32.totalorder %s11, 0
    %p125 = por %p123, %p124
    %p126 = scmp.ne.s32.totalorder %s115, %s118
    %p127 = scmp.eq.s32.totalorder %s16, 1
    %p128 = por %p126, %p127
    %p129 = scmp.ne.s32.totalorder %s118, %s119
    %p130 = scmp.eq.s32.totalorder %s16, 0
    %p131 = por %p129, %p130
    %p132 = scmp.ne.s32.totalorder %s118, %s119
    %p133 = scmp.eq.s32.totalorder %s17, 1
    %p134 = por %p132, %p133
    %p136 = scmp.ne.s32.totalorder %s119, %s135
    %p137 = scmp.eq.s32.totalorder %s17, 0
    %p138 = por %p136, %p137
    %p139 = scmp.le.s32.totalorder 1, %s11
    %p140 = scmp.lt.s32.totalorder %s11, 3
    %p141 = pnand %p139, %p140
    %p142 = pneg %p141
    // Predicated region
    $region9: #{byol_forward.3} parent=5 // pred_check
      _
    $region10: #{byol_forward.3} parent=5 // pred_check_branch
      %144 = sbr.rel (%p141) target = $region12
    $region11: #{byol_forward.3} parent=5 // pred_region
      %s145 = ssub.s32 %s11, 1
      // Predicated region
      $region13: #{byol_forward.3} parent=11 // pred_check
        %p146 = pneg %p58
      $region14: #{byol_forward.3} parent=11 // pred_check_branch
        %148 = sbr.rel (%p146) target = $region16
      $region15: #{byol_forward.3} parent=11 // pred_region
        _
      $region16: #{byol_forward.3} parent=11 // pred_fallthru
        _
      // Predicated region
      $region17: #{byol_forward.3} parent=11 // pred_check
        %p149 = pneg %p79
      $region18: #{byol_forward.3} parent=11 // pred_check_branch
        %151 = sbr.rel (%p149) target = $region20
      $region19: #{byol_forward.3} parent=11 // pred_region
        _
      $region20: #{byol_forward.3} parent=11 // pred_fallthru
        _
    $region12: #{byol_forward.3} parent=5 // pred_fallthru
      _
    %p152 = scmp.lt.s32.totalorder %s11, 2
    // Predicated region
    $region21: #{byol_forward.3} parent=5 // pred_check
      %p153 = pneg %p152
    $region22: #{byol_forward.3} parent=5 // pred_check_branch
      %155 = sbr.rel (%p153) target = $region24
    $region23: #{byol_forward.3} parent=5 // pred_region
      // Predicated region
      $region25: #{byol_forward.3} parent=23 // pred_check
        %p156 = pneg %p31
      $region26: #{byol_forward.3} parent=23 // pred_check_branch
        %158 = sbr.rel (%p156) target = $region28
      $region27: #{byol_forward.3} parent=23 // pred_region
        %s159 = smul.u32 256, %s11
        %p160 = scmp.lt.s32.totalorder %s159, 511
        %s161 = scalar_select %p160, %s159, 511
        %s162 = smul.addr %s161, 4
        %s163 = scalar_lea.vmem %s0, %s162
        %s164 = smul.u32 256, %s11
      $region28: #{byol_forward.3} parent=23 // pred_fallthru
        _
    $region24: #{byol_forward.3} parent=5 // pred_fallthru
      _
    %p165 = scmp.le.s32.totalorder 1, %s11
    %p166 = scmp.lt.s32.totalorder %s11, 3
    %p167 = pnand %p165, %p166
    %p168 = pneg %p167
    // Predicated region
    $region29: #{byol_forward.3} parent=5 // pred_check
      _
    $region30: #{byol_forward.3} parent=5 // pred_check_branch
      %170 = sbr.rel (%p167) target = $region32
    $region31: #{byol_forward.3} parent=5 // pred_region
      %s171 = ssub.s32 %s11, 1
      %s172 = smul.u32 256, %s16
      %p173 = scmp.lt.s32.totalorder %s172, 511
      %s174 = scalar_select %p173, %s172, 511
      %s175 = smul.addr %s174, 4
      %s176 = scalar_lea.vmem %s0, %s175
      %p177 = pneg %p37
      %p178 = pneg %p34
      %p179 = pneg %p58
      %p180 = pneg %p55
      %p181 = pneg %p79
      %p182 = pneg %p76
      %p183 = pneg %p105
      %p184 = pneg %p102
      %p185 = scmp.lt.s32.totalorder %s16, 1
      %s186 = scalar_select %p185, %s16, 1
      %s187 = smul.addr %s186, 8
      %s188 = scalar_lea.vmem %s3, %s187
      %p189 = pneg %p131
      %p190 = pneg %p128
      %p191 = scmp.lt.s32.totalorder %s16, 1
      %s192 = scalar_select %p191, %s16, 1
      %s193 = smul.addr %s192, 8
      %s194 = scalar_lea.vmem %s4, %s193
      %s195 = smul.u32 256, %s16
      %p196 = scmp.lt.s32.totalorder %s195, 511
      %s197 = scalar_select %p196, %s195, 511
      %s198 = smul.addr %s197, 4
      %s199 = scalar_lea.vmem %s0, %s198
      %s200 = smul.u32 256, %s16
      %p201 = scmp.lt.s32.totalorder %s16, 1
      %s202 = scalar_select %p201, %s16, 1
      %s203 = smul.addr %s202, 8
      %s204 = scalar_lea.vmem %s3, %s203
      %p205 = scmp.lt.s32.totalorder %s16, 1
      %s206 = scalar_select %p205, %s16, 1
      %s207 = smul.addr %s206, 8
      %s208 = scalar_lea.vmem %s4, %s207
      %v210 = vld [vmem:[%s199] sm:$0xf]
      %v211 = vld [vmem:[%s199 + $0x4] sm:$0xf]
      %v212 = vld [vmem:[%s199 + $0x8] sm:$0xf]
      %v213 = vld [vmem:[%s199 + $0xc] sm:$0xf]
      %v214 = vld [vmem:[%s199 + $0x10] sm:$0xf]
      %v215 = vld [vmem:[%s199 + $0x14] sm:$0xf]
      %v216 = vld [vmem:[%s199 + $0x18] sm:$0xf]
      %v217 = vld [vmem:[%s199 + $0x1c] sm:$0xf]
      %v218 = vld [vmem:[%s199 + $0x20] sm:$0xf]
      %v219 = vld [vmem:[%s199 + $0x24] sm:$0xf]
      %v220 = vld [vmem:[%s199 + $0x28] sm:$0xf]
      %v221 = vld [vmem:[%s199 + $0x2c] sm:$0xf]
      %v222 = vld [vmem:[%s199 + $0x30] sm:$0xf]
      %v223 = vld [vmem:[%s199 + $0x34] sm:$0xf]
      %v224 = vld [vmem:[%s199 + $0x38] sm:$0xf]
      %v225 = vld [vmem:[%s199 + $0x3c] sm:$0xf]
      %v226 = vld [vmem:[%s199 + $0x40] sm:$0xf]
      %v227 = vld [vmem:[%s199 + $0x44] sm:$0xf]
      %v228 = vld [vmem:[%s199 + $0x48] sm:$0xf]
      %v229 = vld [vmem:[%s199 + $0x4c] sm:$0xf]
      %v230 = vld [vmem:[%s199 + $0x50] sm:$0xf]
      %v231 = vld [vmem:[%s199 + $0x54] sm:$0xf]
      %v232 = vld [vmem:[%s199 + $0x58] sm:$0xf]
      %v233 = vld [vmem:[%s199 + $0x5c] sm:$0xf]
      %v234 = vld [vmem:[%s199 + $0x60] sm:$0xf]
      %v235 = vld [vmem:[%s199 + $0x64] sm:$0xf]
      %v236 = vld [vmem:[%s199 + $0x68] sm:$0xf]
      %v237 = vld [vmem:[%s199 + $0x6c] sm:$0xf]
      %v238 = vld [vmem:[%s199 + $0x70] sm:$0xf]
      %v239 = vld [vmem:[%s199 + $0x74] sm:$0xf]
      %v240 = vld [vmem:[%s199 + $0x78] sm:$0xf]
      %v241 = vld [vmem:[%s199 + $0x7c] sm:$0xf]
      %v242 = vld [vmem:[%s199 + $0x80] sm:$0xf]
      %v243 = vld [vmem:[%s199 + $0x84] sm:$0xf]
      %v244 = vld [vmem:[%s199 + $0x88] sm:$0xf]
      %v245 = vld [vmem:[%s199 + $0x8c] sm:$0xf]
      %v246 = vld [vmem:[%s199 + $0x90] sm:$0xf]
      %v247 = vld [vmem:[%s199 + $0x94] sm:$0xf]
      %v248 = vld [vmem:[%s199 + $0x98] sm:$0xf]
      %v249 = vld [vmem:[%s199 + $0x9c] sm:$0xf]
      %v250 = vld [vmem:[%s199 + $0xa0] sm:$0xf]
      %v251 = vld [vmem:[%s199 + $0xa4] sm:$0xf]
      %v252 = vld [vmem:[%s199 + $0xa8] sm:$0xf]
      %v253 = vld [vmem:[%s199 + $0xac] sm:$0xf]
      %v254 = vld [vmem:[%s199 + $0xb0] sm:$0xf]
      %v255 = vld [vmem:[%s199 + $0xb4] sm:$0xf]
      %v256 = vld [vmem:[%s199 + $0xb8] sm:$0xf]
      %v257 = vld [vmem:[%s199 + $0xbc] sm:$0xf]
      %v258 = vld [vmem:[%s199 + $0xc0] sm:$0xf]
      %v259 = vld [vmem:[%s199 + $0xc4] sm:$0xf]
      %v260 = vld [vmem:[%s199 + $0xc8] sm:$0xf]
      %v261 = vld [vmem:[%s199 + $0xcc] sm:$0xf]
      %v262 = vld [vmem:[%s199 + $0xd0] sm:$0xf]
      %v263 = vld [vmem:[%s199 + $0xd4] sm:$0xf]
      %v264 = vld [vmem:[%s199 + $0xd8] sm:$0xf]
      %v265 = vld [vmem:[%s199 + $0xdc] sm:$0xf]
      %v266 = vld [vmem:[%s199 + $0xe0] sm:$0xf]
      %v267 = vld [vmem:[%s199 + $0xe4] sm:$0xf]
      %v268 = vld [vmem:[%s199 + $0xe8] sm:$0xf]
      %v269 = vld [vmem:[%s199 + $0xec] sm:$0xf]
      %v270 = vld [vmem:[%s199 + $0xf0] sm:$0xf]
      %v271 = vld [vmem:[%s199 + $0xf4] sm:$0xf]
      %v272 = vld [vmem:[%s199 + $0xf8] sm:$0xf]
      %v273 = vld [vmem:[%s199 + $0xfc] sm:$0xf]
      %v274 = vld [vmem:[%s199 + $0x100] sm:$0xf]
      %v275 = vld [vmem:[%s199 + $0x104] sm:$0xf]
      %v276 = vld [vmem:[%s199 + $0x108] sm:$0xf]
      %v277 = vld [vmem:[%s199 + $0x10c] sm:$0xf]
      %v278 = vld [vmem:[%s199 + $0x110] sm:$0xf]
      %v279 = vld [vmem:[%s199 + $0x114] sm:$0xf]
      %v280 = vld [vmem:[%s199 + $0x118] sm:$0xf]
      %v281 = vld [vmem:[%s199 + $0x11c] sm:$0xf]
      %v282 = vld [vmem:[%s199 + $0x120] sm:$0xf]
      %v283 = vld [vmem:[%s199 + $0x124] sm:$0xf]
      %v284 = vld [vmem:[%s199 + $0x128] sm:$0xf]
      %v285 = vld [vmem:[%s199 + $0x12c] sm:$0xf]
      %v286 = vld [vmem:[%s199 + $0x130] sm:$0xf]
      %v287 = vld [vmem:[%s199 + $0x134] sm:$0xf]
      %v288 = vld [vmem:[%s199 + $0x138] sm:$0xf]
      %v289 = vld [vmem:[%s199 + $0x13c] sm:$0xf]
      %v290 = vld [vmem:[%s199 + $0x140] sm:$0xf]
      %v291 = vld [vmem:[%s199 + $0x144] sm:$0xf]
      %v292 = vld [vmem:[%s199 + $0x148] sm:$0xf]
      %v293 = vld [vmem:[%s199 + $0x14c] sm:$0xf]
      %v294 = vld [vmem:[%s199 + $0x150] sm:$0xf]
      %v295 = vld [vmem:[%s199 + $0x154] sm:$0xf]
      %v296 = vld [vmem:[%s199 + $0x158] sm:$0xf]
      %v297 = vld [vmem:[%s199 + $0x15c] sm:$0xf]
      %v298 = vld [vmem:[%s199 + $0x160] sm:$0xf]
      %v299 = vld [vmem:[%s199 + $0x164] sm:$0xf]
      %v300 = vld [vmem:[%s199 + $0x168] sm:$0xf]
      %v301 = vld [vmem:[%s199 + $0x16c] sm:$0xf]
      %v302 = vld [vmem:[%s199 + $0x170] sm:$0xf]
      %v303 = vld [vmem:[%s199 + $0x174] sm:$0xf]
      %v304 = vld [vmem:[%s199 + $0x178] sm:$0xf]
      %v305 = vld [vmem:[%s199 + $0x17c] sm:$0xf]
      %v306 = vld [vmem:[%s199 + $0x180] sm:$0xf]
      %v307 = vld [vmem:[%s199 + $0x184] sm:$0xf]
      %v308 = vld [vmem:[%s199 + $0x188] sm:$0xf]
      %v309 = vld [vmem:[%s199 + $0x18c] sm:$0xf]
      %v310 = vld [vmem:[%s199 + $0x190] sm:$0xf]
      %v311 = vld [vmem:[%s199 + $0x194] sm:$0xf]
      %v312 = vld [vmem:[%s199 + $0x198] sm:$0xf]
      %v313 = vld [vmem:[%s199 + $0x19c] sm:$0xf]
      %v314 = vld [vmem:[%s199 + $0x1a0] sm:$0xf]
      %v315 = vld [vmem:[%s199 + $0x1a4] sm:$0xf]
      %v316 = vld [vmem:[%s199 + $0x1a8] sm:$0xf]
      %v317 = vld [vmem:[%s199 + $0x1ac] sm:$0xf]
      %v318 = vld [vmem:[%s199 + $0x1b0] sm:$0xf]
      %v319 = vld [vmem:[%s199 + $0x1b4] sm:$0xf]
      %v320 = vld [vmem:[%s199 + $0x1b8] sm:$0xf]
      %v321 = vld [vmem:[%s199 + $0x1bc] sm:$0xf]
      %v322 = vld [vmem:[%s199 + $0x1c0] sm:$0xf]
      %v323 = vld [vmem:[%s199 + $0x1c4] sm:$0xf]
      %v324 = vld [vmem:[%s199 + $0x1c8] sm:$0xf]
      %v325 = vld [vmem:[%s199 + $0x1cc] sm:$0xf]
      %v326 = vld [vmem:[%s199 + $0x1d0] sm:$0xf]
      %v327 = vld [vmem:[%s199 + $0x1d4] sm:$0xf]
      %v328 = vld [vmem:[%s199 + $0x1d8] sm:$0xf]
      %v329 = vld [vmem:[%s199 + $0x1dc] sm:$0xf]
      %v330 = vld [vmem:[%s199 + $0x1e0] sm:$0xf]
      %v331 = vld [vmem:[%s199 + $0x1e4] sm:$0xf]
      %v332 = vld [vmem:[%s199 + $0x1e8] sm:$0xf]
      %v333 = vld [vmem:[%s199 + $0x1ec] sm:$0xf]
      %v334 = vld [vmem:[%s199 + $0x1f0] sm:$0xf]
      %v335 = vld [vmem:[%s199 + $0x1f4] sm:$0xf]
      %v336 = vld [vmem:[%s199 + $0x1f8] sm:$0xf]
      %v337 = vld [vmem:[%s199 + $0x1fc] sm:$0xf]
      %v338 = vld [vmem:[%s199 + $0x200] sm:$0xf]
      %v339 = vld [vmem:[%s199 + $0x204] sm:$0xf]
      %v340 = vld [vmem:[%s199 + $0x208] sm:$0xf]
      %v341 = vld [vmem:[%s199 + $0x20c] sm:$0xf]
      %v342 = vld [vmem:[%s199 + $0x210] sm:$0xf]
      %v343 = vld [vmem:[%s199 + $0x214] sm:$0xf]
      %v344 = vld [vmem:[%s199 + $0x218] sm:$0xf]
      %v345 = vld [vmem:[%s199 + $0x21c] sm:$0xf]
      %v346 = vld [vmem:[%s199 + $0x220] sm:$0xf]
      %v347 = vld [vmem:[%s199 + $0x224] sm:$0xf]
      %v348 = vld [vmem:[%s199 + $0x228] sm:$0xf]
      %v349 = vld [vmem:[%s199 + $0x22c] sm:$0xf]
      %v350 = vld [vmem:[%s199 + $0x230] sm:$0xf]
      %v351 = vld [vmem:[%s199 + $0x234] sm:$0xf]
      %v352 = vld [vmem:[%s199 + $0x238] sm:$0xf]
      %v353 = vld [vmem:[%s199 + $0x23c] sm:$0xf]
      %v354 = vld [vmem:[%s199 + $0x240] sm:$0xf]
      %v355 = vld [vmem:[%s199 + $0x244] sm:$0xf]
      %v356 = vld [vmem:[%s199 + $0x248] sm:$0xf]
      %v357 = vld [vmem:[%s199 + $0x24c] sm:$0xf]
      %v358 = vld [vmem:[%s199 + $0x250] sm:$0xf]
      %v359 = vld [vmem:[%s199 + $0x254] sm:$0xf]
      %v360 = vld [vmem:[%s199 + $0x258] sm:$0xf]
      %v361 = vld [vmem:[%s199 + $0x25c] sm:$0xf]
      %v362 = vld [vmem:[%s199 + $0x260] sm:$0xf]
      %v363 = vld [vmem:[%s199 + $0x264] sm:$0xf]
      %v364 = vld [vmem:[%s199 + $0x268] sm:$0xf]
      %v365 = vld [vmem:[%s199 + $0x26c] sm:$0xf]
      %v366 = vld [vmem:[%s199 + $0x270] sm:$0xf]
      %v367 = vld [vmem:[%s199 + $0x274] sm:$0xf]
      %v368 = vld [vmem:[%s199 + $0x278] sm:$0xf]
      %v369 = vld [vmem:[%s199 + $0x27c] sm:$0xf]
      %v370 = vld [vmem:[%s199 + $0x280] sm:$0xf]
      %v371 = vld [vmem:[%s199 + $0x284] sm:$0xf]
      %v372 = vld [vmem:[%s199 + $0x288] sm:$0xf]
      %v373 = vld [vmem:[%s199 + $0x28c] sm:$0xf]
      %v374 = vld [vmem:[%s199 + $0x290] sm:$0xf]
      %v375 = vld [vmem:[%s199 + $0x294] sm:$0xf]
      %v376 = vld [vmem:[%s199 + $0x298] sm:$0xf]
      %v377 = vld [vmem:[%s199 + $0x29c] sm:$0xf]
      %v378 = vld [vmem:[%s199 + $0x2a0] sm:$0xf]
      %v379 = vld [vmem:[%s199 + $0x2a4] sm:$0xf]
      %v380 = vld [vmem:[%s199 + $0x2a8] sm:$0xf]
      %v381 = vld [vmem:[%s199 + $0x2ac] sm:$0xf]
      %v382 = vld [vmem:[%s199 + $0x2b0] sm:$0xf]
      %v383 = vld [vmem:[%s199 + $0x2b4] sm:$0xf]
      %v384 = vld [vmem:[%s199 + $0x2b8] sm:$0xf]
      %v385 = vld [vmem:[%s199 + $0x2bc] sm:$0xf]
      %v386 = vld [vmem:[%s199 + $0x2c0] sm:$0xf]
      %v387 = vld [vmem:[%s199 + $0x2c4] sm:$0xf]
      %v388 = vld [vmem:[%s199 + $0x2c8] sm:$0xf]
      %v389 = vld [vmem:[%s199 + $0x2cc] sm:$0xf]
      %v390 = vld [vmem:[%s199 + $0x2d0] sm:$0xf]
      %v391 = vld [vmem:[%s199 + $0x2d4] sm:$0xf]
      %v392 = vld [vmem:[%s199 + $0x2d8] sm:$0xf]
      %v393 = vld [vmem:[%s199 + $0x2dc] sm:$0xf]
      %v394 = vld [vmem:[%s199 + $0x2e0] sm:$0xf]
      %v395 = vld [vmem:[%s199 + $0x2e4] sm:$0xf]
      %v396 = vld [vmem:[%s199 + $0x2e8] sm:$0xf]
      %v397 = vld [vmem:[%s199 + $0x2ec] sm:$0xf]
      %v398 = vld [vmem:[%s199 + $0x2f0] sm:$0xf]
      %v399 = vld [vmem:[%s199 + $0x2f4] sm:$0xf]
      %v400 = vld [vmem:[%s199 + $0x2f8] sm:$0xf]
      %v401 = vld [vmem:[%s199 + $0x2fc] sm:$0xf]
      %v402 = vld [vmem:[%s199 + $0x300] sm:$0xf]
      %v403 = vld [vmem:[%s199 + $0x304] sm:$0xf]
      %v404 = vld [vmem:[%s199 + $0x308] sm:$0xf]
      %v405 = vld [vmem:[%s199 + $0x30c] sm:$0xf]
      %v406 = vld [vmem:[%s199 + $0x310] sm:$0xf]
      %v407 = vld [vmem:[%s199 + $0x314] sm:$0xf]
      %v408 = vld [vmem:[%s199 + $0x318] sm:$0xf]
      %v409 = vld [vmem:[%s199 + $0x31c] sm:$0xf]
      %v410 = vld [vmem:[%s199 + $0x320] sm:$0xf]
      %v411 = vld [vmem:[%s199 + $0x324] sm:$0xf]
      %v412 = vld [vmem:[%s199 + $0x328] sm:$0xf]
      %v413 = vld [vmem:[%s199 + $0x32c] sm:$0xf]
      %v414 = vld [vmem:[%s199 + $0x330] sm:$0xf]
      %v415 = vld [vmem:[%s199 + $0x334] sm:$0xf]
      %v416 = vld [vmem:[%s199 + $0x338] sm:$0xf]
      %v417 = vld [vmem:[%s199 + $0x33c] sm:$0xf]
      %v418 = vld [vmem:[%s199 + $0x340] sm:$0xf]
      %v419 = vld [vmem:[%s199 + $0x344] sm:$0xf]
      %v420 = vld [vmem:[%s199 + $0x348] sm:$0xf]
      %v421 = vld [vmem:[%s199 + $0x34c] sm:$0xf]
      %v422 = vld [vmem:[%s199 + $0x350] sm:$0xf]
      %v423 = vld [vmem:[%s199 + $0x354] sm:$0xf]
      %v424 = vld [vmem:[%s199 + $0x358] sm:$0xf]
      %v425 = vld [vmem:[%s199 + $0x35c] sm:$0xf]
      %v426 = vld [vmem:[%s199 + $0x360] sm:$0xf]
      %v427 = vld [vmem:[%s199 + $0x364] sm:$0xf]
      %v428 = vld [vmem:[%s199 + $0x368] sm:$0xf]
      %v429 = vld [vmem:[%s199 + $0x36c] sm:$0xf]
      %v430 = vld [vmem:[%s199 + $0x370] sm:$0xf]
      %v431 = vld [vmem:[%s199 + $0x374] sm:$0xf]
      %v432 = vld [vmem:[%s199 + $0x378] sm:$0xf]
      %v433 = vld [vmem:[%s199 + $0x37c] sm:$0xf]
      %v434 = vld [vmem:[%s199 + $0x380] sm:$0xf]
      %v435 = vld [vmem:[%s199 + $0x384] sm:$0xf]
      %v436 = vld [vmem:[%s199 + $0x388] sm:$0xf]
      %v437 = vld [vmem:[%s199 + $0x38c] sm:$0xf]
      %v438 = vld [vmem:[%s199 + $0x390] sm:$0xf]
      %v439 = vld [vmem:[%s199 + $0x394] sm:$0xf]
      %v440 = vld [vmem:[%s199 + $0x398] sm:$0xf]
      %v441 = vld [vmem:[%s199 + $0x39c] sm:$0xf]
      %v442 = vld [vmem:[%s199 + $0x3a0] sm:$0xf]
      %v443 = vld [vmem:[%s199 + $0x3a4] sm:$0xf]
      %v444 = vld [vmem:[%s199 + $0x3a8] sm:$0xf]
      %v445 = vld [vmem:[%s199 + $0x3ac] sm:$0xf]
      %v446 = vld [vmem:[%s199 + $0x3b0] sm:$0xf]
      %v447 = vld [vmem:[%s199 + $0x3b4] sm:$0xf]
      %v448 = vld [vmem:[%s199 + $0x3b8] sm:$0xf]
      %v449 = vld [vmem:[%s199 + $0x3bc] sm:$0xf]
      %v450 = vld [vmem:[%s199 + $0x3c0] sm:$0xf]
      %v451 = vld [vmem:[%s199 + $0x3c4] sm:$0xf]
      %v452 = vld [vmem:[%s199 + $0x3c8] sm:$0xf]
      %v453 = vld [vmem:[%s199 + $0x3cc] sm:$0xf]
      %v454 = vld [vmem:[%s199 + $0x3d0] sm:$0xf]
      %v455 = vld [vmem:[%s199 + $0x3d4] sm:$0xf]
      %v456 = vld [vmem:[%s199 + $0x3d8] sm:$0xf]
      %v457 = vld [vmem:[%s199 + $0x3dc] sm:$0xf]
      %v458 = vld [vmem:[%s199 + $0x3e0] sm:$0xf]
      %v459 = vld [vmem:[%s199 + $0x3e4] sm:$0xf]
      %v460 = vld [vmem:[%s199 + $0x3e8] sm:$0xf]
      %v461 = vld [vmem:[%s199 + $0x3ec] sm:$0xf]
      %v462 = vld [vmem:[%s199 + $0x3f0] sm:$0xf]
      %v463 = vld [vmem:[%s199 + $0x3f4] sm:$0xf]
      %v464 = vld [vmem:[%s199 + $0x3f8] sm:$0xf]
      %v465 = vld [vmem:[%s199 + $0x3fc] sm:$0xf]
      %v466 = vld [vmem:[%s1] sm:$0xf]
      %v467 = vld [vmem:[%s2] sm:$0x3]
      %v469 = vlaneseq
      %v470 = vshrl.u32 %v469, 7
      %v471 = vsub.s32 0, %v470
      %v472 = vrot.slane %v467, %v471
      %v473 = vlaneseq
      %v474 = vshrl.u32 %v473, 7
      %v475 = vsub.s32 1, %v474
      %v476 = vrot.slane %v467, %v475
      %v735 = vunpack.c.l.b16 %v210
      %v736 = vunpack.c.l.b16 %v211
      %v737 = vunpack.c.l.b16 %v212
      %v738 = vunpack.c.l.b16 %v213
      %v739 = vunpack.c.l.b16 %v214
      %v740 = vunpack.c.l.b16 %v215
      %v741 = vunpack.c.l.b16 %v216
      %v742 = vunpack.c.l.b16 %v217
      %v743 = vunpack.c.l.b16 %v218
      %v744 = vunpack.c.l.b16 %v219
      %v745 = vunpack.c.l.b16 %v220
      %v746 = vunpack.c.l.b16 %v221
      %v747 = vunpack.c.l.b16 %v222
      %v748 = vunpack.c.l.b16 %v223
      %v749 = vunpack.c.l.b16 %v224
      %v750 = vunpack.c.l.b16 %v225
      %v751 = vunpack.c.l.b16 %v226
      %v752 = vunpack.c.l.b16 %v227
      %v753 = vunpack.c.l.b16 %v228
      %v754 = vunpack.c.l.b16 %v229
      %v755 = vunpack.c.l.b16 %v230
      %v756 = vunpack.c.l.b16 %v231
      %v757 = vunpack.c.l.b16 %v232
      %v758 = vunpack.c.l.b16 %v233
      %v759 = vunpack.c.l.b16 %v234
      %v760 = vunpack.c.l.b16 %v235
      %v761 = vunpack.c.l.b16 %v236
      %v762 = vunpack.c.l.b16 %v237
      %v763 = vunpack.c.l.b16 %v238
      %v764 = vunpack.c.l.b16 %v239
      %v765 = vunpack.c.l.b16 %v240
      %v766 = vunpack.c.l.b16 %v241
      %v767 = vunpack.c.l.b16 %v242
      %v768 = vunpack.c.l.b16 %v243
      %v769 = vunpack.c.l.b16 %v244
      %v770 = vunpack.c.l.b16 %v245
      %v771 = vunpack.c.l.b16 %v246
      %v772 = vunpack.c.l.b16 %v247
      %v773 = vunpack.c.l.b16 %v248
      %v774 = vunpack.c.l.b16 %v249
      %v775 = vunpack.c.l.b16 %v250
      %v776 = vunpack.c.l.b16 %v251
      %v777 = vunpack.c.l.b16 %v252
      %v778 = vunpack.c.l.b16 %v253
      %v779 = vunpack.c.l.b16 %v254
      %v780 = vunpack.c.l.b16 %v255
      %v781 = vunpack.c.l.b16 %v256
      %v782 = vunpack.c.l.b16 %v257
      %v783 = vunpack.c.l.b16 %v258
      %v784 = vunpack.c.l.b16 %v259
      %v785 = vunpack.c.l.b16 %v260
      %v786 = vunpack.c.l.b16 %v261
      %v787 = vunpack.c.l.b16 %v262
      %v788 = vunpack.c.l.b16 %v263
      %v789 = vunpack.c.l.b16 %v264
      %v790 = vunpack.c.l.b16 %v265
      %v791 = vunpack.c.l.b16 %v266
      %v792 = vunpack.c.l.b16 %v267
      %v793 = vunpack.c.l.b16 %v268
      %v794 = vunpack.c.l.b16 %v269
      %v795 = vunpack.c.l.b16 %v270
      %v796 = vunpack.c.l.b16 %v271
      %v797 = vunpack.c.l.b16 %v272
      %v798 = vunpack.c.l.b16 %v273
      %v799 = vunpack.c.l.b16 %v274
      %v800 = vunpack.c.l.b16 %v275
      %v801 = vunpack.c.l.b16 %v276
      %v802 = vunpack.c.l.b16 %v277
      %v803 = vunpack.c.l.b16 %v278
      %v804 = vunpack.c.l.b16 %v279
      %v805 = vunpack.c.l.b16 %v280
      %v806 = vunpack.c.l.b16 %v281
      %v807 = vunpack.c.l.b16 %v282
      %v808 = vunpack.c.l.b16 %v283
      %v809 = vunpack.c.l.b16 %v284
      %v810 = vunpack.c.l.b16 %v285
      %v811 = vunpack.c.l.b16 %v286
      %v812 = vunpack.c.l.b16 %v287
      %v813 = vunpack.c.l.b16 %v288
      %v814 = vunpack.c.l.b16 %v289
      %v815 = vunpack.c.l.b16 %v290
      %v816 = vunpack.c.l.b16 %v291
      %v817 = vunpack.c.l.b16 %v292
      %v818 = vunpack.c.l.b16 %v293
      %v819 = vunpack.c.l.b16 %v294
      %v820 = vunpack.c.l.b16 %v295
      %v821 = vunpack.c.l.b16 %v296
      %v822 = vunpack.c.l.b16 %v297
      %v823 = vunpack.c.l.b16 %v298
      %v824 = vunpack.c.l.b16 %v299
      %v825 = vunpack.c.l.b16 %v300
      %v826 = vunpack.c.l.b16 %v301
      %v827 = vunpack.c.l.b16 %v302
      %v828 = vunpack.c.l.b16 %v303
      %v829 = vunpack.c.l.b16 %v304
      %v830 = vunpack.c.l.b16 %v305
      %v831 = vunpack.c.l.b16 %v306
      %v832 = vunpack.c.l.b16 %v307
      %v833 = vunpack.c.l.b16 %v308
      %v834 = vunpack.c.l.b16 %v309
      %v835 = vunpack.c.l.b16 %v310
      %v836 = vunpack.c.l.b16 %v311
      %v837 = vunpack.c.l.b16 %v312
      %v838 = vunpack.c.l.b16 %v313
      %v839 = vunpack.c.l.b16 %v314
      %v840 = vunpack.c.l.b16 %v315
      %v841 = vunpack.c.l.b16 %v316
      %v842 = vunpack.c.l.b16 %v317
      %v843 = vunpack.c.l.b16 %v318
      %v844 = vunpack.c.l.b16 %v319
      %v845 = vunpack.c.l.b16 %v320
      %v846 = vunpack.c.l.b16 %v321
      %v847 = vunpack.c.l.b16 %v322
      %v848 = vunpack.c.l.b16 %v323
      %v849 = vunpack.c.l.b16 %v324
      %v850 = vunpack.c.l.b16 %v325
      %v851 = vunpack.c.l.b16 %v326
      %v852 = vunpack.c.l.b16 %v327
      %v853 = vunpack.c.l.b16 %v328
      %v854 = vunpack.c.l.b16 %v329
      %v855 = vunpack.c.l.b16 %v330
      %v856 = vunpack.c.l.b16 %v331
      %v857 = vunpack.c.l.b16 %v332
      %v858 = vunpack.c.l.b16 %v333
      %v859 = vunpack.c.l.b16 %v334
      %v860 = vunpack.c.l.b16 %v335
      %v861 = vunpack.c.l.b16 %v336
      %v862 = vunpack.c.l.b16 %v337
      %v863 = vunpack.c.l.b16 %v338
      %v864 = vunpack.c.l.b16 %v339
      %v865 = vunpack.c.l.b16 %v340
      %v866 = vunpack.c.l.b16 %v341
      %v867 = vunpack.c.l.b16 %v342
      %v868 = vunpack.c.l.b16 %v343
      %v869 = vunpack.c.l.b16 %v344
      %v870 = vunpack.c.l.b16 %v345
      %v871 = vunpack.c.l.b16 %v346
      %v872 = vunpack.c.l.b16 %v347
      %v873 = vunpack.c.l.b16 %v348
      %v874 = vunpack.c.l.b16 %v349
      %v875 = vunpack.c.l.b16 %v350
      %v876 = vunpack.c.l.b16 %v351
      %v877 = vunpack.c.l.b16 %v352
      %v878 = vunpack.c.l.b16 %v353
      %v879 = vunpack.c.l.b16 %v354
      %v880 = vunpack.c.l.b16 %v355
      %v881 = vunpack.c.l.b16 %v356
      %v882 = vunpack.c.l.b16 %v357
      %v883 = vunpack.c.l.b16 %v358
      %v884 = vunpack.c.l.b16 %v359
      %v885 = vunpack.c.l.b16 %v360
      %v886 = vunpack.c.l.b16 %v361
      %v887 = vunpack.c.l.b16 %v362
      %v888 = vunpack.c.l.b16 %v363
      %v889 = vunpack.c.l.b16 %v364
      %v890 = vunpack.c.l.b16 %v365
      %v891 = vunpack.c.l.b16 %v366
      %v892 = vunpack.c.l.b16 %v367
      %v893 = vunpack.c.l.b16 %v368
      %v894 = vunpack.c.l.b16 %v369
      %v895 = vunpack.c.l.b16 %v370
      %v896 = vunpack.c.l.b16 %v371
      %v897 = vunpack.c.l.b16 %v372
      %v898 = vunpack.c.l.b16 %v373
      %v899 = vunpack.c.l.b16 %v374
      %v900 = vunpack.c.l.b16 %v375
      %v901 = vunpack.c.l.b16 %v376
      %v902 = vunpack.c.l.b16 %v377
      %v903 = vunpack.c.l.b16 %v378
      %v904 = vunpack.c.l.b16 %v379
      %v905 = vunpack.c.l.b16 %v380
      %v906 = vunpack.c.l.b16 %v381
      %v907 = vunpack.c.l.b16 %v382
      %v908 = vunpack.c.l.b16 %v383
      %v909 = vunpack.c.l.b16 %v384
      %v910 = vunpack.c.l.b16 %v385
      %v911 = vunpack.c.l.b16 %v386
      %v912 = vunpack.c.l.b16 %v387
      %v913 = vunpack.c.l.b16 %v388
      %v914 = vunpack.c.l.b16 %v389
      %v915 = vunpack.c.l.b16 %v390
      %v916 = vunpack.c.l.b16 %v391
      %v917 = vunpack.c.l.b16 %v392
      %v918 = vunpack.c.l.b16 %v393
      %v919 = vunpack.c.l.b16 %v394
      %v920 = vunpack.c.l.b16 %v395
      %v921 = vunpack.c.l.b16 %v396
      %v922 = vunpack.c.l.b16 %v397
      %v923 = vunpack.c.l.b16 %v398
      %v924 = vunpack.c.l.b16 %v399
      %v925 = vunpack.c.l.b16 %v400
      %v926 = vunpack.c.l.b16 %v401
      %v927 = vunpack.c.l.b16 %v402
      %v928 = vunpack.c.l.b16 %v403
      %v929 = vunpack.c.l.b16 %v404
      %v930 = vunpack.c.l.b16 %v405
      %v931 = vunpack.c.l.b16 %v406
      %v932 = vunpack.c.l.b16 %v407
      %v933 = vunpack.c.l.b16 %v408
      %v934 = vunpack.c.l.b16 %v409
      %v935 = vunpack.c.l.b16 %v410
      %v936 = vunpack.c.l.b16 %v411
      %v937 = vunpack.c.l.b16 %v412
      %v938 = vunpack.c.l.b16 %v413
      %v939 = vunpack.c.l.b16 %v414
      %v940 = vunpack.c.l.b16 %v415
      %v941 = vunpack.c.l.b16 %v416
      %v942 = vunpack.c.l.b16 %v417
      %v943 = vunpack.c.l.b16 %v418
      %v944 = vunpack.c.l.b16 %v419
      %v945 = vunpack.c.l.b16 %v420
      %v946 = vunpack.c.l.b16 %v421
      %v947 = vunpack.c.l.b16 %v422
      %v948 = vunpack.c.l.b16 %v423
      %v949 = vunpack.c.l.b16 %v424
      %v950 = vunpack.c.l.b16 %v425
      %v951 = vunpack.c.l.b16 %v426
      %v952 = vunpack.c.l.b16 %v427
      %v953 = vunpack.c.l.b16 %v428
      %v954 = vunpack.c.l.b16 %v429
      %v955 = vunpack.c.l.b16 %v430
      %v956 = vunpack.c.l.b16 %v431
      %v957 = vunpack.c.l.b16 %v432
      %v958 = vunpack.c.l.b16 %v433
      %v959 = vunpack.c.l.b16 %v434
      %v960 = vunpack.c.l.b16 %v435
      %v961 = vunpack.c.l.b16 %v436
      %v962 = vunpack.c.l.b16 %v437
      %v963 = vunpack.c.l.b16 %v438
      %v964 = vunpack.c.l.b16 %v439
      %v965 = vunpack.c.l.b16 %v440
      %v966 = vunpack.c.l.b16 %v441
      %v967 = vunpack.c.l.b16 %v442
      %v968 = vunpack.c.l.b16 %v443
      %v969 = vunpack.c.l.b16 %v444
      %v970 = vunpack.c.l.b16 %v445
      %v971 = vunpack.c.l.b16 %v446
      %v972 = vunpack.c.l.b16 %v447
      %v973 = vunpack.c.l.b16 %v448
      %v974 = vunpack.c.l.b16 %v449
      %v975 = vunpack.c.l.b16 %v450
      %v976 = vunpack.c.l.b16 %v451
      %v977 = vunpack.c.l.b16 %v452
      %v978 = vunpack.c.l.b16 %v453
      %v979 = vunpack.c.l.b16 %v454
      %v980 = vunpack.c.l.b16 %v455
      %v981 = vunpack.c.l.b16 %v456
      %v982 = vunpack.c.l.b16 %v457
      %v983 = vunpack.c.l.b16 %v458
      %v984 = vunpack.c.l.b16 %v459
      %v985 = vunpack.c.l.b16 %v460
      %v986 = vunpack.c.l.b16 %v461
      %v987 = vunpack.c.l.b16 %v462
      %v988 = vunpack.c.l.b16 %v463
      %v989 = vunpack.c.l.b16 %v464
      %v990 = vunpack.c.l.b16 %v465
      %v991 = vpack.c.b16 %v736, %v735
      %v992 = vpack.c.b16 %v738, %v737
      %v993 = vpack.c.b16 %v740, %v739
      %v994 = vpack.c.b16 %v742, %v741
      %v995 = vpack.c.b16 %v744, %v743
      %v996 = vpack.c.b16 %v746, %v745
      %v997 = vpack.c.b16 %v748, %v747
      %v998 = vpack.c.b16 %v750, %v749
      %v999 = vpack.c.b16 %v752, %v751
      %v1000 = vpack.c.b16 %v754, %v753
      %v1001 = vpack.c.b16 %v756, %v755
      %v1002 = vpack.c.b16 %v758, %v757
      %v1003 = vpack.c.b16 %v760, %v759
      %v1004 = vpack.c.b16 %v762, %v761
      %v1005 = vpack.c.b16 %v764, %v763
      %v1006 = vpack.c.b16 %v766, %v765
      %v1007 = vpack.c.b16 %v768, %v767
      %v1008 = vpack.c.b16 %v770, %v769
      %v1009 = vpack.c.b16 %v772, %v771
      %v1010 = vpack.c.b16 %v774, %v773
      %v1011 = vpack.c.b16 %v776, %v775
      %v1012 = vpack.c.b16 %v778, %v777
      %v1013 = vpack.c.b16 %v780, %v779
      %v1014 = vpack.c.b16 %v782, %v781
      %v1015 = vpack.c.b16 %v784, %v783
      %v1016 = vpack.c.b16 %v786, %v785
      %v1017 = vpack.c.b16 %v788, %v787
      %v1018 = vpack.c.b16 %v790, %v789
      %v1019 = vpack.c.b16 %v792, %v791
      %v1020 = vpack.c.b16 %v794, %v793
      %v1021 = vpack.c.b16 %v796, %v795
      %v1022 = vpack.c.b16 %v798, %v797
      %v1023 = vpack.c.b16 %v800, %v799
      %v1024 = vpack.c.b16 %v802, %v801
      %v1025 = vpack.c.b16 %v804, %v803
      %v1026 = vpack.c.b16 %v806, %v805
      %v1027 = vpack.c.b16 %v808, %v807
      %v1028 = vpack.c.b16 %v810, %v809
      %v1029 = vpack.c.b16 %v812, %v811
      %v1030 = vpack.c.b16 %v814, %v813
      %v1031 = vpack.c.b16 %v816, %v815
      %v1032 = vpack.c.b16 %v818, %v817
      %v1033 = vpack.c.b16 %v820, %v819
      %v1034 = vpack.c.b16 %v822, %v821
      %v1035 = vpack.c.b16 %v824, %v823
      %v1036 = vpack.c.b16 %v826, %v825
      %v1037 = vpack.c.b16 %v828, %v827
      %v1038 = vpack.c.b16 %v830, %v829
      %v1039 = vpack.c.b16 %v832, %v831
      %v1040 = vpack.c.b16 %v834, %v833
      %v1041 = vpack.c.b16 %v836, %v835
      %v1042 = vpack.c.b16 %v838, %v837
      %v1043 = vpack.c.b16 %v840, %v839
      %v1044 = vpack.c.b16 %v842, %v841
      %v1045 = vpack.c.b16 %v844, %v843
      %v1046 = vpack.c.b16 %v846, %v845
      %v1047 = vpack.c.b16 %v848, %v847
      %v1048 = vpack.c.b16 %v850, %v849
      %v1049 = vpack.c.b16 %v852, %v851
      %v1050 = vpack.c.b16 %v854, %v853
      %v1051 = vpack.c.b16 %v856, %v855
      %v1052 = vpack.c.b16 %v858, %v857
      %v1053 = vpack.c.b16 %v860, %v859
      %v1054 = vpack.c.b16 %v862, %v861
      %v1055 = vpack.c.b16 %v864, %v863
      %v1056 = vpack.c.b16 %v866, %v865
      %v1057 = vpack.c.b16 %v868, %v867
      %v1058 = vpack.c.b16 %v870, %v869
      %v1059 = vpack.c.b16 %v872, %v871
      %v1060 = vpack.c.b16 %v874, %v873
      %v1061 = vpack.c.b16 %v876, %v875
      %v1062 = vpack.c.b16 %v878, %v877
      %v1063 = vpack.c.b16 %v880, %v879
      %v1064 = vpack.c.b16 %v882, %v881
      %v1065 = vpack.c.b16 %v884, %v883
      %v1066 = vpack.c.b16 %v886, %v885
      %v1067 = vpack.c.b16 %v888, %v887
      %v1068 = vpack.c.b16 %v890, %v889
      %v1069 = vpack.c.b16 %v892, %v891
      %v1070 = vpack.c.b16 %v894, %v893
      %v1071 = vpack.c.b16 %v896, %v895
      %v1072 = vpack.c.b16 %v898, %v897
      %v1073 = vpack.c.b16 %v900, %v899
      %v1074 = vpack.c.b16 %v902, %v901
      %v1075 = vpack.c.b16 %v904, %v903
      %v1076 = vpack.c.b16 %v906, %v905
      %v1077 = vpack.c.b16 %v908, %v907
      %v1078 = vpack.c.b16 %v910, %v909
      %v1079 = vpack.c.b16 %v912, %v911
      %v1080 = vpack.c.b16 %v914, %v913
      %v1081 = vpack.c.b16 %v916, %v915
      %v1082 = vpack.c.b16 %v918, %v917
      %v1083 = vpack.c.b16 %v920, %v919
      %v1084 = vpack.c.b16 %v922, %v921
      %v1085 = vpack.c.b16 %v924, %v923
      %v1086 = vpack.c.b16 %v926, %v925
      %v1087 = vpack.c.b16 %v928, %v927
      %v1088 = vpack.c.b16 %v930, %v929
      %v1089 = vpack.c.b16 %v932, %v931
      %v1090 = vpack.c.b16 %v934, %v933
      %v1091 = vpack.c.b16 %v936, %v935
      %v1092 = vpack.c.b16 %v938, %v937
      %v1093 = vpack.c.b16 %v940, %v939
      %v1094 = vpack.c.b16 %v942, %v941
      %v1095 = vpack.c.b16 %v944, %v943
      %v1096 = vpack.c.b16 %v946, %v945
      %v1097 = vpack.c.b16 %v948, %v947
      %v1098 = vpack.c.b16 %v950, %v949
      %v1099 = vpack.c.b16 %v952, %v951
      %v1100 = vpack.c.b16 %v954, %v953
      %v1101 = vpack.c.b16 %v956, %v955
      %v1102 = vpack.c.b16 %v958, %v957
      %v1103 = vpack.c.b16 %v960, %v959
      %v1104 = vpack.c.b16 %v962, %v961
      %v1105 = vpack.c.b16 %v964, %v963
      %v1106 = vpack.c.b16 %v966, %v965
      %v1107 = vpack.c.b16 %v968, %v967
      %v1108 = vpack.c.b16 %v970, %v969
      %v1109 = vpack.c.b16 %v972, %v971
      %v1110 = vpack.c.b16 %v974, %v973
      %v1111 = vpack.c.b16 %v976, %v975
      %v1112 = vpack.c.b16 %v978, %v977
      %v1113 = vpack.c.b16 %v980, %v979
      %v1114 = vpack.c.b16 %v982, %v981
      %v1115 = vpack.c.b16 %v984, %v983
      %v1116 = vpack.c.b16 %v986, %v985
      %v1117 = vpack.c.b16 %v988, %v987
      %v1118 = vpack.c.b16 %v990, %v989
      %v1121 = vunpack.c.l.s4 1983009808
      %v1122 = vunpack.c.0.s8 %v1121
      %v1123 = vlaneseq
      %v1124 = vshrl.u32 %v1123, 7
      %v1125 = vsub.s32 %v1122, %v1124
      %v1126 = vrot.slane %v466, %v1125
      %v1127 = vcombine.high %v1126, %v1126
      %vm1128 = vcmask 31744
      %v1130 = vsel %vm1128, %v991, 0
      %v1133 = vsel %vm1128, %v992, 0
      %v1136 = vsel %vm1128, %v993, 0
      %v1139 = vsel %vm1128, %v994, 0
      %v1142 = vsel %vm1128, %v995, 0
      %v1145 = vsel %vm1128, %v996, 0
      %v1148 = vsel %vm1128, %v997, 0
      %v1151 = vsel %vm1128, %v998, 0
      %v1154 = vsel %vm1128, %v999, 0
      %v1157 = vsel %vm1128, %v1000, 0
      %v1160 = vsel %vm1128, %v1001, 0
      %v1163 = vsel %vm1128, %v1002, 0
      %v1166 = vsel %vm1128, %v1003, 0
      %v1169 = vsel %vm1128, %v1004, 0
      %v1172 = vsel %vm1128, %v1005, 0
      %v1175 = vsel %vm1128, %v1006, 0
      %v1178 = vsel %vm1128, %v1007, 0
      %v1181 = vsel %vm1128, %v1008, 0
      %v1184 = vsel %vm1128, %v1009, 0
      %v1187 = vsel %vm1128, %v1010, 0
      %v1190 = vsel %vm1128, %v1011, 0
      %v1193 = vsel %vm1128, %v1012, 0
      %v1196 = vsel %vm1128, %v1013, 0
      %v1199 = vsel %vm1128, %v1014, 0
      %v1202 = vsel %vm1128, %v1015, 0
      %v1205 = vsel %vm1128, %v1016, 0
      %v1208 = vsel %vm1128, %v1017, 0
      %v1211 = vsel %vm1128, %v1018, 0
      %v1214 = vsel %vm1128, %v1019, 0
      %v1217 = vsel %vm1128, %v1020, 0
      %v1220 = vsel %vm1128, %v1021, 0
      %v1223 = vsel %vm1128, %v1022, 0
      %v1226 = vsel %vm1128, %v1023, 0
      %v1229 = vsel %vm1128, %v1024, 0
      %v1232 = vsel %vm1128, %v1025, 0
      %v1235 = vsel %vm1128, %v1026, 0
      %v1238 = vsel %vm1128, %v1027, 0
      %v1241 = vsel %vm1128, %v1028, 0
      %v1244 = vsel %vm1128, %v1029, 0
      %v1247 = vsel %vm1128, %v1030, 0
      %v1250 = vsel %vm1128, %v1031, 0
      %v1253 = vsel %vm1128, %v1032, 0
      %v1256 = vsel %vm1128, %v1033, 0
      %v1259 = vsel %vm1128, %v1034, 0
      %v1262 = vsel %vm1128, %v1035, 0
      %v1265 = vsel %vm1128, %v1036, 0
      %v1268 = vsel %vm1128, %v1037, 0
      %v1271 = vsel %vm1128, %v1038, 0
      %v1274 = vsel %vm1128, %v1039, 0
      %v1277 = vsel %vm1128, %v1040, 0
      %v1280 = vsel %vm1128, %v1041, 0
      %v1283 = vsel %vm1128, %v1042, 0
      %v1286 = vsel %vm1128, %v1043, 0
      %v1289 = vsel %vm1128, %v1044, 0
      %v1292 = vsel %vm1128, %v1045, 0
      %v1295 = vsel %vm1128, %v1046, 0
      %v1298 = vsel %vm1128, %v1047, 0
      %v1301 = vsel %vm1128, %v1048, 0
      %v1304 = vsel %vm1128, %v1049, 0
      %v1307 = vsel %vm1128, %v1050, 0
      %v1310 = vsel %vm1128, %v1051, 0
      %v1313 = vsel %vm1128, %v1052, 0
      %v1316 = vsel %vm1128, %v1053, 0
      %v1319 = vsel %vm1128, %v1054, 0
      %v1322 = vsel %vm1128, %v1055, 0
      %v1325 = vsel %vm1128, %v1056, 0
      %v1328 = vsel %vm1128, %v1057, 0
      %v1331 = vsel %vm1128, %v1058, 0
      %v1334 = vsel %vm1128, %v1059, 0
      %v1337 = vsel %vm1128, %v1060, 0
      %v1340 = vsel %vm1128, %v1061, 0
      %v1343 = vsel %vm1128, %v1062, 0
      %v1346 = vsel %vm1128, %v1063, 0
      %v1349 = vsel %vm1128, %v1064, 0
      %v1352 = vsel %vm1128, %v1065, 0
      %v1355 = vsel %vm1128, %v1066, 0
      %v1358 = vsel %vm1128, %v1067, 0
      %v1361 = vsel %vm1128, %v1068, 0
      %v1364 = vsel %vm1128, %v1069, 0
      %v1367 = vsel %vm1128, %v1070, 0
      %v1370 = vsel %vm1128, %v1071, 0
      %v1373 = vsel %vm1128, %v1072, 0
      %v1376 = vsel %vm1128, %v1073, 0
      %v1379 = vsel %vm1128, %v1074, 0
      %v1382 = vsel %vm1128, %v1075, 0
      %v1385 = vsel %vm1128, %v1076, 0
      %v1388 = vsel %vm1128, %v1077, 0
      %v1391 = vsel %vm1128, %v1078, 0
      %v1394 = vsel %vm1128, %v1079, 0
      %v1397 = vsel %vm1128, %v1080, 0
      %v1400 = vsel %vm1128, %v1081, 0
      %v1403 = vsel %vm1128, %v1082, 0
      %v1406 = vsel %vm1128, %v1083, 0
      %v1409 = vsel %vm1128, %v1084, 0
      %v1412 = vsel %vm1128, %v1085, 0
      %v1415 = vsel %vm1128, %v1086, 0
      %v1418 = vsel %vm1128, %v1087, 0
      %v1421 = vsel %vm1128, %v1088, 0
      %v1424 = vsel %vm1128, %v1089, 0
      %v1427 = vsel %vm1128, %v1090, 0
      %v1430 = vsel %vm1128, %v1091, 0
      %v1433 = vsel %vm1128, %v1092, 0
      %v1436 = vsel %vm1128, %v1093, 0
      %v1439 = vsel %vm1128, %v1094, 0
      %v1442 = vsel %vm1128, %v1095, 0
      %v1445 = vsel %vm1128, %v1096, 0
      %v1448 = vsel %vm1128, %v1097, 0
      %v1451 = vsel %vm1128, %v1098, 0
      %v1454 = vsel %vm1128, %v1099, 0
      %v1457 = vsel %vm1128, %v1100, 0
      %v1460 = vsel %vm1128, %v1101, 0
      %v1463 = vsel %vm1128, %v1102, 0
      %v1466 = vsel %vm1128, %v1103, 0
      %v1469 = vsel %vm1128, %v1104, 0
      %v1472 = vsel %vm1128, %v1105, 0
      %v1475 = vsel %vm1128, %v1106, 0
      %v1478 = vsel %vm1128, %v1107, 0
      %v1481 = vsel %vm1128, %v1108, 0
      %v1484 = vsel %vm1128, %v1109, 0
      %v1487 = vsel %vm1128, %v1110, 0
      %v1490 = vsel %vm1128, %v1111, 0
      %v1493 = vsel %vm1128, %v1112, 0
      %v1496 = vsel %vm1128, %v1113, 0
      %v1499 = vsel %vm1128, %v1114, 0
      %v1502 = vsel %vm1128, %v1115, 0
      %v1505 = vsel %vm1128, %v1116, 0
      %v1508 = vsel %vm1128, %v1117, 0
      %v1511 = vsel %vm1128, %v1118, 0
      %vm1513 = vcmask 1041408
      %v1515 = vsel %vm1513, %v1126, 0
      %v1518 = vsel %vm1513, %v1127, 0
      %1520 = vmatprep.subr.bf16.mxu0 %v1518
      %1521 = vmatpush1.bf16.msra.mxu0 %v1515
      %1522 = vmatprep.subr.bf16.mxu0 0
      %1523 = vmatpush1.bf16.msra.mxu0 0
      %1524 = vmatprep.subr.bf16.mxu0 0
      %1525 = vmatpush1.bf16.msra.mxu0 0
      %1526 = vmatprep.subr.bf16.mxu0 0
      %1527 = vmatpush1.bf16.msra.mxu0 0
      %1528 = vmatprep.subr.bf16.mxu0 0
      %1529 = vmatpush1.bf16.msra.mxu0 0
      %1530 = vmatprep.subr.bf16.mxu0 0
      %1531 = vmatpush1.bf16.msra.mxu0 0
      %1532 = vmatprep.subr.bf16.mxu0 0
      %1533 = vmatpush1.bf16.msra.mxu0 0
      %1534 = vmatprep.subr.bf16.mxu0 0
      %1535 = vmatpush1.bf16.msra.mxu0 0
      %1536 = vmatprep.subr.bf16.mxu0 0
      %1537 = vmatpush1.bf16.msra.mxu0 0
      %1538 = vmatprep.subr.bf16.mxu0 0
      %1539 = vmatpush1.bf16.msra.mxu0 0
      %1540 = vmatprep.subr.bf16.mxu0 0
      %1541 = vmatpush1.bf16.msra.mxu0 0
      %1542 = vmatprep.subr.bf16.mxu0 0
      %1543 = vmatpush1.bf16.msra.mxu0 0
      %1544 = vmatprep.subr.bf16.mxu0 0
      %1545 = vmatpush1.bf16.msra.mxu0 0
      %1546 = vmatprep.subr.bf16.mxu0 0
      %1547 = vmatpush1.bf16.msra.mxu0 0
      %1548 = vmatprep.subr.bf16.mxu0 0
      %1549 = vmatpush1.bf16.msra.mxu0 0
      %1550 = vmatprep.subr.bf16.mxu0 0
      %1551 = vmatpush1.bf16.msra.mxu0 0
      %1552 = vmatprep.mubr.bf16.mxu0 0
      %1553 = vmatmul.mubr.bf16.gmra.mrb[0].mxu0 %v1130
      %v1554 = vpop.f32.mrb[0].mxu0
      %v1555 = vadd.f32 %v472, %v1554
      %v1556 = vpop.f32.mrb[0].mxu0
      %v1557 = vadd.f32 %v476, %v1556
      %v1558 = vpop.f32.mrb[0].mxu0
      %v1559 = vadd.f32 %v472, %v1558
      %v1560 = vpop.f32.mrb[0].mxu0
      %v1561 = vadd.f32 %v476, %v1560
      %1562 = vmatprep.mubr.bf16.mxu0 0
      %1563 = vmatmul.mubr.bf16.gmra.mrb[0].mxu0 %v1133
      %v1564 = vpop.f32.mrb[0].mxu0
      %v1565 = vadd.f32 %v472, %v1564
      %v1566 = vpop.f32.mrb[0].mxu0
      %v1567 = vadd.f32 %v476, %v1566
      %v1568 = vpop.f32.mrb[0].mxu0
      %v1569 = vadd.f32 %v472, %v1568
      %v1570 = vpop.f32.mrb[0].mxu0
      %v1571 = vadd.f32 %v476, %v1570
      %1572 = vmatprep.mubr.bf16.mxu0 0
      %1573 = vmatmul.mubr.bf16.gmra.mrb[0].mxu0 %v1136
      %v1574 = vpop.f32.mrb[0].mxu0
      %v1575 = vadd.f32 %v472, %v1574
      %v1576 = vpop.f32.mrb[0].mxu0
      %v1577 = vadd.f32 %v476, %v1576
      %v1578 = vpop.f32.mrb[0].mxu0
      %v1579 = vadd.f32 %v472, %v1578
      %v1580 = vpop.f32.mrb[0].mxu0
      %v1581 = vadd.f32 %v476, %v1580
      %1582 = vmatprep.mubr.bf16.mxu0 0
      %1583 = vmatmul.mubr.bf16.gmra.mrb[0].mxu0 %v1139
      %v1584 = vpop.f32.mrb[0].mxu0
      %v1585 = vadd.f32 %v472, %v1584
      %v1586 = vpop.f32.mrb[0].mxu0
      %v1587 = vadd.f32 %v476, %v1586
      %v1588 = vpop.f32.mrb[0].mxu0
      %v1589 = vadd.f32 %v472, %v1588
      %v1590 = vpop.f32.mrb[0].mxu0
      %v1591 = vadd.f32 %v476, %v1590
      %1592 = vmatprep.mubr.bf16.mxu0 0
      %1593 = vmatmul.mubr.bf16.gmra.mrb[0].mxu0 %v1142
      %v1594 = vpop.f32.mrb[0].mxu0
      %v1595 = vadd.f32 %v472, %v1594
      %v1596 = vpop.f32.mrb[0].mxu0
      %v1597 = vadd.f32 %v476, %v1596
      %v1598 = vpop.f32.mrb[0].mxu0
      %v1599 = vadd.f32 %v472, %v1598
      %v1600 = vpop.f32.mrb[0].mxu0
      %v1601 = vadd.f32 %v476, %v1600
      %1602 = vmatprep.mubr.bf16.mxu0 0
      %1603 = vmatmul.mubr.bf16.gmra.mrb[0].mxu0 %v1145
      %v1604 = vpop.f32.mrb[0].mxu0
      %v1605 = vadd.f32 %v472, %v1604
      %v1606 = vpop.f32.mrb[0].mxu0
      %v1607 = vadd.f32 %v476, %v1606
      %v1608 = vpop.f32.mrb[0].mxu0
      %v1609 = vadd.f32 %v472, %v1608
      %v1610 = vpop.f32.mrb[0].mxu0
      %v1611 = vadd.f32 %v476, %v1610
      %1612 = vmatprep.mubr.bf16.mxu0 0
      %1613 = vmatmul.mubr.bf16.gmra.mrb[0].mxu0 %v1148
      %v1614 = vpop.f32.mrb[0].mxu0
      %v1615 = vadd.f32 %v472, %v1614
      %v1616 = vpop.f32.mrb[0].mxu0
      %v1617 = vadd.f32 %v476, %v1616
      %v1618 = vpop.f32.mrb[0].mxu0
      %v1619 = vadd.f32 %v472, %v1618
      %v1620 = vpop.f32.mrb[0].mxu0
      %v1621 = vadd.f32 %v476, %v1620
      %1622 = vmatprep.mubr.bf16.mxu0 0
      %1623 = vmatmul.mubr.bf16.gmra.mrb[0].mxu0 %v1151
      %v1624 = vpop.f32.mrb[0].mxu0
      %v1625 = vadd.f32 %v472, %v1624
      %v1626 = vpop.f32.mrb[0].mxu0
      %v1627 = vadd.f32 %v476, %v1626
      %v1628 = vpop.f32.mrb[0].mxu0
      %v1629 = vadd.f32 %v472, %v1628
      %v1630 = vpop.f32.mrb[0].mxu0
      %v1631 = vadd.f32 %v476, %v1630
      %1632 = vmatprep.mubr.bf16.mxu0 0
      %1633 = vmatmul.mubr.bf16.gmra.mrb[0].mxu0 %v1154
      %v1634 = vpop.f32.mrb[0].mxu0
      %v1635 = vadd.f32 %v472, %v1634
      %v1636 = vpop.f32.mrb[0].mxu0
      %v1637 = vadd.f32 %v476, %v1636
      %v1638 = vpop.f32.mrb[0].mxu0
      %v1639 = vadd.f32 %v472, %v1638
      %v1640 = vpop.f32.mrb[0].mxu0
      %v1641 = vadd.f32 %v476, %v1640
      %1642 = vmatprep.mubr.bf16.mxu0 0
      %1643 = vmatmul.mubr.bf16.gmra.mrb[0].mxu0 %v1157
      %v1644 = vpop.f32.mrb[0].mxu0
      %v1645 = vadd.f32 %v472, %v1644
      %v1646 = vpop.f32.mrb[0].mxu0
      %v1647 = vadd.f32 %v476, %v1646
      %v1648 = vpop.f32.mrb[0].mxu0
      %v1649 = vadd.f32 %v472, %v1648
      %v1650 = vpop.f32.mrb[0].mxu0
      %v1651 = vadd.f32 %v476, %v1650
      %1652 = vmatprep.mubr.bf16.mxu0 0
      %1653 = vmatmul.mubr.bf16.gmra.mrb[0].mxu0 %v1160
      %v1654 = vpop.f32.mrb[0].mxu0
      %v1655 = vadd.f32 %v472, %v1654
      %v1656 = vpop.f32.mrb[0].mxu0
      %v1657 = vadd.f32 %v476, %v1656
      %v1658 = vpop.f32.mrb[0].mxu0
      %v1659 = vadd.f32 %v472, %v1658
      %v1660 = vpop.f32.mrb[0].mxu0
      %v1661 = vadd.f32 %v476, %v1660
      %1662 = vmatprep.mubr.bf16.mxu0 0
      %1663 = vmatmul.mubr.bf16.gmra.mrb[0].mxu0 %v1163
      %v1664 = vpop.f32.mrb[0].mxu0
      %v1665 = vadd.f32 %v472, %v1664
      %v1666 = vpop.f32.mrb[0].mxu0
      %v1667 = vadd.f32 %v476, %v1666
      %v1668 = vpop.f32.mrb[0].mxu0
      %v1669 = vadd.f32 %v472, %v1668
      %v1670 = vpop.f32.mrb[0].mxu0
      %v1671 = vadd.f32 %v476, %v1670
      %1672 = vmatprep.mubr.bf16.mxu0 0
      %1673 = vmatmul.mubr.bf16.gmra.mrb[0].mxu0 %v1166
      %v1674 = vpop.f32.mrb[0].mxu0
      %v1675 = vadd.f32 %v472, %v1674
      %v1676 = vpop.f32.mrb[0].mxu0
      %v1677 = vadd.f32 %v476, %v1676
      %v1678 = vpop.f32.mrb[0].mxu0
      %v1679 = vadd.f32 %v472, %v1678
      %v1680 = vpop.f32.mrb[0].mxu0
      %v1681 = vadd.f32 %v476, %v1680
      %1682 = vmatprep.mubr.bf16.mxu0 0
      %1683 = vmatmul.mubr.bf16.gmra.mrb[0].mxu0 %v1169
      %v1684 = vpop.f32.mrb[0].mxu0
      %v1685 = vadd.f32 %v472, %v1684
      %v1686 = vpop.f32.mrb[0].mxu0
      %v1687 = vadd.f32 %v476, %v1686
      %v1688 = vpop.f32.mrb[0].mxu0
      %v1689 = vadd.f32 %v472, %v1688
      %v1690 = vpop.f32.mrb[0].mxu0
      %v1691 = vadd.f32 %v476, %v1690
      %1692 = vmatprep.mubr.bf16.mxu0 0
      %1693 = vmatmul.mubr.bf16.gmra.mrb[0].mxu0 %v1172
      %v1694 = vpop.f32.mrb[0].mxu0
      %v1695 = vadd.f32 %v472, %v1694
      %v1696 = vpop.f32.mrb[0].mxu0
      %v1697 = vadd.f32 %v476, %v1696
      %v1698 = vpop.f32.mrb[0].mxu0
      %v1699 = vadd.f32 %v472, %v1698
      %v1700 = vpop.f32.mrb[0].mxu0
      %v1701 = vadd.f32 %v476, %v1700
      %1702 = vmatprep.mubr.bf16.mxu0 0
      %1703 = vmatmul.mubr.bf16.gmra.mrb[0].mxu0 %v1175
      %v1704 = vpop.f32.mrb[0].mxu0
      %v1705 = vadd.f32 %v472, %v1704
      %v1706 = vpop.f32.mrb[0].mxu0
      %v1707 = vadd.f32 %v476, %v1706
      %v1708 = vpop.f32.mrb[0].mxu0
      %v1709 = vadd.f32 %v472, %v1708
      %v1710 = vpop.f32.mrb[0].mxu0
      %v1711 = vadd.f32 %v476, %v1710
      %1712 = vmatprep.mubr.bf16.mxu0 0
      %1713 = vmatmul.mubr.bf16.gmra.mrb[0].mxu0 %v1178
      %v1714 = vpop.f32.mrb[0].mxu0
      %v1715 = vadd.f32 %v472, %v1714
      %v1716 = vpop.f32.mrb[0].mxu0
      %v1717 = vadd.f32 %v476, %v1716
      %v1718 = vpop.f32.mrb[0].mxu0
      %v1719 = vadd.f32 %v472, %v1718
      %v1720 = vpop.f32.mrb[0].mxu0
      %v1721 = vadd.f32 %v476, %v1720
      %1722 = vmatprep.mubr.bf16.mxu0 0
      %1723 = vmatmul.mubr.bf16.gmra.mrb[0].mxu0 %v1181
      %v1724 = vpop.f32.mrb[0].mxu0
      %v1725 = vadd.f32 %v472, %v1724
      %v1726 = vpop.f32.mrb[0].mxu0
      %v1727 = vadd.f32 %v476, %v1726
      %v1728 = vpop.f32.mrb[0].mxu0
      %v1729 = vadd.f32 %v472, %v1728
      %v1730 = vpop.f32.mrb[0].mxu0
      %v1731 = vadd.f32 %v476, %v1730
      %1732 = vmatprep.mubr.bf16.mxu0 0
      %1733 = vmatmul.mubr.bf16.gmra.mrb[0].mxu0 %v1184
      %v1734 = vpop.f32.mrb[0].mxu0
      %v1735 = vadd.f32 %v472, %v1734
      %v1736 = vpop.f32.mrb[0].mxu0
      %v1737 = vadd.f32 %v476, %v1736
      %v1738 = vpop.f32.mrb[0].mxu0
      %v1739 = vadd.f32 %v472, %v1738
      %v1740 = vpop.f32.mrb[0].mxu0
      %v1741 = vadd.f32 %v476, %v1740
      %1742 = vmatprep.mubr.bf16.mxu0 0
      %1743 = vmatmul.mubr.bf16.gmra.mrb[0].mxu0 %v1187
      %v1744 = vpop.f32.mrb[0].mxu0
      %v1745 = vadd.f32 %v472, %v1744
      %v1746 = vpop.f32.mrb[0].mxu0
      %v1747 = vadd.f32 %v476, %v1746
      %v1748 = vpop.f32.mrb[0].mxu0
      %v1749 = vadd.f32 %v472, %v1748
      %v1750 = vpop.f32.mrb[0].mxu0
      %v1751 = vadd.f32 %v476, %v1750
      %1752 = vmatprep.mubr.bf16.mxu0 0
      %1753 = vmatmul.mubr.bf16.gmra.mrb[0].mxu0 %v1190
      %v1754 = vpop.f32.mrb[0].mxu0
      %v1755 = vadd.f32 %v472, %v1754
      %v1756 = vpop.f32.mrb[0].mxu0
      %v1757 = vadd.f32 %v476, %v1756
      %v1758 = vpop.f32.mrb[0].mxu0
      %v1759 = vadd.f32 %v472, %v1758
      %v1760 = vpop.f32.mrb[0].mxu0
      %v1761 = vadd.f32 %v476, %v1760
      %1762 = vmatprep.mubr.bf16.mxu0 0
      %1763 = vmatmul.mubr.bf16.gmra.mrb[0].mxu0 %v1193
      %v1764 = vpop.f32.mrb[0].mxu0
      %v1765 = vadd.f32 %v472, %v1764
      %v1766 = vpop.f32.mrb[0].mxu0
      %v1767 = vadd.f32 %v476, %v1766
      %v1768 = vpop.f32.mrb[0].mxu0
      %v1769 = vadd.f32 %v472, %v1768
      %v1770 = vpop.f32.mrb[0].mxu0
      %v1771 = vadd.f32 %v476, %v1770
      %1772 = vmatprep.mubr.bf16.mxu0 0
      %1773 = vmatmul.mubr.bf16.gmra.mrb[0].mxu0 %v1196
      %v1774 = vpop.f32.mrb[0].mxu0
      %v1775 = vadd.f32 %v472, %v1774
      %v1776 = vpop.f32.mrb[0].mxu0
      %v1777 = vadd.f32 %v476, %v1776
      %v1778 = vpop.f32.mrb[0].mxu0
      %v1779 = vadd.f32 %v472, %v1778
      %v1780 = vpop.f32.mrb[0].mxu0
      %v1781 = vadd.f32 %v476, %v1780
      %1782 = vmatprep.mubr.bf16.mxu0 0
      %1783 = vmatmul.mubr.bf16.gmra.mrb[0].mxu0 %v1199
      %v1784 = vpop.f32.mrb[0].mxu0
      %v1785 = vadd.f32 %v472, %v1784
      %v1786 = vpop.f32.mrb[0].mxu0
      %v1787 = vadd.f32 %v476, %v1786
      %v1788 = vpop.f32.mrb[0].mxu0
      %v1789 = vadd.f32 %v472, %v1788
      %v1790 = vpop.f32.mrb[0].mxu0
      %v1791 = vadd.f32 %v476, %v1790
      %1792 = vmatprep.mubr.bf16.mxu0 0
      %1793 = vmatmul.mubr.bf16.gmra.mrb[0].mxu0 %v1202
      %v1794 = vpop.f32.mrb[0].mxu0
      %v1795 = vadd.f32 %v472, %v1794
      %v1796 = vpop.f32.mrb[0].mxu0
      %v1797 = vadd.f32 %v476, %v1796
      %v1798 = vpop.f32.mrb[0].mxu0
      %v1799 = vadd.f32 %v472, %v1798
      %v1800 = vpop.f32.mrb[0].mxu0
      %v1801 = vadd.f32 %v476, %v1800
      %1802 = vmatprep.mubr.bf16.mxu0 0
      %1803 = vmatmul.mubr.bf16.gmra.mrb[0].mxu0 %v1205
      %v1804 = vpop.f32.mrb[0].mxu0
      %v1805 = vadd.f32 %v472, %v1804
      %v1806 = vpop.f32.mrb[0].mxu0
      %v1807 = vadd.f32 %v476, %v1806
      %v1808 = vpop.f32.mrb[0].mxu0
      %v1809 = vadd.f32 %v472, %v1808
      %v1810 = vpop.f32.mrb[0].mxu0
      %v1811 = vadd.f32 %v476, %v1810
      %1812 = vmatprep.mubr.bf16.mxu0 0
      %1813 = vmatmul.mubr.bf16.gmra.mrb[0].mxu0 %v1208
      %v1814 = vpop.f32.mrb[0].mxu0
      %v1815 = vadd.f32 %v472, %v1814
      %v1816 = vpop.f32.mrb[0].mxu0
      %v1817 = vadd.f32 %v476, %v1816
      %v1818 = vpop.f32.mrb[0].mxu0
      %v1819 = vadd.f32 %v472, %v1818
      %v1820 = vpop.f32.mrb[0].mxu0
      %v1821 = vadd.f32 %v476, %v1820
      %1822 = vmatprep.mubr.bf16.mxu0 0
      %1823 = vmatmul.mubr.bf16.gmra.mrb[0].mxu0 %v1211
      %v1824 = vpop.f32.mrb[0].mxu0
      %v1825 = vadd.f32 %v472, %v1824
      %v1826 = vpop.f32.mrb[0].mxu0
      %v1827 = vadd.f32 %v476, %v1826
      %v1828 = vpop.f32.mrb[0].mxu0
      %v1829 = vadd.f32 %v472, %v1828
      %v1830 = vpop.f32.mrb[0].mxu0
      %v1831 = vadd.f32 %v476, %v1830
      %1832 = vmatprep.mubr.bf16.mxu0 0
      %1833 = vmatmul.mubr.bf16.gmra.mrb[0].mxu0 %v1214
      %v1834 = vpop.f32.mrb[0].mxu0
      %v1835 = vadd.f32 %v472, %v1834
      %v1836 = vpop.f32.mrb[0].mxu0
      %v1837 = vadd.f32 %v476, %v1836
      %v1838 = vpop.f32.mrb[0].mxu0
      %v1839 = vadd.f32 %v472, %v1838
      %v1840 = vpop.f32.mrb[0].mxu0
      %v1841 = vadd.f32 %v476, %v1840
      %1842 = vmatprep.mubr.bf16.mxu0 0
      %1843 = vmatmul.mubr.bf16.gmra.mrb[0].mxu0 %v1217
      %v1844 = vpop.f32.mrb[0].mxu0
      %v1845 = vadd.f32 %v472, %v1844
      %v1846 = vpop.f32.mrb[0].mxu0
      %v1847 = vadd.f32 %v476, %v1846
      %v1848 = vpop.f32.mrb[0].mxu0
      %v1849 = vadd.f32 %v472, %v1848
      %v1850 = vpop.f32.mrb[0].mxu0
      %v1851 = vadd.f32 %v476, %v1850
      %1852 = vmatprep.mubr.bf16.mxu0 0
      %1853 = vmatmul.mubr.bf16.gmra.mrb[0].mxu0 %v1220
      %v1854 = vpop.f32.mrb[0].mxu0
      %v1855 = vadd.f32 %v472, %v1854
      %v1856 = vpop.f32.mrb[0].mxu0
      %v1857 = vadd.f32 %v476, %v1856
      %v1858 = vpop.f32.mrb[0].mxu0
      %v1859 = vadd.f32 %v472, %v1858
      %v1860 = vpop.f32.mrb[0].mxu0
      %v1861 = vadd.f32 %v476, %v1860
      %1862 = vmatprep.mubr.bf16.mxu0 0
      %1863 = vmatmul.mubr.bf16.gmra.mrb[0].mxu0 %v1223
      %v1864 = vpop.f32.mrb[0].mxu0
      %v1865 = vadd.f32 %v472, %v1864
      %v1866 = vpop.f32.mrb[0].mxu0
      %v1867 = vadd.f32 %v476, %v1866
      %v1868 = vpop.f32.mrb[0].mxu0
      %v1869 = vadd.f32 %v472, %v1868
      %v1870 = vpop.f32.mrb[0].mxu0
      %v1871 = vadd.f32 %v476, %v1870
      %1872 = vmatprep.mubr.bf16.mxu0 0
      %1873 = vmatmul.mubr.bf16.gmra.mrb[0].mxu0 %v1226
      %v1874 = vpop.f32.mrb[0].mxu0
      %v1875 = vadd.f32 %v472, %v1874
      %v1876 = vpop.f32.mrb[0].mxu0
      %v1877 = vadd.f32 %v476, %v1876
      %v1878 = vpop.f32.mrb[0].mxu0
      %v1879 = vadd.f32 %v472, %v1878
      %v1880 = vpop.f32.mrb[0].mxu0
      %v1881 = vadd.f32 %v476, %v1880
      %1882 = vmatprep.mubr.bf16.mxu0 0
      %1883 = vmatmul.mubr.bf16.gmra.mrb[0].mxu0 %v1229
      %v1884 = vpop.f32.mrb[0].mxu0
      %v1885 = vadd.f32 %v472, %v1884
      %v1886 = vpop.f32.mrb[0].mxu0
      %v1887 = vadd.f32 %v476, %v1886
      %v1888 = vpop.f32.mrb[0].mxu0
      %v1889 = vadd.f32 %v472, %v1888
      %v1890 = vpop.f32.mrb[0].mxu0
      %v1891 = vadd.f32 %v476, %v1890
      %1892 = vmatprep.mubr.bf16.mxu0 0
      %1893 = vmatmul.mubr.bf16.gmra.mrb[0].mxu0 %v1232
      %v1894 = vpop.f32.mrb[0].mxu0
      %v1895 = vadd.f32 %v472, %v1894
      %v1896 = vpop.f32.mrb[0].mxu0
      %v1897 = vadd.f32 %v476, %v1896
      %v1898 = vpop.f32.mrb[0].mxu0
      %v1899 = vadd.f32 %v472, %v1898
      %v1900 = vpop.f32.mrb[0].mxu0
      %v1901 = vadd.f32 %v476, %v1900
      %1902 = vmatprep.mubr.bf16.mxu0 0
      %1903 = vmatmul.mubr.bf16.gmra.mrb[0].mxu0 %v1235
      %v1904 = vpop.f32.mrb[0].mxu0
      %v1905 = vadd.f32 %v472, %v1904
      %v1906 = vpop.f32.mrb[0].mxu0
      %v1907 = vadd.f32 %v476, %v1906
      %v1908 = vpop.f32.mrb[0].mxu0
      %v1909 = vadd.f32 %v472, %v1908
      %v1910 = vpop.f32.mrb[0].mxu0
      %v1911 = vadd.f32 %v476, %v1910
      %1912 = vmatprep.mubr.bf16.mxu0 0
      %1913 = vmatmul.mubr.bf16.gmra.mrb[0].mxu0 %v1238
      %v1914 = vpop.f32.mrb[0].mxu0
      %v1915 = vadd.f32 %v472, %v1914
      %v1916 = vpop.f32.mrb[0].mxu0
      %v1917 = vadd.f32 %v476, %v1916
      %v1918 = vpop.f32.mrb[0].mxu0
      %v1919 = vadd.f32 %v472, %v1918
      %v1920 = vpop.f32.mrb[0].mxu0
      %v1921 = vadd.f32 %v476, %v1920
      %1922 = vmatprep.mubr.bf16.mxu0 0
      %1923 = vmatmul.mubr.bf16.gmra.mrb[0].mxu0 %v1241
      %v1924 = vpop.f32.mrb[0].mxu0
      %v1925 = vadd.f32 %v472, %v1924
      %v1926 = vpop.f32.mrb[0].mxu0
      %v1927 = vadd.f32 %v476, %v1926
      %v1928 = vpop.f32.mrb[0].mxu0
      %v1929 = vadd.f32 %v472, %v1928
      %v1930 = vpop.f32.mrb[0].mxu0
      %v1931 = vadd.f32 %v476, %v1930
      %1932 = vmatprep.mubr.bf16.mxu0 0
      %1933 = vmatmul.mubr.bf16.gmra.mrb[0].mxu0 %v1244
      %v1934 = vpop.f32.mrb[0].mxu0
      %v1935 = vadd.f32 %v472, %v1934
      %v1936 = vpop.f32.mrb[0].mxu0
      %v1937 = vadd.f32 %v476, %v1936
      %v1938 = vpop.f32.mrb[0].mxu0
      %v1939 = vadd.f32 %v472, %v1938
      %v1940 = vpop.f32.mrb[0].mxu0
      %v1941 = vadd.f32 %v476, %v1940
      %1942 = vmatprep.mubr.bf16.mxu0 0
      %1943 = vmatmul.mubr.bf16.gmra.mrb[0].mxu0 %v1247
      %v1944 = vpop.f32.mrb[0].mxu0
      %v1945 = vadd.f32 %v472, %v1944
      %v1946 = vpop.f32.mrb[0].mxu0
      %v1947 = vadd.f32 %v476, %v1946
      %v1948 = vpop.f32.mrb[0].mxu0
      %v1949 = vadd.f32 %v472, %v1948
      %v1950 = vpop.f32.mrb[0].mxu0
      %v1951 = vadd.f32 %v476, %v1950
      %1952 = vmatprep.mubr.bf16.mxu0 0
      %1953 = vmatmul.mubr.bf16.gmra.mrb[0].mxu0 %v1250
      %v1954 = vpop.f32.mrb[0].mxu0
      %v1955 = vadd.f32 %v472, %v1954
      %v1956 = vpop.f32.mrb[0].mxu0
      %v1957 = vadd.f32 %v476, %v1956
      %v1958 = vpop.f32.mrb[0].mxu0
      %v1959 = vadd.f32 %v472, %v1958
      %v1960 = vpop.f32.mrb[0].mxu0
      %v1961 = vadd.f32 %v476, %v1960
      %1962 = vmatprep.mubr.bf16.mxu0 0
      %1963 = vmatmul.mubr.bf16.gmra.mrb[0].mxu0 %v1253
      %v1964 = vpop.f32.mrb[0].mxu0
      %v1965 = vadd.f32 %v472, %v1964
      %v1966 = vpop.f32.mrb[0].mxu0
      %v1967 = vadd.f32 %v476, %v1966
      %v1968 = vpop.f32.mrb[0].mxu0
      %v1969 = vadd.f32 %v472, %v1968
      %v1970 = vpop.f32.mrb[0].mxu0
      %v1971 = vadd.f32 %v476, %v1970
      %1972 = vmatprep.mubr.bf16.mxu0 0
      %1973 = vmatmul.mubr.bf16.gmra.mrb[0].mxu0 %v1256
      %v1974 = vpop.f32.mrb[0].mxu0
      %v1975 = vadd.f32 %v472, %v1974
      %v1976 = vpop.f32.mrb[0].mxu0
      %v1977 = vadd.f32 %v476, %v1976
      %v1978 = vpop.f32.mrb[0].mxu0
      %v1979 = vadd.f32 %v472, %v1978
      %v1980 = vpop.f32.mrb[0].mxu0
      %v1981 = vadd.f32 %v476, %v1980
      %1982 = vmatprep.mubr.bf16.mxu0 0
      %1983 = vmatmul.mubr.bf16.gmra.mrb[0].mxu0 %v1259
      %v1984 = vpop.f32.mrb[0].mxu0
      %v1985 = vadd.f32 %v472, %v1984
      %v1986 = vpop.f32.mrb[0].mxu0
      %v1987 = vadd.f32 %v476, %v1986
      %v1988 = vpop.f32.mrb[0].mxu0
      %v1989 = vadd.f32 %v472, %v1988
      %v1990 = vpop.f32.mrb[0].mxu0
      %v1991 = vadd.f32 %v476, %v1990
      %1992 = vmatprep.mubr.bf16.mxu0 0
      %1993 = vmatmul.mubr.bf16.gmra.mrb[0].mxu0 %v1262
      %v1994 = vpop.f32.mrb[0].mxu0
      %v1995 = vadd.f32 %v472, %v1994
      %v1996 = vpop.f32.mrb[0].mxu0
      %v1997 = vadd.f32 %v476, %v1996
      %v1998 = vpop.f32.mrb[0].mxu0
      %v1999 = vadd.f32 %v472, %v1998
      %v2000 = vpop.f32.mrb[0].mxu0
      %v2001 = vadd.f32 %v476, %v2000
      %2002 = vmatprep.mubr.bf16.mxu0 0
      %2003 = vmatmul.mubr.bf16.gmra.mrb[0].mxu0 %v1265
      %v2004 = vpop.f32.mrb[0].mxu0
      %v2005 = vadd.f32 %v472, %v2004
      %v2006 = vpop.f32.mrb[0].mxu0
      %v2007 = vadd.f32 %v476, %v2006
      %v2008 = vpop.f32.mrb[0].mxu0
      %v2009 = vadd.f32 %v472, %v2008
      %v2010 = vpop.f32.mrb[0].mxu0
      %v2011 = vadd.f32 %v476, %v2010
      %2012 = vmatprep.mubr.bf16.mxu0 0
      %2013 = vmatmul.mubr.bf16.gmra.mrb[0].mxu0 %v1268
      %v2014 = vpop.f32.mrb[0].mxu0
      %v2015 = vadd.f32 %v472, %v2014
      %v2016 = vpop.f32.mrb[0].mxu0
      %v2017 = vadd.f32 %v476, %v2016
      %v2018 = vpop.f32.mrb[0].mxu0
      %v2019 = vadd.f32 %v472, %v2018
      %v2020 = vpop.f32.mrb[0].mxu0
      %v2021 = vadd.f32 %v476, %v2020
      %2022 = vmatprep.mubr.bf16.mxu0 0
      %2023 = vmatmul.mubr.bf16.gmra.mrb[0].mxu0 %v1271
      %v2024 = vpop.f32.mrb[0].mxu0
      %v2025 = vadd.f32 %v472, %v2024
      %v2026 = vpop.f32.mrb[0].mxu0
      %v2027 = vadd.f32 %v476, %v2026
      %v2028 = vpop.f32.mrb[0].mxu0
      %v2029 = vadd.f32 %v472, %v2028
      %v2030 = vpop.f32.mrb[0].mxu0
      %v2031 = vadd.f32 %v476, %v2030
      %2032 = vmatprep.mubr.bf16.mxu0 0
      %2033 = vmatmul.mubr.bf16.gmra.mrb[0].mxu0 %v1274
      %v2034 = vpop.f32.mrb[0].mxu0
      %v2035 = vadd.f32 %v472, %v2034
      %v2036 = vpop.f32.mrb[0].mxu0
      %v2037 = vadd.f32 %v476, %v2036
      %v2038 = vpop.f32.mrb[0].mxu0
      %v2039 = vadd.f32 %v472, %v2038
      %v2040 = vpop.f32.mrb[0].mxu0
      %v2041 = vadd.f32 %v476, %v2040
      %2042 = vmatprep.mubr.bf16.mxu0 0
      %2043 = vmatmul.mubr.bf16.gmra.mrb[0].mxu0 %v1277
      %v2044 = vpop.f32.mrb[0].mxu0
      %v2045 = vadd.f32 %v472, %v2044
      %v2046 = vpop.f32.mrb[0].mxu0
      %v2047 = vadd.f32 %v476, %v2046
      %v2048 = vpop.f32.mrb[0].mxu0
      %v2049 = vadd.f32 %v472, %v2048
      %v2050 = vpop.f32.mrb[0].mxu0
      %v2051 = vadd.f32 %v476, %v2050
      %2052 = vmatprep.mubr.bf16.mxu0 0
      %2053 = vmatmul.mubr.bf16.gmra.mrb[0].mxu0 %v1280
      %v2054 = vpop.f32.mrb[0].mxu0
      %v2055 = vadd.f32 %v472, %v2054
      %v2056 = vpop.f32.mrb[0].mxu0
      %v2057 = vadd.f32 %v476, %v2056
      %v2058 = vpop.f32.mrb[0].mxu0
      %v2059 = vadd.f32 %v472, %v2058
      %v2060 = vpop.f32.mrb[0].mxu0
      %v2061 = vadd.f32 %v476, %v2060
      %2062 = vmatprep.mubr.bf16.mxu0 0
      %2063 = vmatmul.mubr.bf16.gmra.mrb[0].mxu0 %v1283
      %v2064 = vpop.f32.mrb[0].mxu0
      %v2065 = vadd.f32 %v472, %v2064
      %v2066 = vpop.f32.mrb[0].mxu0
      %v2067 = vadd.f32 %v476, %v2066
      %v2068 = vpop.f32.mrb[0].mxu0
      %v2069 = vadd.f32 %v472, %v2068
      %v2070 = vpop.f32.mrb[0].mxu0
      %v2071 = vadd.f32 %v476, %v2070
      %2072 = vmatprep.mubr.bf16.mxu0 0
      %2073 = vmatmul.mubr.bf16.gmra.mrb[0].mxu0 %v1286
      %v2074 = vpop.f32.mrb[0].mxu0
      %v2075 = vadd.f32 %v472, %v2074
      %v2076 = vpop.f32.mrb[0].mxu0
      %v2077 = vadd.f32 %v476, %v2076
      %v2078 = vpop.f32.mrb[0].mxu0
      %v2079 = vadd.f32 %v472, %v2078
      %v2080 = vpop.f32.mrb[0].mxu0
      %v2081 = vadd.f32 %v476, %v2080
      %2082 = vmatprep.mubr.bf16.mxu0 0
      %2083 = vmatmul.mubr.bf16.gmra.mrb[0].mxu0 %v1289
      %v2084 = vpop.f32.mrb[0].mxu0
      %v2085 = vadd.f32 %v472, %v2084
      %v2086 = vpop.f32.mrb[0].mxu0
      %v2087 = vadd.f32 %v476, %v2086
      %v2088 = vpop.f32.mrb[0].mxu0
      %v2089 = vadd.f32 %v472, %v2088
      %v2090 = vpop.f32.mrb[0].mxu0
      %v2091 = vadd.f32 %v476, %v2090
      %2092 = vmatprep.mubr.bf16.mxu0 0
      %2093 = vmatmul.mubr.bf16.gmra.mrb[0].mxu0 %v1292
      %v2094 = vpop.f32.mrb[0].mxu0
      %v2095 = vadd.f32 %v472, %v2094
      %v2096 = vpop.f32.mrb[0].mxu0
      %v2097 = vadd.f32 %v476, %v2096
      %v2098 = vpop.f32.mrb[0].mxu0
      %v2099 = vadd.f32 %v472, %v2098
      %v2100 = vpop.f32.mrb[0].mxu0
      %v2101 = vadd.f32 %v476, %v2100
      %2102 = vmatprep.mubr.bf16.mxu0 0
      %2103 = vmatmul.mubr.bf16.gmra.mrb[0].mxu0 %v1295
      %v2104 = vpop.f32.mrb[0].mxu0
      %v2105 = vadd.f32 %v472, %v2104
      %v2106 = vpop.f32.mrb[0].mxu0
      %v2107 = vadd.f32 %v476, %v2106
      %v2108 = vpop.f32.mrb[0].mxu0
      %v2109 = vadd.f32 %v472, %v2108
      %v2110 = vpop.f32.mrb[0].mxu0
      %v2111 = vadd.f32 %v476, %v2110
      %2112 = vmatprep.mubr.bf16.mxu0 0
      %2113 = vmatmul.mubr.bf16.gmra.mrb[0].mxu0 %v1298
      %v2114 = vpop.f32.mrb[0].mxu0
      %v2115 = vadd.f32 %v472, %v2114
      %v2116 = vpop.f32.mrb[0].mxu0
      %v2117 = vadd.f32 %v476, %v2116
      %v2118 = vpop.f32.mrb[0].mxu0
      %v2119 = vadd.f32 %v472, %v2118
      %v2120 = vpop.f32.mrb[0].mxu0
      %v2121 = vadd.f32 %v476, %v2120
      %2122 = vmatprep.mubr.bf16.mxu0 0
      %2123 = vmatmul.mubr.bf16.gmra.mrb[0].mxu0 %v1301
      %v2124 = vpop.f32.mrb[0].mxu0
      %v2125 = vadd.f32 %v472, %v2124
      %v2126 = vpop.f32.mrb[0].mxu0
      %v2127 = vadd.f32 %v476, %v2126
      %v2128 = vpop.f32.mrb[0].mxu0
      %v2129 = vadd.f32 %v472, %v2128
      %v2130 = vpop.f32.mrb[0].mxu0
      %v2131 = vadd.f32 %v476, %v2130
      %2132 = vmatprep.mubr.bf16.mxu0 0
      %2133 = vmatmul.mubr.bf16.gmra.mrb[0].mxu0 %v1304
      %v2134 = vpop.f32.mrb[0].mxu0
      %v2135 = vadd.f32 %v472, %v2134
      %v2136 = vpop.f32.mrb[0].mxu0
      %v2137 = vadd.f32 %v476, %v2136
      %v2138 = vpop.f32.mrb[0].mxu0
      %v2139 = vadd.f32 %v472, %v2138
      %v2140 = vpop.f32.mrb[0].mxu0
      %v2141 = vadd.f32 %v476, %v2140
      %2142 = vmatprep.mubr.bf16.mxu0 0
      %2143 = vmatmul.mubr.bf16.gmra.mrb[0].mxu0 %v1307
      %v2144 = vpop.f32.mrb[0].mxu0
      %v2145 = vadd.f32 %v472, %v2144
      %v2146 = vpop.f32.mrb[0].mxu0
      %v2147 = vadd.f32 %v476, %v2146
      %v2148 = vpop.f32.mrb[0].mxu0
      %v2149 = vadd.f32 %v472, %v2148
      %v2150 = vpop.f32.mrb[0].mxu0
      %v2151 = vadd.f32 %v476, %v2150
      %2152 = vmatprep.mubr.bf16.mxu0 0
      %2153 = vmatmul.mubr.bf16.gmra.mrb[0].mxu0 %v1310
      %v2154 = vpop.f32.mrb[0].mxu0
      %v2155 = vadd.f32 %v472, %v2154
      %v2156 = vpop.f32.mrb[0].mxu0
      %v2157 = vadd.f32 %v476, %v2156
      %v2158 = vpop.f32.mrb[0].mxu0
      %v2159 = vadd.f32 %v472, %v2158
      %v2160 = vpop.f32.mrb[0].mxu0
      %v2161 = vadd.f32 %v476, %v2160
      %2162 = vmatprep.mubr.bf16.mxu0 0
      %2163 = vmatmul.mubr.bf16.gmra.mrb[0].mxu0 %v1313
      %v2164 = vpop.f32.mrb[0].mxu0
      %v2165 = vadd.f32 %v472, %v2164
      %v2166 = vpop.f32.mrb[0].mxu0
      %v2167 = vadd.f32 %v476, %v2166
      %v2168 = vpop.f32.mrb[0].mxu0
      %v2169 = vadd.f32 %v472, %v2168
      %v2170 = vpop.f32.mrb[0].mxu0
      %v2171 = vadd.f32 %v476, %v2170
      %2172 = vmatprep.mubr.bf16.mxu0 0
      %2173 = vmatmul.mubr.bf16.gmra.mrb[0].mxu0 %v1316
      %v2174 = vpop.f32.mrb[0].mxu0
      %v2175 = vadd.f32 %v472, %v2174
      %v2176 = vpop.f32.mrb[0].mxu0
      %v2177 = vadd.f32 %v476, %v2176
      %v2178 = vpop.f32.mrb[0].mxu0
      %v2179 = vadd.f32 %v472, %v2178
      %v2180 = vpop.f32.mrb[0].mxu0
      %v2181 = vadd.f32 %v476, %v2180
      %2182 = vmatprep.mubr.bf16.mxu0 0
      %2183 = vmatmul.mubr.bf16.gmra.mrb[0].mxu0 %v1319
      %v2184 = vpop.f32.mrb[0].mxu0
      %v2185 = vadd.f32 %v472, %v2184
      %v2186 = vpop.f32.mrb[0].mxu0
      %v2187 = vadd.f32 %v476, %v2186
      %v2188 = vpop.f32.mrb[0].mxu0
      %v2189 = vadd.f32 %v472, %v2188
      %v2190 = vpop.f32.mrb[0].mxu0
      %v2191 = vadd.f32 %v476, %v2190
      %2192 = vmatprep.mubr.bf16.mxu0 0
      %2193 = vmatmul.mubr.bf16.gmra.mrb[0].mxu0 %v1322
      %v2194 = vpop.f32.mrb[0].mxu0
      %v2195 = vadd.f32 %v472, %v2194
      %v2196 = vpop.f32.mrb[0].mxu0
      %v2197 = vadd.f32 %v476, %v2196
      %v2198 = vpop.f32.mrb[0].mxu0
      %v2199 = vadd.f32 %v472, %v2198
      %v2200 = vpop.f32.mrb[0].mxu0
      %v2201 = vadd.f32 %v476, %v2200
      %2202 = vmatprep.mubr.bf16.mxu0 0
      %2203 = vmatmul.mubr.bf16.gmra.mrb[0].mxu0 %v1325
      %v2204 = vpop.f32.mrb[0].mxu0
      %v2205 = vadd.f32 %v472, %v2204
      %v2206 = vpop.f32.mrb[0].mxu0
      %v2207 = vadd.f32 %v476, %v2206
      %v2208 = vpop.f32.mrb[0].mxu0
      %v2209 = vadd.f32 %v472, %v2208
      %v2210 = vpop.f32.mrb[0].mxu0
      %v2211 = vadd.f32 %v476, %v2210
      %2212 = vmatprep.mubr.bf16.mxu0 0
      %2213 = vmatmul.mubr.bf16.gmra.mrb[0].mxu0 %v1328
      %v2214 = vpop.f32.mrb[0].mxu0
      %v2215 = vadd.f32 %v472, %v2214
      %v2216 = vpop.f32.mrb[0].mxu0
      %v2217 = vadd.f32 %v476, %v2216
      %v2218 = vpop.f32.mrb[0].mxu0
      %v2219 = vadd.f32 %v472, %v2218
      %v2220 = vpop.f32.mrb[0].mxu0
      %v2221 = vadd.f32 %v476, %v2220
      %2222 = vmatprep.mubr.bf16.mxu0 0
      %2223 = vmatmul.mubr.bf16.gmra.mrb[0].mxu0 %v1331
      %v2224 = vpop.f32.mrb[0].mxu0
      %v2225 = vadd.f32 %v472, %v2224
      %v2226 = vpop.f32.mrb[0].mxu0
      %v2227 = vadd.f32 %v476, %v2226
      %v2228 = vpop.f32.mrb[0].mxu0
      %v2229 = vadd.f32 %v472, %v2228
      %v2230 = vpop.f32.mrb[0].mxu0
      %v2231 = vadd.f32 %v476, %v2230
      %2232 = vmatprep.mubr.bf16.mxu0 0
      %2233 = vmatmul.mubr.bf16.gmra.mrb[0].mxu0 %v1334
      %v2234 = vpop.f32.mrb[0].mxu0
      %v2235 = vadd.f32 %v472, %v2234
      %v2236 = vpop.f32.mrb[0].mxu0
      %v2237 = vadd.f32 %v476, %v2236
      %v2238 = vpop.f32.mrb[0].mxu0
      %v2239 = vadd.f32 %v472, %v2238
      %v2240 = vpop.f32.mrb[0].mxu0
      %v2241 = vadd.f32 %v476, %v2240
      %2242 = vmatprep.mubr.bf16.mxu0 0
      %2243 = vmatmul.mubr.bf16.gmra.mrb[0].mxu0 %v1337
      %v2244 = vpop.f32.mrb[0].mxu0
      %v2245 = vadd.f32 %v472, %v2244
      %v2246 = vpop.f32.mrb[0].mxu0
      %v2247 = vadd.f32 %v476, %v2246
      %v2248 = vpop.f32.mrb[0].mxu0
      %v2249 = vadd.f32 %v472, %v2248
      %v2250 = vpop.f32.mrb[0].mxu0
      %v2251 = vadd.f32 %v476, %v2250
      %2252 = vmatprep.mubr.bf16.mxu0 0
      %2253 = vmatmul.mubr.bf16.gmra.mrb[0].mxu0 %v1340
      %v2254 = vpop.f32.mrb[0].mxu0
      %v2255 = vadd.f32 %v472, %v2254
      %v2256 = vpop.f32.mrb[0].mxu0
      %v2257 = vadd.f32 %v476, %v2256
      %v2258 = vpop.f32.mrb[0].mxu0
      %v2259 = vadd.f32 %v472, %v2258
      %v2260 = vpop.f32.mrb[0].mxu0
      %v2261 = vadd.f32 %v476, %v2260
      %2262 = vmatprep.mubr.bf16.mxu0 0
      %2263 = vmatmul.mubr.bf16.gmra.mrb[0].mxu0 %v1343
      %v2264 = vpop.f32.mrb[0].mxu0
      %v2265 = vadd.f32 %v472, %v2264
      %v2266 = vpop.f32.mrb[0].mxu0
      %v2267 = vadd.f32 %v476, %v2266
      %v2268 = vpop.f32.mrb[0].mxu0
      %v2269 = vadd.f32 %v472, %v2268
      %v2270 = vpop.f32.mrb[0].mxu0
      %v2271 = vadd.f32 %v476, %v2270
      %2272 = vmatprep.mubr.bf16.mxu0 0
      %2273 = vmatmul.mubr.bf16.gmra.mrb[0].mxu0 %v1346
      %v2274 = vpop.f32.mrb[0].mxu0
      %v2275 = vadd.f32 %v472, %v2274
      %v2276 = vpop.f32.mrb[0].mxu0
      %v2277 = vadd.f32 %v476, %v2276
      %v2278 = vpop.f32.mrb[0].mxu0
      %v2279 = vadd.f32 %v472, %v2278
      %v2280 = vpop.f32.mrb[0].mxu0
      %v2281 = vadd.f32 %v476, %v2280
      %2282 = vmatprep.mubr.bf16.mxu0 0
      %2283 = vmatmul.mubr.bf16.gmra.mrb[0].mxu0 %v1349
      %v2284 = vpop.f32.mrb[0].mxu0
      %v2285 = vadd.f32 %v472, %v2284
      %v2286 = vpop.f32.mrb[0].mxu0
      %v2287 = vadd.f32 %v476, %v2286
      %v2288 = vpop.f32.mrb[0].mxu0
      %v2289 = vadd.f32 %v472, %v2288
      %v2290 = vpop.f32.mrb[0].mxu0
      %v2291 = vadd.f32 %v476, %v2290
      %2292 = vmatprep.mubr.bf16.mxu0 0
      %2293 = vmatmul.mubr.bf16.gmra.mrb[0].mxu0 %v1352
      %v2294 = vpop.f32.mrb[0].mxu0
      %v2295 = vadd.f32 %v472, %v2294
      %v2296 = vpop.f32.mrb[0].mxu0
      %v2297 = vadd.f32 %v476, %v2296
      %v2298 = vpop.f32.mrb[0].mxu0
      %v2299 = vadd.f32 %v472, %v2298
      %v2300 = vpop.f32.mrb[0].mxu0
      %v2301 = vadd.f32 %v476, %v2300
      %2302 = vmatprep.mubr.bf16.mxu0 0
      %2303 = vmatmul.mubr.bf16.gmra.mrb[0].mxu0 %v1355
      %v2304 = vpop.f32.mrb[0].mxu0
      %v2305 = vadd.f32 %v472, %v2304
      %v2306 = vpop.f32.mrb[0].mxu0
      %v2307 = vadd.f32 %v476, %v2306
      %v2308 = vpop.f32.mrb[0].mxu0
      %v2309 = vadd.f32 %v472, %v2308
      %v2310 = vpop.f32.mrb[0].mxu0
      %v2311 = vadd.f32 %v476, %v2310
      %2312 = vmatprep.mubr.bf16.mxu0 0
      %2313 = vmatmul.mubr.bf16.gmra.mrb[0].mxu0 %v1358
      %v2314 = vpop.f32.mrb[0].mxu0
      %v2315 = vadd.f32 %v472, %v2314
      %v2316 = vpop.f32.mrb[0].mxu0
      %v2317 = vadd.f32 %v476, %v2316
      %v2318 = vpop.f32.mrb[0].mxu0
      %v2319 = vadd.f32 %v472, %v2318
      %v2320 = vpop.f32.mrb[0].mxu0
      %v2321 = vadd.f32 %v476, %v2320
      %2322 = vmatprep.mubr.bf16.mxu0 0
      %2323 = vmatmul.mubr.bf16.gmra.mrb[0].mxu0 %v1361
      %v2324 = vpop.f32.mrb[0].mxu0
      %v2325 = vadd.f32 %v472, %v2324
      %v2326 = vpop.f32.mrb[0].mxu0
      %v2327 = vadd.f32 %v476, %v2326
      %v2328 = vpop.f32.mrb[0].mxu0
      %v2329 = vadd.f32 %v472, %v2328
      %v2330 = vpop.f32.mrb[0].mxu0
      %v2331 = vadd.f32 %v476, %v2330
      %2332 = vmatprep.mubr.bf16.mxu0 0
      %2333 = vmatmul.mubr.bf16.gmra.mrb[0].mxu0 %v1364
      %v2334 = vpop.f32.mrb[0].mxu0
      %v2335 = vadd.f32 %v472, %v2334
      %v2336 = vpop.f32.mrb[0].mxu0
      %v2337 = vadd.f32 %v476, %v2336
      %v2338 = vpop.f32.mrb[0].mxu0
      %v2339 = vadd.f32 %v472, %v2338
      %v2340 = vpop.f32.mrb[0].mxu0
      %v2341 = vadd.f32 %v476, %v2340
      %2342 = vmatprep.mubr.bf16.mxu0 0
      %2343 = vmatmul.mubr.bf16.gmra.mrb[0].mxu0 %v1367
      %v2344 = vpop.f32.mrb[0].mxu0
      %v2345 = vadd.f32 %v472, %v2344
      %v2346 = vpop.f32.mrb[0].mxu0
      %v2347 = vadd.f32 %v476, %v2346
      %v2348 = vpop.f32.mrb[0].mxu0
      %v2349 = vadd.f32 %v472, %v2348
      %v2350 = vpop.f32.mrb[0].mxu0
      %v2351 = vadd.f32 %v476, %v2350
      %2352 = vmatprep.mubr.bf16.mxu0 0
      %2353 = vmatmul.mubr.bf16.gmra.mrb[0].mxu0 %v1370
      %v2354 = vpop.f32.mrb[0].mxu0
      %v2355 = vadd.f32 %v472, %v2354
      %v2356 = vpop.f32.mrb[0].mxu0
      %v2357 = vadd.f32 %v476, %v2356
      %v2358 = vpop.f32.mrb[0].mxu0
      %v2359 = vadd.f32 %v472, %v2358
      %v2360 = vpop.f32.mrb[0].mxu0
      %v2361 = vadd.f32 %v476, %v2360
      %2362 = vmatprep.mubr.bf16.mxu0 0
      %2363 = vmatmul.mubr.bf16.gmra.mrb[0].mxu0 %v1373
      %v2364 = vpop.f32.mrb[0].mxu0
      %v2365 = vadd.f32 %v472, %v2364
      %v2366 = vpop.f32.mrb[0].mxu0
      %v2367 = vadd.f32 %v476, %v2366
      %v2368 = vpop.f32.mrb[0].mxu0
      %v2369 = vadd.f32 %v472, %v2368
      %v2370 = vpop.f32.mrb[0].mxu0
      %v2371 = vadd.f32 %v476, %v2370
      %2372 = vmatprep.mubr.bf16.mxu0 0
      %2373 = vmatmul.mubr.bf16.gmra.mrb[0].mxu0 %v1376
      %v2374 = vpop.f32.mrb[0].mxu0
      %v2375 = vadd.f32 %v472, %v2374
      %v2376 = vpop.f32.mrb[0].mxu0
      %v2377 = vadd.f32 %v476, %v2376
      %v2378 = vpop.f32.mrb[0].mxu0
      %v2379 = vadd.f32 %v472, %v2378
      %v2380 = vpop.f32.mrb[0].mxu0
      %v2381 = vadd.f32 %v476, %v2380
      %2382 = vmatprep.mubr.bf16.mxu0 0
      %2383 = vmatmul.mubr.bf16.gmra.mrb[0].mxu0 %v1379
      %v2384 = vpop.f32.mrb[0].mxu0
      %v2385 = vadd.f32 %v472, %v2384
      %v2386 = vpop.f32.mrb[0].mxu0
      %v2387 = vadd.f32 %v476, %v2386
      %v2388 = vpop.f32.mrb[0].mxu0
      %v2389 = vadd.f32 %v472, %v2388
      %v2390 = vpop.f32.mrb[0].mxu0
      %v2391 = vadd.f32 %v476, %v2390
      %2392 = vmatprep.mubr.bf16.mxu0 0
      %2393 = vmatmul.mubr.bf16.gmra.mrb[0].mxu0 %v1382
      %v2394 = vpop.f32.mrb[0].mxu0
      %v2395 = vadd.f32 %v472, %v2394
      %v2396 = vpop.f32.mrb[0].mxu0
      %v2397 = vadd.f32 %v476, %v2396
      %v2398 = vpop.f32.mrb[0].mxu0
      %v2399 = vadd.f32 %v472, %v2398
      %v2400 = vpop.f32.mrb[0].mxu0
      %v2401 = vadd.f32 %v476, %v2400
      %2402 = vmatprep.mubr.bf16.mxu0 0
      %2403 = vmatmul.mubr.bf16.gmra.mrb[0].mxu0 %v1385
      %v2404 = vpop.f32.mrb[0].mxu0
      %v2405 = vadd.f32 %v472, %v2404
      %v2406 = vpop.f32.mrb[0].mxu0
      %v2407 = vadd.f32 %v476, %v2406
      %v2408 = vpop.f32.mrb[0].mxu0
      %v2409 = vadd.f32 %v472, %v2408
      %v2410 = vpop.f32.mrb[0].mxu0
      %v2411 = vadd.f32 %v476, %v2410
      %2412 = vmatprep.mubr.bf16.mxu0 0
      %2413 = vmatmul.mubr.bf16.gmra.mrb[0].mxu0 %v1388
      %v2414 = vpop.f32.mrb[0].mxu0
      %v2415 = vadd.f32 %v472, %v2414
      %v2416 = vpop.f32.mrb[0].mxu0
      %v2417 = vadd.f32 %v476, %v2416
      %v2418 = vpop.f32.mrb[0].mxu0
      %v2419 = vadd.f32 %v472, %v2418
      %v2420 = vpop.f32.mrb[0].mxu0
      %v2421 = vadd.f32 %v476, %v2420
      %2422 = vmatprep.mubr.bf16.mxu0 0
      %2423 = vmatmul.mubr.bf16.gmra.mrb[0].mxu0 %v1391
      %v2424 = vpop.f32.mrb[0].mxu0
      %v2425 = vadd.f32 %v472, %v2424
      %v2426 = vpop.f32.mrb[0].mxu0
      %v2427 = vadd.f32 %v476, %v2426
      %v2428 = vpop.f32.mrb[0].mxu0
      %v2429 = vadd.f32 %v472, %v2428
      %v2430 = vpop.f32.mrb[0].mxu0
      %v2431 = vadd.f32 %v476, %v2430
      %2432 = vmatprep.mubr.bf16.mxu0 0
      %2433 = vmatmul.mubr.bf16.gmra.mrb[0].mxu0 %v1394
      %v2434 = vpop.f32.mrb[0].mxu0
      %v2435 = vadd.f32 %v472, %v2434
      %v2436 = vpop.f32.mrb[0].mxu0
      %v2437 = vadd.f32 %v476, %v2436
      %v2438 = vpop.f32.mrb[0].mxu0
      %v2439 = vadd.f32 %v472, %v2438
      %v2440 = vpop.f32.mrb[0].mxu0
      %v2441 = vadd.f32 %v476, %v2440
      %2442 = vmatprep.mubr.bf16.mxu0 0
      %2443 = vmatmul.mubr.bf16.gmra.mrb[0].mxu0 %v1397
      %v2444 = vpop.f32.mrb[0].mxu0
      %v2445 = vadd.f32 %v472, %v2444
      %v2446 = vpop.f32.mrb[0].mxu0
      %v2447 = vadd.f32 %v476, %v2446
      %v2448 = vpop.f32.mrb[0].mxu0
      %v2449 = vadd.f32 %v472, %v2448
      %v2450 = vpop.f32.mrb[0].mxu0
      %v2451 = vadd.f32 %v476, %v2450
      %2452 = vmatprep.mubr.bf16.mxu0 0
      %2453 = vmatmul.mubr.bf16.gmra.mrb[0].mxu0 %v1400
      %v2454 = vpop.f32.mrb[0].mxu0
      %v2455 = vadd.f32 %v472, %v2454
      %v2456 = vpop.f32.mrb[0].mxu0
      %v2457 = vadd.f32 %v476, %v2456
      %v2458 = vpop.f32.mrb[0].mxu0
      %v2459 = vadd.f32 %v472, %v2458
      %v2460 = vpop.f32.mrb[0].mxu0
      %v2461 = vadd.f32 %v476, %v2460
      %2462 = vmatprep.mubr.bf16.mxu0 0
      %2463 = vmatmul.mubr.bf16.gmra.mrb[0].mxu0 %v1403
      %v2464 = vpop.f32.mrb[0].mxu0
      %v2465 = vadd.f32 %v472, %v2464
      %v2466 = vpop.f32.mrb[0].mxu0
      %v2467 = vadd.f32 %v476, %v2466
      %v2468 = vpop.f32.mrb[0].mxu0
      %v2469 = vadd.f32 %v472, %v2468
      %v2470 = vpop.f32.mrb[0].mxu0
      %v2471 = vadd.f32 %v476, %v2470
      %2472 = vmatprep.mubr.bf16.mxu0 0
      %2473 = vmatmul.mubr.bf16.gmra.mrb[0].mxu0 %v1406
      %v2474 = vpop.f32.mrb[0].mxu0
      %v2475 = vadd.f32 %v472, %v2474
      %v2476 = vpop.f32.mrb[0].mxu0
      %v2477 = vadd.f32 %v476, %v2476
      %v2478 = vpop.f32.mrb[0].mxu0
      %v2479 = vadd.f32 %v472, %v2478
      %v2480 = vpop.f32.mrb[0].mxu0
      %v2481 = vadd.f32 %v476, %v2480
      %2482 = vmatprep.mubr.bf16.mxu0 0
      %2483 = vmatmul.mubr.bf16.gmra.mrb[0].mxu0 %v1409
      %v2484 = vpop.f32.mrb[0].mxu0
      %v2485 = vadd.f32 %v472, %v2484
      %v2486 = vpop.f32.mrb[0].mxu0
      %v2487 = vadd.f32 %v476, %v2486
      %v2488 = vpop.f32.mrb[0].mxu0
      %v2489 = vadd.f32 %v472, %v2488
      %v2490 = vpop.f32.mrb[0].mxu0
      %v2491 = vadd.f32 %v476, %v2490
      %2492 = vmatprep.mubr.bf16.mxu0 0
      %2493 = vmatmul.mubr.bf16.gmra.mrb[0].mxu0 %v1412
      %v2494 = vpop.f32.mrb[0].mxu0
      %v2495 = vadd.f32 %v472, %v2494
      %v2496 = vpop.f32.mrb[0].mxu0
      %v2497 = vadd.f32 %v476, %v2496
      %v2498 = vpop.f32.mrb[0].mxu0
      %v2499 = vadd.f32 %v472, %v2498
      %v2500 = vpop.f32.mrb[0].mxu0
      %v2501 = vadd.f32 %v476, %v2500
      %2502 = vmatprep.mubr.bf16.mxu0 0
      %2503 = vmatmul.mubr.bf16.gmra.mrb[0].mxu0 %v1415
      %v2504 = vpop.f32.mrb[0].mxu0
      %v2505 = vadd.f32 %v472, %v2504
      %v2506 = vpop.f32.mrb[0].mxu0
      %v2507 = vadd.f32 %v476, %v2506
      %v2508 = vpop.f32.mrb[0].mxu0
      %v2509 = vadd.f32 %v472, %v2508
      %v2510 = vpop.f32.mrb[0].mxu0
      %v2511 = vadd.f32 %v476, %v2510
      %2512 = vmatprep.mubr.bf16.mxu0 0
      %2513 = vmatmul.mubr.bf16.gmra.mrb[0].mxu0 %v1418
      %v2514 = vpop.f32.mrb[0].mxu0
      %v2515 = vadd.f32 %v472, %v2514
      %v2516 = vpop.f32.mrb[0].mxu0
      %v2517 = vadd.f32 %v476, %v2516
      %v2518 = vpop.f32.mrb[0].mxu0
      %v2519 = vadd.f32 %v472, %v2518
      %v2520 = vpop.f32.mrb[0].mxu0
      %v2521 = vadd.f32 %v476, %v2520
      %2522 = vmatprep.mubr.bf16.mxu0 0
      %2523 = vmatmul.mubr.bf16.gmra.mrb[0].mxu0 %v1421
      %v2524 = vpop.f32.mrb[0].mxu0
      %v2525 = vadd.f32 %v472, %v2524
      %v2526 = vpop.f32.mrb[0].mxu0
      %v2527 = vadd.f32 %v476, %v2526
      %v2528 = vpop.f32.mrb[0].mxu0
      %v2529 = vadd.f32 %v472, %v2528
      %v2530 = vpop.f32.mrb[0].mxu0
      %v2531 = vadd.f32 %v476, %v2530
      %2532 = vmatprep.mubr.bf16.mxu0 0
      %2533 = vmatmul.mubr.bf16.gmra.mrb[0].mxu0 %v1424
      %v2534 = vpop.f32.mrb[0].mxu0
      %v2535 = vadd.f32 %v472, %v2534
      %v2536 = vpop.f32.mrb[0].mxu0
      %v2537 = vadd.f32 %v476, %v2536
      %v2538 = vpop.f32.mrb[0].mxu0
      %v2539 = vadd.f32 %v472, %v2538
      %v2540 = vpop.f32.mrb[0].mxu0
      %v2541 = vadd.f32 %v476, %v2540
      %2542 = vmatprep.mubr.bf16.mxu0 0
      %2543 = vmatmul.mubr.bf16.gmra.mrb[0].mxu0 %v1427
      %v2544 = vpop.f32.mrb[0].mxu0
      %v2545 = vadd.f32 %v472, %v2544
      %v2546 = vpop.f32.mrb[0].mxu0
      %v2547 = vadd.f32 %v476, %v2546
      %v2548 = vpop.f32.mrb[0].mxu0
      %v2549 = vadd.f32 %v472, %v2548
      %v2550 = vpop.f32.mrb[0].mxu0
      %v2551 = vadd.f32 %v476, %v2550
      %2552 = vmatprep.mubr.bf16.mxu0 0
      %2553 = vmatmul.mubr.bf16.gmra.mrb[0].mxu0 %v1430
      %v2554 = vpop.f32.mrb[0].mxu0
      %v2555 = vadd.f32 %v472, %v2554
      %v2556 = vpop.f32.mrb[0].mxu0
      %v2557 = vadd.f32 %v476, %v2556
      %v2558 = vpop.f32.mrb[0].mxu0
      %v2559 = vadd.f32 %v472, %v2558
      %v2560 = vpop.f32.mrb[0].mxu0
      %v2561 = vadd.f32 %v476, %v2560
      %2562 = vmatprep.mubr.bf16.mxu0 0
      %2563 = vmatmul.mubr.bf16.gmra.mrb[0].mxu0 %v1433
      %v2564 = vpop.f32.mrb[0].mxu0
      %v2565 = vadd.f32 %v472, %v2564
      %v2566 = vpop.f32.mrb[0].mxu0
      %v2567 = vadd.f32 %v476, %v2566
      %v2568 = vpop.f32.mrb[0].mxu0
      %v2569 = vadd.f32 %v472, %v2568
      %v2570 = vpop.f32.mrb[0].mxu0
      %v2571 = vadd.f32 %v476, %v2570
      %2572 = vmatprep.mubr.bf16.mxu0 0
      %2573 = vmatmul.mubr.bf16.gmra.mrb[0].mxu0 %v1436
      %v2574 = vpop.f32.mrb[0].mxu0
      %v2575 = vadd.f32 %v472, %v2574
      %v2576 = vpop.f32.mrb[0].mxu0
      %v2577 = vadd.f32 %v476, %v2576
      %v2578 = vpop.f32.mrb[0].mxu0
      %v2579 = vadd.f32 %v472, %v2578
      %v2580 = vpop.f32.mrb[0].mxu0
      %v2581 = vadd.f32 %v476, %v2580
      %2582 = vmatprep.mubr.bf16.mxu0 0
      %2583 = vmatmul.mubr.bf16.gmra.mrb[0].mxu0 %v1439
      %v2584 = vpop.f32.mrb[0].mxu0
      %v2585 = vadd.f32 %v472, %v2584
      %v2586 = vpop.f32.mrb[0].mxu0
      %v2587 = vadd.f32 %v476, %v2586
      %v2588 = vpop.f32.mrb[0].mxu0
      %v2589 = vadd.f32 %v472, %v2588
      %v2590 = vpop.f32.mrb[0].mxu0
      %v2591 = vadd.f32 %v476, %v2590
      %2592 = vmatprep.mubr.bf16.mxu0 0
      %2593 = vmatmul.mubr.bf16.gmra.mrb[0].mxu0 %v1442
      %v2594 = vpop.f32.mrb[0].mxu0
      %v2595 = vadd.f32 %v472, %v2594
      %v2596 = vpop.f32.mrb[0].mxu0
      %v2597 = vadd.f32 %v476, %v2596
      %v2598 = vpop.f32.mrb[0].mxu0
      %v2599 = vadd.f32 %v472, %v2598
      %v2600 = vpop.f32.mrb[0].mxu0
      %v2601 = vadd.f32 %v476, %v2600
      %2602 = vmatprep.mubr.bf16.mxu0 0
      %2603 = vmatmul.mubr.bf16.gmra.mrb[0].mxu0 %v1445
      %v2604 = vpop.f32.mrb[0].mxu0
      %v2605 = vadd.f32 %v472, %v2604
      %v2606 = vpop.f32.mrb[0].mxu0
      %v2607 = vadd.f32 %v476, %v2606
      %v2608 = vpop.f32.mrb[0].mxu0
      %v2609 = vadd.f32 %v472, %v2608
      %v2610 = vpop.f32.mrb[0].mxu0
      %v2611 = vadd.f32 %v476, %v2610
      %2612 = vmatprep.mubr.bf16.mxu0 0
      %2613 = vmatmul.mubr.bf16.gmra.mrb[0].mxu0 %v1448
      %v2614 = vpop.f32.mrb[0].mxu0
      %v2615 = vadd.f32 %v472, %v2614
      %v2616 = vpop.f32.mrb[0].mxu0
      %v2617 = vadd.f32 %v476, %v2616
      %v2618 = vpop.f32.mrb[0].mxu0
      %v2619 = vadd.f32 %v472, %v2618
      %v2620 = vpop.f32.mrb[0].mxu0
      %v2621 = vadd.f32 %v476, %v2620
      %2622 = vmatprep.mubr.bf16.mxu0 0
      %2623 = vmatmul.mubr.bf16.gmra.mrb[0].mxu0 %v1451
      %v2624 = vpop.f32.mrb[0].mxu0
      %v2625 = vadd.f32 %v472, %v2624
      %v2626 = vpop.f32.mrb[0].mxu0
      %v2627 = vadd.f32 %v476, %v2626
      %v2628 = vpop.f32.mrb[0].mxu0
      %v2629 = vadd.f32 %v472, %v2628
      %v2630 = vpop.f32.mrb[0].mxu0
      %v2631 = vadd.f32 %v476, %v2630
      %2632 = vmatprep.mubr.bf16.mxu0 0
      %2633 = vmatmul.mubr.bf16.gmra.mrb[0].mxu0 %v1454
      %v2634 = vpop.f32.mrb[0].mxu0
      %v2635 = vadd.f32 %v472, %v2634
      %v2636 = vpop.f32.mrb[0].mxu0
      %v2637 = vadd.f32 %v476, %v2636
      %v2638 = vpop.f32.mrb[0].mxu0
      %v2639 = vadd.f32 %v472, %v2638
      %v2640 = vpop.f32.mrb[0].mxu0
      %v2641 = vadd.f32 %v476, %v2640
      %2642 = vmatprep.mubr.bf16.mxu0 0
      %2643 = vmatmul.mubr.bf16.gmra.mrb[0].mxu0 %v1457
      %v2644 = vpop.f32.mrb[0].mxu0
      %v2645 = vadd.f32 %v472, %v2644
      %v2646 = vpop.f32.mrb[0].mxu0
      %v2647 = vadd.f32 %v476, %v2646
      %v2648 = vpop.f32.mrb[0].mxu0
      %v2649 = vadd.f32 %v472, %v2648
      %v2650 = vpop.f32.mrb[0].mxu0
      %v2651 = vadd.f32 %v476, %v2650
      %2652 = vmatprep.mubr.bf16.mxu0 0
      %2653 = vmatmul.mubr.bf16.gmra.mrb[0].mxu0 %v1460
      %v2654 = vpop.f32.mrb[0].mxu0
      %v2655 = vadd.f32 %v472, %v2654
      %v2656 = vpop.f32.mrb[0].mxu0
      %v2657 = vadd.f32 %v476, %v2656
      %v2658 = vpop.f32.mrb[0].mxu0
      %v2659 = vadd.f32 %v472, %v2658
      %v2660 = vpop.f32.mrb[0].mxu0
      %v2661 = vadd.f32 %v476, %v2660
      %2662 = vmatprep.mubr.bf16.mxu0 0
      %2663 = vmatmul.mubr.bf16.gmra.mrb[0].mxu0 %v1463
      %v2664 = vpop.f32.mrb[0].mxu0
      %v2665 = vadd.f32 %v472, %v2664
      %v2666 = vpop.f32.mrb[0].mxu0
      %v2667 = vadd.f32 %v476, %v2666
      %v2668 = vpop.f32.mrb[0].mxu0
      %v2669 = vadd.f32 %v472, %v2668
      %v2670 = vpop.f32.mrb[0].mxu0
      %v2671 = vadd.f32 %v476, %v2670
      %2672 = vmatprep.mubr.bf16.mxu0 0
      %2673 = vmatmul.mubr.bf16.gmra.mrb[0].mxu0 %v1466
      %v2674 = vpop.f32.mrb[0].mxu0
      %v2675 = vadd.f32 %v472, %v2674
      %v2676 = vpop.f32.mrb[0].mxu0
      %v2677 = vadd.f32 %v476, %v2676
      %v2678 = vpop.f32.mrb[0].mxu0
      %v2679 = vadd.f32 %v472, %v2678
      %v2680 = vpop.f32.mrb[0].mxu0
      %v2681 = vadd.f32 %v476, %v2680
      %2682 = vmatprep.mubr.bf16.mxu0 0
      %2683 = vmatmul.mubr.bf16.gmra.mrb[0].mxu0 %v1469
      %v2684 = vpop.f32.mrb[0].mxu0
      %v2685 = vadd.f32 %v472, %v2684
      %v2686 = vpop.f32.mrb[0].mxu0
      %v2687 = vadd.f32 %v476, %v2686
      %v2688 = vpop.f32.mrb[0].mxu0
      %v2689 = vadd.f32 %v472, %v2688
      %v2690 = vpop.f32.mrb[0].mxu0
      %v2691 = vadd.f32 %v476, %v2690
      %2692 = vmatprep.mubr.bf16.mxu0 0
      %2693 = vmatmul.mubr.bf16.gmra.mrb[0].mxu0 %v1472
      %v2694 = vpop.f32.mrb[0].mxu0
      %v2695 = vadd.f32 %v472, %v2694
      %v2696 = vpop.f32.mrb[0].mxu0
      %v2697 = vadd.f32 %v476, %v2696
      %v2698 = vpop.f32.mrb[0].mxu0
      %v2699 = vadd.f32 %v472, %v2698
      %v2700 = vpop.f32.mrb[0].mxu0
      %v2701 = vadd.f32 %v476, %v2700
      %2702 = vmatprep.mubr.bf16.mxu0 0
      %2703 = vmatmul.mubr.bf16.gmra.mrb[0].mxu0 %v1475
      %v2704 = vpop.f32.mrb[0].mxu0
      %v2705 = vadd.f32 %v472, %v2704
      %v2706 = vpop.f32.mrb[0].mxu0
      %v2707 = vadd.f32 %v476, %v2706
      %v2708 = vpop.f32.mrb[0].mxu0
      %v2709 = vadd.f32 %v472, %v2708
      %v2710 = vpop.f32.mrb[0].mxu0
      %v2711 = vadd.f32 %v476, %v2710
      %2712 = vmatprep.mubr.bf16.mxu0 0
      %2713 = vmatmul.mubr.bf16.gmra.mrb[0].mxu0 %v1478
      %v2714 = vpop.f32.mrb[0].mxu0
      %v2715 = vadd.f32 %v472, %v2714
      %v2716 = vpop.f32.mrb[0].mxu0
      %v2717 = vadd.f32 %v476, %v2716
      %v2718 = vpop.f32.mrb[0].mxu0
      %v2719 = vadd.f32 %v472, %v2718
      %v2720 = vpop.f32.mrb[0].mxu0
      %v2721 = vadd.f32 %v476, %v2720
      %2722 = vmatprep.mubr.bf16.mxu0 0
      %2723 = vmatmul.mubr.bf16.gmra.mrb[0].mxu0 %v1481
      %v2724 = vpop.f32.mrb[0].mxu0
      %v2725 = vadd.f32 %v472, %v2724
      %v2726 = vpop.f32.mrb[0].mxu0
      %v2727 = vadd.f32 %v476, %v2726
      %v2728 = vpop.f32.mrb[0].mxu0
      %v2729 = vadd.f32 %v472, %v2728
      %v2730 = vpop.f32.mrb[0].mxu0
      %v2731 = vadd.f32 %v476, %v2730
      %2732 = vmatprep.mubr.bf16.mxu0 0
      %2733 = vmatmul.mubr.bf16.gmra.mrb[0].mxu0 %v1484
      %v2734 = vpop.f32.mrb[0].mxu0
      %v2735 = vadd.f32 %v472, %v2734
      %v2736 = vpop.f32.mrb[0].mxu0
      %v2737 = vadd.f32 %v476, %v2736
      %v2738 = vpop.f32.mrb[0].mxu0
      %v2739 = vadd.f32 %v472, %v2738
      %v2740 = vpop.f32.mrb[0].mxu0
      %v2741 = vadd.f32 %v476, %v2740
      %2742 = vmatprep.mubr.bf16.mxu0 0
      %2743 = vmatmul.mubr.bf16.gmra.mrb[0].mxu0 %v1487
      %v2744 = vpop.f32.mrb[0].mxu0
      %v2745 = vadd.f32 %v472, %v2744
      %v2746 = vpop.f32.mrb[0].mxu0
      %v2747 = vadd.f32 %v476, %v2746
      %v2748 = vpop.f32.mrb[0].mxu0
      %v2749 = vadd.f32 %v472, %v2748
      %v2750 = vpop.f32.mrb[0].mxu0
      %v2751 = vadd.f32 %v476, %v2750
      %2752 = vmatprep.mubr.bf16.mxu0 0
      %2753 = vmatmul.mubr.bf16.gmra.mrb[0].mxu0 %v1490
      %v2754 = vpop.f32.mrb[0].mxu0
      %v2755 = vadd.f32 %v472, %v2754
      %v2756 = vpop.f32.mrb[0].mxu0
      %v2757 = vadd.f32 %v476, %v2756
      %v2758 = vpop.f32.mrb[0].mxu0
      %v2759 = vadd.f32 %v472, %v2758
      %v2760 = vpop.f32.mrb[0].mxu0
      %v2761 = vadd.f32 %v476, %v2760
      %2762 = vmatprep.mubr.bf16.mxu0 0
      %2763 = vmatmul.mubr.bf16.gmra.mrb[0].mxu0 %v1493
      %v2764 = vpop.f32.mrb[0].mxu0
      %v2765 = vadd.f32 %v472, %v2764
      %v2766 = vpop.f32.mrb[0].mxu0
      %v2767 = vadd.f32 %v476, %v2766
      %v2768 = vpop.f32.mrb[0].mxu0
      %v2769 = vadd.f32 %v472, %v2768
      %v2770 = vpop.f32.mrb[0].mxu0
      %v2771 = vadd.f32 %v476, %v2770
      %2772 = vmatprep.mubr.bf16.mxu0 0
      %2773 = vmatmul.mubr.bf16.gmra.mrb[0].mxu0 %v1496
      %v2774 = vpop.f32.mrb[0].mxu0
      %v2775 = vadd.f32 %v472, %v2774
      %v2776 = vpop.f32.mrb[0].mxu0
      %v2777 = vadd.f32 %v476, %v2776
      %v2778 = vpop.f32.mrb[0].mxu0
      %v2779 = vadd.f32 %v472, %v2778
      %v2780 = vpop.f32.mrb[0].mxu0
      %v2781 = vadd.f32 %v476, %v2780
      %2782 = vmatprep.mubr.bf16.mxu0 0
      %2783 = vmatmul.mubr.bf16.gmra.mrb[0].mxu0 %v1499
      %v2784 = vpop.f32.mrb[0].mxu0
      %v2785 = vadd.f32 %v472, %v2784
      %v2786 = vpop.f32.mrb[0].mxu0
      %v2787 = vadd.f32 %v476, %v2786
      %v2788 = vpop.f32.mrb[0].mxu0
      %v2789 = vadd.f32 %v472, %v2788
      %v2790 = vpop.f32.mrb[0].mxu0
      %v2791 = vadd.f32 %v476, %v2790
      %2792 = vmatprep.mubr.bf16.mxu0 0
      %2793 = vmatmul.mubr.bf16.gmra.mrb[0].mxu0 %v1502
      %v2794 = vpop.f32.mrb[0].mxu0
      %v2795 = vadd.f32 %v472, %v2794
      %v2796 = vpop.f32.mrb[0].mxu0
      %v2797 = vadd.f32 %v476, %v2796
      %v2798 = vpop.f32.mrb[0].mxu0
      %v2799 = vadd.f32 %v472, %v2798
      %v2800 = vpop.f32.mrb[0].mxu0
      %v2801 = vadd.f32 %v476, %v2800
      %2802 = vmatprep.mubr.bf16.mxu0 0
      %2803 = vmatmul.mubr.bf16.gmra.mrb[0].mxu0 %v1505
      %v2804 = vpop.f32.mrb[0].mxu0
      %v2805 = vadd.f32 %v472, %v2804
      %v2806 = vpop.f32.mrb[0].mxu0
      %v2807 = vadd.f32 %v476, %v2806
      %v2808 = vpop.f32.mrb[0].mxu0
      %v2809 = vadd.f32 %v472, %v2808
      %v2810 = vpop.f32.mrb[0].mxu0
      %v2811 = vadd.f32 %v476, %v2810
      %2812 = vmatprep.mubr.bf16.mxu0 0
      %2813 = vmatmul.mubr.bf16.gmra.mrb[0].mxu0 %v1508
      %v2814 = vpop.f32.mrb[0].mxu0
      %v2815 = vadd.f32 %v472, %v2814
      %v2816 = vpop.f32.mrb[0].mxu0
      %v2817 = vadd.f32 %v476, %v2816
      %v2818 = vpop.f32.mrb[0].mxu0
      %v2819 = vadd.f32 %v472, %v2818
      %v2820 = vpop.f32.mrb[0].mxu0
      %v2821 = vadd.f32 %v476, %v2820
      %2822 = vmatprep.mubr.bf16.mxu0 0
      %2823 = vmatmul.mubr.bf16.gmra.mrb[0].mxu0 %v1511
      %v2824 = vpop.f32.mrb[0].mxu0
      %v2825 = vadd.f32 %v472, %v2824
      %v2826 = vpop.f32.mrb[0].mxu0
      %v2827 = vadd.f32 %v476, %v2826
      %v2828 = vpop.f32.mrb[0].mxu0
      %v2829 = vadd.f32 %v472, %v2828
      %v2830 = vpop.f32.mrb[0].mxu0
      %v2831 = vadd.f32 %v476, %v2830
      %2832 = vdwg.mxu0
      %v2833 = vmax.f32 %v1555, 0.0
      %v2834 = vmax.f32 %v1557, 0.0
      %v2835 = vmax.f32 %v1559, 0.0
      %v2836 = vmax.f32 %v1561, 0.0
      %v2837 = vmax.f32 %v1565, 0.0
      %v2838 = vmax.f32 %v1567, 0.0
      %v2839 = vmax.f32 %v1569, 0.0
      %v2840 = vmax.f32 %v1571, 0.0
      %v2841 = vmax.f32 %v1575, 0.0
      %v2842 = vmax.f32 %v1577, 0.0
      %v2843 = vmax.f32 %v1579, 0.0
      %v2844 = vmax.f32 %v1581, 0.0
      %v2845 = vmax.f32 %v1585, 0.0
      %v2846 = vmax.f32 %v1587, 0.0
      %v2847 = vmax.f32 %v1589, 0.0
      %v2848 = vmax.f32 %v1591, 0.0
      %v2849 = vmax.f32 %v1595, 0.0
      %v2850 = vmax.f32 %v1597, 0.0
      %v2851 = vmax.f32 %v1599, 0.0
      %v2852 = vmax.f32 %v1601, 0.0
      %v2853 = vmax.f32 %v1605, 0.0
      %v2854 = vmax.f32 %v1607, 0.0
      %v2855 = vmax.f32 %v1609, 0.0
      %v2856 = vmax.f32 %v1611, 0.0
      %v2857 = vmax.f32 %v1615, 0.0
      %v2858 = vmax.f32 %v1617, 0.0
      %v2859 = vmax.f32 %v1619, 0.0
      %v2860 = vmax.f32 %v1621, 0.0
      %v2861 = vmax.f32 %v1625, 0.0
      %v2862 = vmax.f32 %v1627, 0.0
      %v2863 = vmax.f32 %v1629, 0.0
      %v2864 = vmax.f32 %v1631, 0.0
      %v2865 = vmax.f32 %v1635, 0.0
      %v2866 = vmax.f32 %v1637, 0.0
      %v2867 = vmax.f32 %v1639, 0.0
      %v2868 = vmax.f32 %v1641, 0.0
      %v2869 = vmax.f32 %v1645, 0.0
      %v2870 = vmax.f32 %v1647, 0.0
      %v2871 = vmax.f32 %v1649, 0.0
      %v2872 = vmax.f32 %v1651, 0.0
      %v2873 = vmax.f32 %v1655, 0.0
      %v2874 = vmax.f32 %v1657, 0.0
      %v2875 = vmax.f32 %v1659, 0.0
      %v2876 = vmax.f32 %v1661, 0.0
      %v2877 = vmax.f32 %v1665, 0.0
      %v2878 = vmax.f32 %v1667, 0.0
      %v2879 = vmax.f32 %v1669, 0.0
      %v2880 = vmax.f32 %v1671, 0.0
      %v2881 = vmax.f32 %v1675, 0.0
      %v2882 = vmax.f32 %v1677, 0.0
      %v2883 = vmax.f32 %v1679, 0.0
      %v2884 = vmax.f32 %v1681, 0.0
      %v2885 = vmax.f32 %v1685, 0.0
      %v2886 = vmax.f32 %v1687, 0.0
      %v2887 = vmax.f32 %v1689, 0.0
      %v2888 = vmax.f32 %v1691, 0.0
      %v2889 = vmax.f32 %v1695, 0.0
      %v2890 = vmax.f32 %v1697, 0.0
      %v2891 = vmax.f32 %v1699, 0.0
      %v2892 = vmax.f32 %v1701, 0.0
      %v2893 = vmax.f32 %v1705, 0.0
      %v2894 = vmax.f32 %v1707, 0.0
      %v2895 = vmax.f32 %v1709, 0.0
      %v2896 = vmax.f32 %v1711, 0.0
      %v2897 = vmax.f32 %v1715, 0.0
      %v2898 = vmax.f32 %v1717, 0.0
      %v2899 = vmax.f32 %v1719, 0.0
      %v2900 = vmax.f32 %v1721, 0.0
      %v2901 = vmax.f32 %v1725, 0.0
      %v2902 = vmax.f32 %v1727, 0.0
      %v2903 = vmax.f32 %v1729, 0.0
      %v2904 = vmax.f32 %v1731, 0.0
      %v2905 = vmax.f32 %v1735, 0.0
      %v2906 = vmax.f32 %v1737, 0.0
      %v2907 = vmax.f32 %v1739, 0.0
      %v2908 = vmax.f32 %v1741, 0.0
      %v2909 = vmax.f32 %v1745, 0.0
      %v2910 = vmax.f32 %v1747, 0.0
      %v2911 = vmax.f32 %v1749, 0.0
      %v2912 = vmax.f32 %v1751, 0.0
      %v2913 = vmax.f32 %v1755, 0.0
      %v2914 = vmax.f32 %v1757, 0.0
      %v2915 = vmax.f32 %v1759, 0.0
      %v2916 = vmax.f32 %v1761, 0.0
      %v2917 = vmax.f32 %v1765, 0.0
      %v2918 = vmax.f32 %v1767, 0.0
      %v2919 = vmax.f32 %v1769, 0.0
      %v2920 = vmax.f32 %v1771, 0.0
      %v2921 = vmax.f32 %v1775, 0.0
      %v2922 = vmax.f32 %v1777, 0.0
      %v2923 = vmax.f32 %v1779, 0.0
      %v2924 = vmax.f32 %v1781, 0.0
      %v2925 = vmax.f32 %v1785, 0.0
      %v2926 = vmax.f32 %v1787, 0.0
      %v2927 = vmax.f32 %v1789, 0.0
      %v2928 = vmax.f32 %v1791, 0.0
      %v2929 = vmax.f32 %v1795, 0.0
      %v2930 = vmax.f32 %v1797, 0.0
      %v2931 = vmax.f32 %v1799, 0.0
      %v2932 = vmax.f32 %v1801, 0.0
      %v2933 = vmax.f32 %v1805, 0.0
      %v2934 = vmax.f32 %v1807, 0.0
      %v2935 = vmax.f32 %v1809, 0.0
      %v2936 = vmax.f32 %v1811, 0.0
      %v2937 = vmax.f32 %v1815, 0.0
      %v2938 = vmax.f32 %v1817, 0.0
      %v2939 = vmax.f32 %v1819, 0.0
      %v2940 = vmax.f32 %v1821, 0.0
      %v2941 = vmax.f32 %v1825, 0.0
      %v2942 = vmax.f32 %v1827, 0.0
      %v2943 = vmax.f32 %v1829, 0.0
      %v2944 = vmax.f32 %v1831, 0.0
      %v2945 = vmax.f32 %v1835, 0.0
      %v2946 = vmax.f32 %v1837, 0.0
      %v2947 = vmax.f32 %v1839, 0.0
      %v2948 = vmax.f32 %v1841, 0.0
      %v2949 = vmax.f32 %v1845, 0.0
      %v2950 = vmax.f32 %v1847, 0.0
      %v2951 = vmax.f32 %v1849, 0.0
      %v2952 = vmax.f32 %v1851, 0.0
      %v2953 = vmax.f32 %v1855, 0.0
      %v2954 = vmax.f32 %v1857, 0.0
      %v2955 = vmax.f32 %v1859, 0.0
      %v2956 = vmax.f32 %v1861, 0.0
      %v2957 = vmax.f32 %v1865, 0.0
      %v2958 = vmax.f32 %v1867, 0.0
      %v2959 = vmax.f32 %v1869, 0.0
      %v2960 = vmax.f32 %v1871, 0.0
      %v2961 = vmax.f32 %v1875, 0.0
      %v2962 = vmax.f32 %v1877, 0.0
      %v2963 = vmax.f32 %v1879, 0.0
      %v2964 = vmax.f32 %v1881, 0.0
      %v2965 = vmax.f32 %v1885, 0.0
      %v2966 = vmax.f32 %v1887, 0.0
      %v2967 = vmax.f32 %v1889, 0.0
      %v2968 = vmax.f32 %v1891, 0.0
      %v2969 = vmax.f32 %v1895, 0.0
      %v2970 = vmax.f32 %v1897, 0.0
      %v2971 = vmax.f32 %v1899, 0.0
      %v2972 = vmax.f32 %v1901, 0.0
      %v2973 = vmax.f32 %v1905, 0.0
      %v2974 = vmax.f32 %v1907, 0.0
      %v2975 = vmax.f32 %v1909, 0.0
      %v2976 = vmax.f32 %v1911, 0.0
      %v2977 = vmax.f32 %v1915, 0.0
      %v2978 = vmax.f32 %v1917, 0.0
      %v2979 = vmax.f32 %v1919, 0.0
      %v2980 = vmax.f32 %v1921, 0.0
      %v2981 = vmax.f32 %v1925, 0.0
      %v2982 = vmax.f32 %v1927, 0.0
      %v2983 = vmax.f32 %v1929, 0.0
      %v2984 = vmax.f32 %v1931, 0.0
      %v2985 = vmax.f32 %v1935, 0.0
      %v2986 = vmax.f32 %v1937, 0.0
      %v2987 = vmax.f32 %v1939, 0.0
      %v2988 = vmax.f32 %v1941, 0.0
      %v2989 = vmax.f32 %v1945, 0.0
      %v2990 = vmax.f32 %v1947, 0.0
      %v2991 = vmax.f32 %v1949, 0.0
      %v2992 = vmax.f32 %v1951, 0.0
      %v2993 = vmax.f32 %v1955, 0.0
      %v2994 = vmax.f32 %v1957, 0.0
      %v2995 = vmax.f32 %v1959, 0.0
      %v2996 = vmax.f32 %v1961, 0.0
      %v2997 = vmax.f32 %v1965, 0.0
      %v2998 = vmax.f32 %v1967, 0.0
      %v2999 = vmax.f32 %v1969, 0.0
      %v3000 = vmax.f32 %v1971, 0.0
      %v3001 = vmax.f32 %v1975, 0.0
      %v3002 = vmax.f32 %v1977, 0.0
      %v3003 = vmax.f32 %v1979, 0.0
      %v3004 = vmax.f32 %v1981, 0.0
      %v3005 = vmax.f32 %v1985, 0.0
      %v3006 = vmax.f32 %v1987, 0.0
      %v3007 = vmax.f32 %v1989, 0.0
      %v3008 = vmax.f32 %v1991, 0.0
      %v3009 = vmax.f32 %v1995, 0.0
      %v3010 = vmax.f32 %v1997, 0.0
      %v3011 = vmax.f32 %v1999, 0.0
      %v3012 = vmax.f32 %v2001, 0.0
      %v3013 = vmax.f32 %v2005, 0.0
      %v3014 = vmax.f32 %v2007, 0.0
      %v3015 = vmax.f32 %v2009, 0.0
      %v3016 = vmax.f32 %v2011, 0.0
      %v3017 = vmax.f32 %v2015, 0.0
      %v3018 = vmax.f32 %v2017, 0.0
      %v3019 = vmax.f32 %v2019, 0.0
      %v3020 = vmax.f32 %v2021, 0.0
      %v3021 = vmax.f32 %v2025, 0.0
      %v3022 = vmax.f32 %v2027, 0.0
      %v3023 = vmax.f32 %v2029, 0.0
      %v3024 = vmax.f32 %v2031, 0.0
      %v3025 = vmax.f32 %v2035, 0.0
      %v3026 = vmax.f32 %v2037, 0.0
      %v3027 = vmax.f32 %v2039, 0.0
      %v3028 = vmax.f32 %v2041, 0.0
      %v3029 = vmax.f32 %v2045, 0.0
      %v3030 = vmax.f32 %v2047, 0.0
      %v3031 = vmax.f32 %v2049, 0.0
      %v3032 = vmax.f32 %v2051, 0.0
      %v3033 = vmax.f32 %v2055, 0.0
      %v3034 = vmax.f32 %v2057, 0.0
      %v3035 = vmax.f32 %v2059, 0.0
      %v3036 = vmax.f32 %v2061, 0.0
      %v3037 = vmax.f32 %v2065, 0.0
      %v3038 = vmax.f32 %v2067, 0.0
      %v3039 = vmax.f32 %v2069, 0.0
      %v3040 = vmax.f32 %v2071, 0.0
      %v3041 = vmax.f32 %v2075, 0.0
      %v3042 = vmax.f32 %v2077, 0.0
      %v3043 = vmax.f32 %v2079, 0.0
      %v3044 = vmax.f32 %v2081, 0.0
      %v3045 = vmax.f32 %v2085, 0.0
      %v3046 = vmax.f32 %v2087, 0.0
      %v3047 = vmax.f32 %v2089, 0.0
      %v3048 = vmax.f32 %v2091, 0.0
      %v3049 = vmax.f32 %v2095, 0.0
      %v3050 = vmax.f32 %v2097, 0.0
      %v3051 = vmax.f32 %v2099, 0.0
      %v3052 = vmax.f32 %v2101, 0.0
      %v3053 = vmax.f32 %v2105, 0.0
      %v3054 = vmax.f32 %v2107, 0.0
      %v3055 = vmax.f32 %v2109, 0.0
      %v3056 = vmax.f32 %v2111, 0.0
      %v3057 = vmax.f32 %v2115, 0.0
      %v3058 = vmax.f32 %v2117, 0.0
      %v3059 = vmax.f32 %v2119, 0.0
      %v3060 = vmax.f32 %v2121, 0.0
      %v3061 = vmax.f32 %v2125, 0.0
      %v3062 = vmax.f32 %v2127, 0.0
      %v3063 = vmax.f32 %v2129, 0.0
      %v3064 = vmax.f32 %v2131, 0.0
      %v3065 = vmax.f32 %v2135, 0.0
      %v3066 = vmax.f32 %v2137, 0.0
      %v3067 = vmax.f32 %v2139, 0.0
      %v3068 = vmax.f32 %v2141, 0.0
      %v3069 = vmax.f32 %v2145, 0.0
      %v3070 = vmax.f32 %v2147, 0.0
      %v3071 = vmax.f32 %v2149, 0.0
      %v3072 = vmax.f32 %v2151, 0.0
      %v3073 = vmax.f32 %v2155, 0.0
      %v3074 = vmax.f32 %v2157, 0.0
      %v3075 = vmax.f32 %v2159, 0.0
      %v3076 = vmax.f32 %v2161, 0.0
      %v3077 = vmax.f32 %v2165, 0.0
      %v3078 = vmax.f32 %v2167, 0.0
      %v3079 = vmax.f32 %v2169, 0.0
      %v3080 = vmax.f32 %v2171, 0.0
      %v3081 = vmax.f32 %v2175, 0.0
      %v3082 = vmax.f32 %v2177, 0.0
      %v3083 = vmax.f32 %v2179, 0.0
      %v3084 = vmax.f32 %v2181, 0.0
      %v3085 = vmax.f32 %v2185, 0.0
      %v3086 = vmax.f32 %v2187, 0.0
      %v3087 = vmax.f32 %v2189, 0.0
      %v3088 = vmax.f32 %v2191, 0.0
      %v3089 = vmax.f32 %v2195, 0.0
      %v3090 = vmax.f32 %v2197, 0.0
      %v3091 = vmax.f32 %v2199, 0.0
      %v3092 = vmax.f32 %v2201, 0.0
      %v3093 = vmax.f32 %v2205, 0.0
      %v3094 = vmax.f32 %v2207, 0.0
      %v3095 = vmax.f32 %v2209, 0.0
      %v3096 = vmax.f32 %v2211, 0.0
      %v3097 = vmax.f32 %v2215, 0.0
      %v3098 = vmax.f32 %v2217, 0.0
      %v3099 = vmax.f32 %v2219, 0.0
      %v3100 = vmax.f32 %v2221, 0.0
      %v3101 = vmax.f32 %v2225, 0.0
      %v3102 = vmax.f32 %v2227, 0.0
      %v3103 = vmax.f32 %v2229, 0.0
      %v3104 = vmax.f32 %v2231, 0.0
      %v3105 = vmax.f32 %v2235, 0.0
      %v3106 = vmax.f32 %v2237, 0.0
      %v3107 = vmax.f32 %v2239, 0.0
      %v3108 = vmax.f32 %v2241, 0.0
      %v3109 = vmax.f32 %v2245, 0.0
      %v3110 = vmax.f32 %v2247, 0.0
      %v3111 = vmax.f32 %v2249, 0.0
      %v3112 = vmax.f32 %v2251, 0.0
      %v3113 = vmax.f32 %v2255, 0.0
      %v3114 = vmax.f32 %v2257, 0.0
      %v3115 = vmax.f32 %v2259, 0.0
      %v3116 = vmax.f32 %v2261, 0.0
      %v3117 = vmax.f32 %v2265, 0.0
      %v3118 = vmax.f32 %v2267, 0.0
      %v3119 = vmax.f32 %v2269, 0.0
      %v3120 = vmax.f32 %v2271, 0.0
      %v3121 = vmax.f32 %v2275, 0.0
      %v3122 = vmax.f32 %v2277, 0.0
      %v3123 = vmax.f32 %v2279, 0.0
      %v3124 = vmax.f32 %v2281, 0.0
      %v3125 = vmax.f32 %v2285, 0.0
      %v3126 = vmax.f32 %v2287, 0.0
      %v3127 = vmax.f32 %v2289, 0.0
      %v3128 = vmax.f32 %v2291, 0.0
      %v3129 = vmax.f32 %v2295, 0.0
      %v3130 = vmax.f32 %v2297, 0.0
      %v3131 = vmax.f32 %v2299, 0.0
      %v3132 = vmax.f32 %v2301, 0.0
      %v3133 = vmax.f32 %v2305, 0.0
      %v3134 = vmax.f32 %v2307, 0.0
      %v3135 = vmax.f32 %v2309, 0.0
      %v3136 = vmax.f32 %v2311, 0.0
      %v3137 = vmax.f32 %v2315, 0.0
      %v3138 = vmax.f32 %v2317, 0.0
      %v3139 = vmax.f32 %v2319, 0.0
      %v3140 = vmax.f32 %v2321, 0.0
      %v3141 = vmax.f32 %v2325, 0.0
      %v3142 = vmax.f32 %v2327, 0.0
      %v3143 = vmax.f32 %v2329, 0.0
      %v3144 = vmax.f32 %v2331, 0.0
      %v3145 = vmax.f32 %v2335, 0.0
      %v3146 = vmax.f32 %v2337, 0.0
      %v3147 = vmax.f32 %v2339, 0.0
      %v3148 = vmax.f32 %v2341, 0.0
      %v3149 = vmax.f32 %v2345, 0.0
      %v3150 = vmax.f32 %v2347, 0.0
      %v3151 = vmax.f32 %v2349, 0.0
      %v3152 = vmax.f32 %v2351, 0.0
      %v3153 = vmax.f32 %v2355, 0.0
      %v3154 = vmax.f32 %v2357, 0.0
      %v3155 = vmax.f32 %v2359, 0.0
      %v3156 = vmax.f32 %v2361, 0.0
      %v3157 = vmax.f32 %v2365, 0.0
      %v3158 = vmax.f32 %v2367, 0.0
      %v3159 = vmax.f32 %v2369, 0.0
      %v3160 = vmax.f32 %v2371, 0.0
      %v3161 = vmax.f32 %v2375, 0.0
      %v3162 = vmax.f32 %v2377, 0.0
      %v3163 = vmax.f32 %v2379, 0.0
      %v3164 = vmax.f32 %v2381, 0.0
      %v3165 = vmax.f32 %v2385, 0.0
      %v3166 = vmax.f32 %v2387, 0.0
      %v3167 = vmax.f32 %v2389, 0.0
      %v3168 = vmax.f32 %v2391, 0.0
      %v3169 = vmax.f32 %v2395, 0.0
      %v3170 = vmax.f32 %v2397, 0.0
      %v3171 = vmax.f32 %v2399, 0.0
      %v3172 = vmax.f32 %v2401, 0.0
      %v3173 = vmax.f32 %v2405, 0.0
      %v3174 = vmax.f32 %v2407, 0.0
      %v3175 = vmax.f32 %v2409, 0.0
      %v3176 = vmax.f32 %v2411, 0.0
      %v3177 = vmax.f32 %v2415, 0.0
      %v3178 = vmax.f32 %v2417, 0.0
      %v3179 = vmax.f32 %v2419, 0.0
      %v3180 = vmax.f32 %v2421, 0.0
      %v3181 = vmax.f32 %v2425, 0.0
      %v3182 = vmax.f32 %v2427, 0.0
      %v3183 = vmax.f32 %v2429, 0.0
      %v3184 = vmax.f32 %v2431, 0.0
      %v3185 = vmax.f32 %v2435, 0.0
      %v3186 = vmax.f32 %v2437, 0.0
      %v3187 = vmax.f32 %v2439, 0.0
      %v3188 = vmax.f32 %v2441, 0.0
      %v3189 = vmax.f32 %v2445, 0.0
      %v3190 = vmax.f32 %v2447, 0.0
      %v3191 = vmax.f32 %v2449, 0.0
      %v3192 = vmax.f32 %v2451, 0.0
      %v3193 = vmax.f32 %v2455, 0.0
      %v3194 = vmax.f32 %v2457, 0.0
      %v3195 = vmax.f32 %v2459, 0.0
      %v3196 = vmax.f32 %v2461, 0.0
      %v3197 = vmax.f32 %v2465, 0.0
      %v3198 = vmax.f32 %v2467, 0.0
      %v3199 = vmax.f32 %v2469, 0.0
      %v3200 = vmax.f32 %v2471, 0.0
      %v3201 = vmax.f32 %v2475, 0.0
      %v3202 = vmax.f32 %v2477, 0.0
      %v3203 = vmax.f32 %v2479, 0.0
      %v3204 = vmax.f32 %v2481, 0.0
      %v3205 = vmax.f32 %v2485, 0.0
      %v3206 = vmax.f32 %v2487, 0.0
      %v3207 = vmax.f32 %v2489, 0.0
      %v3208 = vmax.f32 %v2491, 0.0
      %v3209 = vmax.f32 %v2495, 0.0
      %v3210 = vmax.f32 %v2497, 0.0
      %v3211 = vmax.f32 %v2499, 0.0
      %v3212 = vmax.f32 %v2501, 0.0
      %v3213 = vmax.f32 %v2505, 0.0
      %v3214 = vmax.f32 %v2507, 0.0
      %v3215 = vmax.f32 %v2509, 0.0
      %v3216 = vmax.f32 %v2511, 0.0
      %v3217 = vmax.f32 %v2515, 0.0
      %v3218 = vmax.f32 %v2517, 0.0
      %v3219 = vmax.f32 %v2519, 0.0
      %v3220 = vmax.f32 %v2521, 0.0
      %v3221 = vmax.f32 %v2525, 0.0
      %v3222 = vmax.f32 %v2527, 0.0
      %v3223 = vmax.f32 %v2529, 0.0
      %v3224 = vmax.f32 %v2531, 0.0
      %v3225 = vmax.f32 %v2535, 0.0
      %v3226 = vmax.f32 %v2537, 0.0
      %v3227 = vmax.f32 %v2539, 0.0
      %v3228 = vmax.f32 %v2541, 0.0
      %v3229 = vmax.f32 %v2545, 0.0
      %v3230 = vmax.f32 %v2547, 0.0
      %v3231 = vmax.f32 %v2549, 0.0
      %v3232 = vmax.f32 %v2551, 0.0
      %v3233 = vmax.f32 %v2555, 0.0
      %v3234 = vmax.f32 %v2557, 0.0
      %v3235 = vmax.f32 %v2559, 0.0
      %v3236 = vmax.f32 %v2561, 0.0
      %v3237 = vmax.f32 %v2565, 0.0
      %v3238 = vmax.f32 %v2567, 0.0
      %v3239 = vmax.f32 %v2569, 0.0
      %v3240 = vmax.f32 %v2571, 0.0
      %v3241 = vmax.f32 %v2575, 0.0
      %v3242 = vmax.f32 %v2577, 0.0
      %v3243 = vmax.f32 %v2579, 0.0
      %v3244 = vmax.f32 %v2581, 0.0
      %v3245 = vmax.f32 %v2585, 0.0
      %v3246 = vmax.f32 %v2587, 0.0
      %v3247 = vmax.f32 %v2589, 0.0
      %v3248 = vmax.f32 %v2591, 0.0
      %v3249 = vmax.f32 %v2595, 0.0
      %v3250 = vmax.f32 %v2597, 0.0
      %v3251 = vmax.f32 %v2599, 0.0
      %v3252 = vmax.f32 %v2601, 0.0
      %v3253 = vmax.f32 %v2605, 0.0
      %v3254 = vmax.f32 %v2607, 0.0
      %v3255 = vmax.f32 %v2609, 0.0
      %v3256 = vmax.f32 %v2611, 0.0
      %v3257 = vmax.f32 %v2615, 0.0
      %v3258 = vmax.f32 %v2617, 0.0
      %v3259 = vmax.f32 %v2619, 0.0
      %v3260 = vmax.f32 %v2621, 0.0
      %v3261 = vmax.f32 %v2625, 0.0
      %v3262 = vmax.f32 %v2627, 0.0
      %v3263 = vmax.f32 %v2629, 0.0
      %v3264 = vmax.f32 %v2631, 0.0
      %v3265 = vmax.f32 %v2635, 0.0
      %v3266 = vmax.f32 %v2637, 0.0
      %v3267 = vmax.f32 %v2639, 0.0
      %v3268 = vmax.f32 %v2641, 0.0
      %v3269 = vmax.f32 %v2645, 0.0
      %v3270 = vmax.f32 %v2647, 0.0
      %v3271 = vmax.f32 %v2649, 0.0
      %v3272 = vmax.f32 %v2651, 0.0
      %v3273 = vmax.f32 %v2655, 0.0
      %v3274 = vmax.f32 %v2657, 0.0
      %v3275 = vmax.f32 %v2659, 0.0
      %v3276 = vmax.f32 %v2661, 0.0
      %v3277 = vmax.f32 %v2665, 0.0
      %v3278 = vmax.f32 %v2667, 0.0
      %v3279 = vmax.f32 %v2669, 0.0
      %v3280 = vmax.f32 %v2671, 0.0
      %v3281 = vmax.f32 %v2675, 0.0
      %v3282 = vmax.f32 %v2677, 0.0
      %v3283 = vmax.f32 %v2679, 0.0
      %v3284 = vmax.f32 %v2681, 0.0
      %v3285 = vmax.f32 %v2685, 0.0
      %v3286 = vmax.f32 %v2687, 0.0
      %v3287 = vmax.f32 %v2689, 0.0
      %v3288 = vmax.f32 %v2691, 0.0
      %v3289 = vmax.f32 %v2695, 0.0
      %v3290 = vmax.f32 %v2697, 0.0
      %v3291 = vmax.f32 %v2699, 0.0
      %v3292 = vmax.f32 %v2701, 0.0
      %v3293 = vmax.f32 %v2705, 0.0
      %v3294 = vmax.f32 %v2707, 0.0
      %v3295 = vmax.f32 %v2709, 0.0
      %v3296 = vmax.f32 %v2711, 0.0
      %v3297 = vmax.f32 %v2715, 0.0
      %v3298 = vmax.f32 %v2717, 0.0
      %v3299 = vmax.f32 %v2719, 0.0
      %v3300 = vmax.f32 %v2721, 0.0
      %v3301 = vmax.f32 %v2725, 0.0
      %v3302 = vmax.f32 %v2727, 0.0
      %v3303 = vmax.f32 %v2729, 0.0
      %v3304 = vmax.f32 %v2731, 0.0
      %v3305 = vmax.f32 %v2735, 0.0
      %v3306 = vmax.f32 %v2737, 0.0
      %v3307 = vmax.f32 %v2739, 0.0
      %v3308 = vmax.f32 %v2741, 0.0
      %v3309 = vmax.f32 %v2745, 0.0
      %v3310 = vmax.f32 %v2747, 0.0
      %v3311 = vmax.f32 %v2749, 0.0
      %v3312 = vmax.f32 %v2751, 0.0
      %v3313 = vmax.f32 %v2755, 0.0
      %v3314 = vmax.f32 %v2757, 0.0
      %v3315 = vmax.f32 %v2759, 0.0
      %v3316 = vmax.f32 %v2761, 0.0
      %v3317 = vmax.f32 %v2765, 0.0
      %v3318 = vmax.f32 %v2767, 0.0
      %v3319 = vmax.f32 %v2769, 0.0
      %v3320 = vmax.f32 %v2771, 0.0
      %v3321 = vmax.f32 %v2775, 0.0
      %v3322 = vmax.f32 %v2777, 0.0
      %v3323 = vmax.f32 %v2779, 0.0
      %v3324 = vmax.f32 %v2781, 0.0
      %v3325 = vmax.f32 %v2785, 0.0
      %v3326 = vmax.f32 %v2787, 0.0
      %v3327 = vmax.f32 %v2789, 0.0
      %v3328 = vmax.f32 %v2791, 0.0
      %v3329 = vmax.f32 %v2795, 0.0
      %v3330 = vmax.f32 %v2797, 0.0
      %v3331 = vmax.f32 %v2799, 0.0
      %v3332 = vmax.f32 %v2801, 0.0
      %v3333 = vmax.f32 %v2805, 0.0
      %v3334 = vmax.f32 %v2807, 0.0
      %v3335 = vmax.f32 %v2809, 0.0
      %v3336 = vmax.f32 %v2811, 0.0
      %v3337 = vmax.f32 %v2815, 0.0
      %v3338 = vmax.f32 %v2817, 0.0
      %v3339 = vmax.f32 %v2819, 0.0
      %v3340 = vmax.f32 %v2821, 0.0
      %v3341 = vmax.f32 %v2825, 0.0
      %v3342 = vmax.f32 %v2827, 0.0
      %v3343 = vmax.f32 %v2829, 0.0
      %v3344 = vmax.f32 %v2831, 0.0
      %v3345 = vadd.f32 %v2833, %v2835
      %v3346 = vadd.f32 %v3345, %v2837
      %v3347 = vadd.f32 %v3346, %v2839
      %v3348 = vadd.f32 %v3347, %v2841
      %v3349 = vadd.f32 %v3348, %v2843
      %v3350 = vadd.f32 %v3349, %v2845
      %v3351 = vadd.f32 %v3350, %v2847
      %v3352 = vadd.f32 %v3351, %v2849
      %v3353 = vadd.f32 %v3352, %v2851
      %v3354 = vadd.f32 %v3353, %v2853
      %v3355 = vadd.f32 %v3354, %v2855
      %v3356 = vadd.f32 %v3355, %v2857
      %v3357 = vadd.f32 %v3356, %v2859
      %v3358 = vadd.f32 %v3357, %v2861
      %v3359 = vadd.f32 %v3358, %v2863
      %v3360 = vadd.f32 %v3359, %v2865
      %v3361 = vadd.f32 %v3360, %v2867
      %v3362 = vadd.f32 %v3361, %v2869
      %v3363 = vadd.f32 %v3362, %v2871
      %v3364 = vadd.f32 %v3363, %v2873
      %v3365 = vadd.f32 %v3364, %v2875
      %v3366 = vadd.f32 %v3365, %v2877
      %v3367 = vadd.f32 %v3366, %v2879
      %v3368 = vadd.f32 %v3367, %v2881
      %v3369 = vadd.f32 %v3368, %v2883
      %v3370 = vadd.f32 %v3369, %v2885
      %v3371 = vadd.f32 %v3370, %v2887
      %v3372 = vadd.f32 %v3371, %v2889
      %v3373 = vadd.f32 %v3372, %v2891
      %v3374 = vadd.f32 %v3373, %v2893
      %v3375 = vadd.f32 %v3374, %v2895
      %v3376 = vrot.slane %v3375, 4
      %v3377 = vadd.f32 %v3375, %v3376
      %v3378 = vrot.slane %v3377, 2
      %v3379 = vadd.f32 %v3377, %v3378
      %v3380 = vrot.slane %v3379, 1
      %v3381 = vadd.f32 %v3379, %v3380
      %v3382 = vadd.f32 %v2834, %v2836
      %v3383 = vadd.f32 %v3382, %v2838
      %v3384 = vadd.f32 %v3383, %v2840
      %v3385 = vadd.f32 %v3384, %v2842
      %v3386 = vadd.f32 %v3385, %v2844
      %v3387 = vadd.f32 %v3386, %v2846
      %v3388 = vadd.f32 %v3387, %v2848
      %v3389 = vadd.f32 %v3388, %v2850
      %v3390 = vadd.f32 %v3389, %v2852
      %v3391 = vadd.f32 %v3390, %v2854
      %v3392 = vadd.f32 %v3391, %v2856
      %v3393 = vadd.f32 %v3392, %v2858
      %v3394 = vadd.f32 %v3393, %v2860
      %v3395 = vadd.f32 %v3394, %v2862
      %v3396 = vadd.f32 %v3395, %v2864
      %v3397 = vadd.f32 %v3396, %v2866
      %v3398 = vadd.f32 %v3397, %v2868
      %v3399 = vadd.f32 %v3398, %v2870
      %v3400 = vadd.f32 %v3399, %v2872
      %v3401 = vadd.f32 %v3400, %v2874
      %v3402 = vadd.f32 %v3401, %v2876
      %v3403 = vadd.f32 %v3402, %v2878
      %v3404 = vadd.f32 %v3403, %v2880
      %v3405 = vadd.f32 %v3404, %v2882
      %v3406 = vadd.f32 %v3405, %v2884
      %v3407 = vadd.f32 %v3406, %v2886
      %v3408 = vadd.f32 %v3407, %v2888
      %v3409 = vadd.f32 %v3408, %v2890
      %v3410 = vadd.f32 %v3409, %v2892
      %v3411 = vadd.f32 %v3410, %v2894
      %v3412 = vadd.f32 %v3411, %v2896
      %v3413 = vrot.slane %v3412, 4
      %v3414 = vadd.f32 %v3412, %v3413
      %v3415 = vrot.slane %v3414, 2
      %v3416 = vadd.f32 %v3414, %v3415
      %v3417 = vrot.slane %v3416, 1
      %v3418 = vadd.f32 %v3416, %v3417
      %v3419 = vadd.f32 %v2897, %v2899
      %v3420 = vadd.f32 %v3419, %v2901
      %v3421 = vadd.f32 %v3420, %v2903
      %v3422 = vadd.f32 %v3421, %v2905
      %v3423 = vadd.f32 %v3422, %v2907
      %v3424 = vadd.f32 %v3423, %v2909
      %v3425 = vadd.f32 %v3424, %v2911
      %v3426 = vadd.f32 %v3425, %v2913
      %v3427 = vadd.f32 %v3426, %v2915
      %v3428 = vadd.f32 %v3427, %v2917
      %v3429 = vadd.f32 %v3428, %v2919
      %v3430 = vadd.f32 %v3429, %v2921
      %v3431 = vadd.f32 %v3430, %v2923
      %v3432 = vadd.f32 %v3431, %v2925
      %v3433 = vadd.f32 %v3432, %v2927
      %v3434 = vadd.f32 %v3433, %v2929
      %v3435 = vadd.f32 %v3434, %v2931
      %v3436 = vadd.f32 %v3435, %v2933
      %v3437 = vadd.f32 %v3436, %v2935
      %v3438 = vadd.f32 %v3437, %v2937
      %v3439 = vadd.f32 %v3438, %v2939
      %v3440 = vadd.f32 %v3439, %v2941
      %v3441 = vadd.f32 %v3440, %v2943
      %v3442 = vadd.f32 %v3441, %v2945
      %v3443 = vadd.f32 %v3442, %v2947
      %v3444 = vadd.f32 %v3443, %v2949
      %v3445 = vadd.f32 %v3444, %v2951
      %v3446 = vadd.f32 %v3445, %v2953
      %v3447 = vadd.f32 %v3446, %v2955
      %v3448 = vadd.f32 %v3447, %v2957
      %v3449 = vadd.f32 %v3448, %v2959
      %v3450 = vrot.slane %v3449, 4
      %v3451 = vadd.f32 %v3449, %v3450
      %v3452 = vrot.slane %v3451, 2
      %v3453 = vadd.f32 %v3451, %v3452
      %v3454 = vrot.slane %v3453, 1
      %v3455 = vadd.f32 %v3453, %v3454
      %v3456 = vadd.f32 %v2898, %v2900
      %v3457 = vadd.f32 %v3456, %v2902
      %v3458 = vadd.f32 %v3457, %v2904
      %v3459 = vadd.f32 %v3458, %v2906
      %v3460 = vadd.f32 %v3459, %v2908
      %v3461 = vadd.f32 %v3460, %v2910
      %v3462 = vadd.f32 %v3461, %v2912
      %v3463 = vadd.f32 %v3462, %v2914
      %v3464 = vadd.f32 %v3463, %v2916
      %v3465 = vadd.f32 %v3464, %v2918
      %v3466 = vadd.f32 %v3465, %v2920
      %v3467 = vadd.f32 %v3466, %v2922
      %v3468 = vadd.f32 %v3467, %v2924
      %v3469 = vadd.f32 %v3468, %v2926
      %v3470 = vadd.f32 %v3469, %v2928
      %v3471 = vadd.f32 %v3470, %v2930
      %v3472 = vadd.f32 %v3471, %v2932
      %v3473 = vadd.f32 %v3472, %v2934
      %v3474 = vadd.f32 %v3473, %v2936
      %v3475 = vadd.f32 %v3474, %v2938
      %v3476 = vadd.f32 %v3475, %v2940
      %v3477 = vadd.f32 %v3476, %v2942
      %v3478 = vadd.f32 %v3477, %v2944
      %v3479 = vadd.f32 %v3478, %v2946
      %v3480 = vadd.f32 %v3479, %v2948
      %v3481 = vadd.f32 %v3480, %v2950
      %v3482 = vadd.f32 %v3481, %v2952
      %v3483 = vadd.f32 %v3482, %v2954
      %v3484 = vadd.f32 %v3483, %v2956
      %v3485 = vadd.f32 %v3484, %v2958
      %v3486 = vadd.f32 %v3485, %v2960
      %v3487 = vrot.slane %v3486, 4
      %v3488 = vadd.f32 %v3486, %v3487
      %v3489 = vrot.slane %v3488, 2
      %v3490 = vadd.f32 %v3488, %v3489
      %v3491 = vrot.slane %v3490, 1
      %v3492 = vadd.f32 %v3490, %v3491
      %v3493 = vadd.f32 %v2961, %v2963
      %v3494 = vadd.f32 %v3493, %v2965
      %v3495 = vadd.f32 %v3494, %v2967
      %v3496 = vadd.f32 %v3495, %v2969
      %v3497 = vadd.f32 %v3496, %v2971
      %v3498 = vadd.f32 %v3497, %v2973
      %v3499 = vadd.f32 %v3498, %v2975
      %v3500 = vadd.f32 %v3499, %v2977
      %v3501 = vadd.f32 %v3500, %v2979
      %v3502 = vadd.f32 %v3501, %v2981
      %v3503 = vadd.f32 %v3502, %v2983
      %v3504 = vadd.f32 %v3503, %v2985
      %v3505 = vadd.f32 %v3504, %v2987
      %v3506 = vadd.f32 %v3505, %v2989
      %v3507 = vadd.f32 %v3506, %v2991
      %v3508 = vadd.f32 %v3507, %v2993
      %v3509 = vadd.f32 %v3508, %v2995
      %v3510 = vadd.f32 %v3509, %v2997
      %v3511 = vadd.f32 %v3510, %v2999
      %v3512 = vadd.f32 %v3511, %v3001
      %v3513 = vadd.f32 %v3512, %v3003
      %v3514 = vadd.f32 %v3513, %v3005
      %v3515 = vadd.f32 %v3514, %v3007
      %v3516 = vadd.f32 %v3515, %v3009
      %v3517 = vadd.f32 %v3516, %v3011
      %v3518 = vadd.f32 %v3517, %v3013
      %v3519 = vadd.f32 %v3518, %v3015
      %v3520 = vadd.f32 %v3519, %v3017
      %v3521 = vadd.f32 %v3520, %v3019
      %v3522 = vadd.f32 %v3521, %v3021
      %v3523 = vadd.f32 %v3522, %v3023
      %v3524 = vrot.slane %v3523, 4
      %v3525 = vadd.f32 %v3523, %v3524
      %v3526 = vrot.slane %v3525, 2
      %v3527 = vadd.f32 %v3525, %v3526
      %v3528 = vrot.slane %v3527, 1
      %v3529 = vadd.f32 %v3527, %v3528
      %v3530 = vadd.f32 %v2962, %v2964
      %v3531 = vadd.f32 %v3530, %v2966
      %v3532 = vadd.f32 %v3531, %v2968
      %v3533 = vadd.f32 %v3532, %v2970
      %v3534 = vadd.f32 %v3533, %v2972
      %v3535 = vadd.f32 %v3534, %v2974
      %v3536 = vadd.f32 %v3535, %v2976
      %v3537 = vadd.f32 %v3536, %v2978
      %v3538 = vadd.f32 %v3537, %v2980
      %v3539 = vadd.f32 %v3538, %v2982
      %v3540 = vadd.f32 %v3539, %v2984
      %v3541 = vadd.f32 %v3540, %v2986
      %v3542 = vadd.f32 %v3541, %v2988
      %v3543 = vadd.f32 %v3542, %v2990
      %v3544 = vadd.f32 %v3543, %v2992
      %v3545 = vadd.f32 %v3544, %v2994
      %v3546 = vadd.f32 %v3545, %v2996
      %v3547 = vadd.f32 %v3546, %v2998
      %v3548 = vadd.f32 %v3547, %v3000
      %v3549 = vadd.f32 %v3548, %v3002
      %v3550 = vadd.f32 %v3549, %v3004
      %v3551 = vadd.f32 %v3550, %v3006
      %v3552 = vadd.f32 %v3551, %v3008
      %v3553 = vadd.f32 %v3552, %v3010
      %v3554 = vadd.f32 %v3553, %v3012
      %v3555 = vadd.f32 %v3554, %v3014
      %v3556 = vadd.f32 %v3555, %v3016
      %v3557 = vadd.f32 %v3556, %v3018
      %v3558 = vadd.f32 %v3557, %v3020
      %v3559 = vadd.f32 %v3558, %v3022
      %v3560 = vadd.f32 %v3559, %v3024
      %v3561 = vrot.slane %v3560, 4
      %v3562 = vadd.f32 %v3560, %v3561
      %v3563 = vrot.slane %v3562, 2
      %v3564 = vadd.f32 %v3562, %v3563
      %v3565 = vrot.slane %v3564, 1
      %v3566 = vadd.f32 %v3564, %v3565
      %v3567 = vadd.f32 %v3025, %v3027
      %v3568 = vadd.f32 %v3567, %v3029
      %v3569 = vadd.f32 %v3568, %v3031
      %v3570 = vadd.f32 %v3569, %v3033
      %v3571 = vadd.f32 %v3570, %v3035
      %v3572 = vadd.f32 %v3571, %v3037
      %v3573 = vadd.f32 %v3572, %v3039
      %v3574 = vadd.f32 %v3573, %v3041
      %v3575 = vadd.f32 %v3574, %v3043
      %v3576 = vadd.f32 %v3575, %v3045
      %v3577 = vadd.f32 %v3576, %v3047
      %v3578 = vadd.f32 %v3577, %v3049
      %v3579 = vadd.f32 %v3578, %v3051
      %v3580 = vadd.f32 %v3579, %v3053
      %v3581 = vadd.f32 %v3580, %v3055
      %v3582 = vadd.f32 %v3581, %v3057
      %v3583 = vadd.f32 %v3582, %v3059
      %v3584 = vadd.f32 %v3583, %v3061
      %v3585 = vadd.f32 %v3584, %v3063
      %v3586 = vadd.f32 %v3585, %v3065
      %v3587 = vadd.f32 %v3586, %v3067
      %v3588 = vadd.f32 %v3587, %v3069
      %v3589 = vadd.f32 %v3588, %v3071
      %v3590 = vadd.f32 %v3589, %v3073
      %v3591 = vadd.f32 %v3590, %v3075
      %v3592 = vadd.f32 %v3591, %v3077
      %v3593 = vadd.f32 %v3592, %v3079
      %v3594 = vadd.f32 %v3593, %v3081
      %v3595 = vadd.f32 %v3594, %v3083
      %v3596 = vadd.f32 %v3595, %v3085
      %v3597 = vadd.f32 %v3596, %v3087
      %v3598 = vrot.slane %v3597, 4
      %v3599 = vadd.f32 %v3597, %v3598
      %v3600 = vrot.slane %v3599, 2
      %v3601 = vadd.f32 %v3599, %v3600
      %v3602 = vrot.slane %v3601, 1
      %v3603 = vadd.f32 %v3601, %v3602
      %v3604 = vadd.f32 %v3026, %v3028
      %v3605 = vadd.f32 %v3604, %v3030
      %v3606 = vadd.f32 %v3605, %v3032
      %v3607 = vadd.f32 %v3606, %v3034
      %v3608 = vadd.f32 %v3607, %v3036
      %v3609 = vadd.f32 %v3608, %v3038
      %v3610 = vadd.f32 %v3609, %v3040
      %v3611 = vadd.f32 %v3610, %v3042
      %v3612 = vadd.f32 %v3611, %v3044
      %v3613 = vadd.f32 %v3612, %v3046
      %v3614 = vadd.f32 %v3613, %v3048
      %v3615 = vadd.f32 %v3614, %v3050
      %v3616 = vadd.f32 %v3615, %v3052
      %v3617 = vadd.f32 %v3616, %v3054
      %v3618 = vadd.f32 %v3617, %v3056
      %v3619 = vadd.f32 %v3618, %v3058
      %v3620 = vadd.f32 %v3619, %v3060
      %v3621 = vadd.f32 %v3620, %v3062
      %v3622 = vadd.f32 %v3621, %v3064
      %v3623 = vadd.f32 %v3622, %v3066
      %v3624 = vadd.f32 %v3623, %v3068
      %v3625 = vadd.f32 %v3624, %v3070
      %v3626 = vadd.f32 %v3625, %v3072
      %v3627 = vadd.f32 %v3626, %v3074
      %v3628 = vadd.f32 %v3627, %v3076
      %v3629 = vadd.f32 %v3628, %v3078
      %v3630 = vadd.f32 %v3629, %v3080
      %v3631 = vadd.f32 %v3630, %v3082
      %v3632 = vadd.f32 %v3631, %v3084
      %v3633 = vadd.f32 %v3632, %v3086
      %v3634 = vadd.f32 %v3633, %v3088
      %v3635 = vrot.slane %v3634, 4
      %v3636 = vadd.f32 %v3634, %v3635
      %v3637 = vrot.slane %v3636, 2
      %v3638 = vadd.f32 %v3636, %v3637
      %v3639 = vrot.slane %v3638, 1
      %v3640 = vadd.f32 %v3638, %v3639
      %v3641 = vadd.f32 %v3089, %v3091
      %v3642 = vadd.f32 %v3641, %v3093
      %v3643 = vadd.f32 %v3642, %v3095
      %v3644 = vadd.f32 %v3643, %v3097
      %v3645 = vadd.f32 %v3644, %v3099
      %v3646 = vadd.f32 %v3645, %v3101
      %v3647 = vadd.f32 %v3646, %v3103
      %v3648 = vadd.f32 %v3647, %v3105
      %v3649 = vadd.f32 %v3648, %v3107
      %v3650 = vadd.f32 %v3649, %v3109
      %v3651 = vadd.f32 %v3650, %v3111
      %v3652 = vadd.f32 %v3651, %v3113
      %v3653 = vadd.f32 %v3652, %v3115
      %v3654 = vadd.f32 %v3653, %v3117
      %v3655 = vadd.f32 %v3654, %v3119
      %v3656 = vadd.f32 %v3655, %v3121
      %v3657 = vadd.f32 %v3656, %v3123
      %v3658 = vadd.f32 %v3657, %v3125
      %v3659 = vadd.f32 %v3658, %v3127
      %v3660 = vadd.f32 %v3659, %v3129
      %v3661 = vadd.f32 %v3660, %v3131
      %v3662 = vadd.f32 %v3661, %v3133
      %v3663 = vadd.f32 %v3662, %v3135
      %v3664 = vadd.f32 %v3663, %v3137
      %v3665 = vadd.f32 %v3664, %v3139
      %v3666 = vadd.f32 %v3665, %v3141
      %v3667 = vadd.f32 %v3666, %v3143
      %v3668 = vadd.f32 %v3667, %v3145
      %v3669 = vadd.f32 %v3668, %v3147
      %v3670 = vadd.f32 %v3669, %v3149
      %v3671 = vadd.f32 %v3670, %v3151
      %v3672 = vrot.slane %v3671, 4
      %v3673 = vadd.f32 %v3671, %v3672
      %v3674 = vrot.slane %v3673, 2
      %v3675 = vadd.f32 %v3673, %v3674
      %v3676 = vrot.slane %v3675, 1
      %v3677 = vadd.f32 %v3675, %v3676
      %v3678 = vadd.f32 %v3090, %v3092
      %v3679 = vadd.f32 %v3678, %v3094
      %v3680 = vadd.f32 %v3679, %v3096
      %v3681 = vadd.f32 %v3680, %v3098
      %v3682 = vadd.f32 %v3681, %v3100
      %v3683 = vadd.f32 %v3682, %v3102
      %v3684 = vadd.f32 %v3683, %v3104
      %v3685 = vadd.f32 %v3684, %v3106
      %v3686 = vadd.f32 %v3685, %v3108
      %v3687 = vadd.f32 %v3686, %v3110
      %v3688 = vadd.f32 %v3687, %v3112
      %v3689 = vadd.f32 %v3688, %v3114
      %v3690 = vadd.f32 %v3689, %v3116
      %v3691 = vadd.f32 %v3690, %v3118
      %v3692 = vadd.f32 %v3691, %v3120
      %v3693 = vadd.f32 %v3692, %v3122
      %v3694 = vadd.f32 %v3693, %v3124
      %v3695 = vadd.f32 %v3694, %v3126
      %v3696 = vadd.f32 %v3695, %v3128
      %v3697 = vadd.f32 %v3696, %v3130
      %v3698 = vadd.f32 %v3697, %v3132
      %v3699 = vadd.f32 %v3698, %v3134
      %v3700 = vadd.f32 %v3699, %v3136
      %v3701 = vadd.f32 %v3700, %v3138
      %v3702 = vadd.f32 %v3701, %v3140
      %v3703 = vadd.f32 %v3702, %v3142
      %v3704 = vadd.f32 %v3703, %v3144
      %v3705 = vadd.f32 %v3704, %v3146
      %v3706 = vadd.f32 %v3705, %v3148
      %v3707 = vadd.f32 %v3706, %v3150
      %v3708 = vadd.f32 %v3707, %v3152
      %v3709 = vrot.slane %v3708, 4
      %v3710 = vadd.f32 %v3708, %v3709
      %v3711 = vrot.slane %v3710, 2
      %v3712 = vadd.f32 %v3710, %v3711
      %v3713 = vrot.slane %v3712, 1
      %v3714 = vadd.f32 %v3712, %v3713
      %v3715 = vadd.f32 %v3153, %v3155
      %v3716 = vadd.f32 %v3715, %v3157
      %v3717 = vadd.f32 %v3716, %v3159
      %v3718 = vadd.f32 %v3717, %v3161
      %v3719 = vadd.f32 %v3718, %v3163
      %v3720 = vadd.f32 %v3719, %v3165
      %v3721 = vadd.f32 %v3720, %v3167
      %v3722 = vadd.f32 %v3721, %v3169
      %v3723 = vadd.f32 %v3722, %v3171
      %v3724 = vadd.f32 %v3723, %v3173
      %v3725 = vadd.f32 %v3724, %v3175
      %v3726 = vadd.f32 %v3725, %v3177
      %v3727 = vadd.f32 %v3726, %v3179
      %v3728 = vadd.f32 %v3727, %v3181
      %v3729 = vadd.f32 %v3728, %v3183
      %v3730 = vadd.f32 %v3729, %v3185
      %v3731 = vadd.f32 %v3730, %v3187
      %v3732 = vadd.f32 %v3731, %v3189
      %v3733 = vadd.f32 %v3732, %v3191
      %v3734 = vadd.f32 %v3733, %v3193
      %v3735 = vadd.f32 %v3734, %v3195
      %v3736 = vadd.f32 %v3735, %v3197
      %v3737 = vadd.f32 %v3736, %v3199
      %v3738 = vadd.f32 %v3737, %v3201
      %v3739 = vadd.f32 %v3738, %v3203
      %v3740 = vadd.f32 %v3739, %v3205
      %v3741 = vadd.f32 %v3740, %v3207
      %v3742 = vadd.f32 %v3741, %v3209
      %v3743 = vadd.f32 %v3742, %v3211
      %v3744 = vadd.f32 %v3743, %v3213
      %v3745 = vadd.f32 %v3744, %v3215
      %v3746 = vrot.slane %v3745, 4
      %v3747 = vadd.f32 %v3745, %v3746
      %v3748 = vrot.slane %v3747, 2
      %v3749 = vadd.f32 %v3747, %v3748
      %v3750 = vrot.slane %v3749, 1
      %v3751 = vadd.f32 %v3749, %v3750
      %v3752 = vadd.f32 %v3154, %v3156
      %v3753 = vadd.f32 %v3752, %v3158
      %v3754 = vadd.f32 %v3753, %v3160
      %v3755 = vadd.f32 %v3754, %v3162
      %v3756 = vadd.f32 %v3755, %v3164
      %v3757 = vadd.f32 %v3756, %v3166
      %v3758 = vadd.f32 %v3757, %v3168
      %v3759 = vadd.f32 %v3758, %v3170
      %v3760 = vadd.f32 %v3759, %v3172
      %v3761 = vadd.f32 %v3760, %v3174
      %v3762 = vadd.f32 %v3761, %v3176
      %v3763 = vadd.f32 %v3762, %v3178
      %v3764 = vadd.f32 %v3763, %v3180
      %v3765 = vadd.f32 %v3764, %v3182
      %v3766 = vadd.f32 %v3765, %v3184
      %v3767 = vadd.f32 %v3766, %v3186
      %v3768 = vadd.f32 %v3767, %v3188
      %v3769 = vadd.f32 %v3768, %v3190
      %v3770 = vadd.f32 %v3769, %v3192
      %v3771 = vadd.f32 %v3770, %v3194
      %v3772 = vadd.f32 %v3771, %v3196
      %v3773 = vadd.f32 %v3772, %v3198
      %v3774 = vadd.f32 %v3773, %v3200
      %v3775 = vadd.f32 %v3774, %v3202
      %v3776 = vadd.f32 %v3775, %v3204
      %v3777 = vadd.f32 %v3776, %v3206
      %v3778 = vadd.f32 %v3777, %v3208
      %v3779 = vadd.f32 %v3778, %v3210
      %v3780 = vadd.f32 %v3779, %v3212
      %v3781 = vadd.f32 %v3780, %v3214
      %v3782 = vadd.f32 %v3781, %v3216
      %v3783 = vrot.slane %v3782, 4
      %v3784 = vadd.f32 %v3782, %v3783
      %v3785 = vrot.slane %v3784, 2
      %v3786 = vadd.f32 %v3784, %v3785
      %v3787 = vrot.slane %v3786, 1
      %v3788 = vadd.f32 %v3786, %v3787
      %v3789 = vadd.f32 %v3217, %v3219
      %v3790 = vadd.f32 %v3789, %v3221
      %v3791 = vadd.f32 %v3790, %v3223
      %v3792 = vadd.f32 %v3791, %v3225
      %v3793 = vadd.f32 %v3792, %v3227
      %v3794 = vadd.f32 %v3793, %v3229
      %v3795 = vadd.f32 %v3794, %v3231
      %v3796 = vadd.f32 %v3795, %v3233
      %v3797 = vadd.f32 %v3796, %v3235
      %v3798 = vadd.f32 %v3797, %v3237
      %v3799 = vadd.f32 %v3798, %v3239
      %v3800 = vadd.f32 %v3799, %v3241
      %v3801 = vadd.f32 %v3800, %v3243
      %v3802 = vadd.f32 %v3801, %v3245
      %v3803 = vadd.f32 %v3802, %v3247
      %v3804 = vadd.f32 %v3803, %v3249
      %v3805 = vadd.f32 %v3804, %v3251
      %v3806 = vadd.f32 %v3805, %v3253
      %v3807 = vadd.f32 %v3806, %v3255
      %v3808 = vadd.f32 %v3807, %v3257
      %v3809 = vadd.f32 %v3808, %v3259
      %v3810 = vadd.f32 %v3809, %v3261
      %v3811 = vadd.f32 %v3810, %v3263
      %v3812 = vadd.f32 %v3811, %v3265
      %v3813 = vadd.f32 %v3812, %v3267
      %v3814 = vadd.f32 %v3813, %v3269
      %v3815 = vadd.f32 %v3814, %v3271
      %v3816 = vadd.f32 %v3815, %v3273
      %v3817 = vadd.f32 %v3816, %v3275
      %v3818 = vadd.f32 %v3817, %v3277
      %v3819 = vadd.f32 %v3818, %v3279
      %v3820 = vrot.slane %v3819, 4
      %v3821 = vadd.f32 %v3819, %v3820
      %v3822 = vrot.slane %v3821, 2
      %v3823 = vadd.f32 %v3821, %v3822
      %v3824 = vrot.slane %v3823, 1
      %v3825 = vadd.f32 %v3823, %v3824
      %v3826 = vadd.f32 %v3218, %v3220
      %v3827 = vadd.f32 %v3826, %v3222
      %v3828 = vadd.f32 %v3827, %v3224
      %v3829 = vadd.f32 %v3828, %v3226
      %v3830 = vadd.f32 %v3829, %v3228
      %v3831 = vadd.f32 %v3830, %v3230
      %v3832 = vadd.f32 %v3831, %v3232
      %v3833 = vadd.f32 %v3832, %v3234
      %v3834 = vadd.f32 %v3833, %v3236
      %v3835 = vadd.f32 %v3834, %v3238
      %v3836 = vadd.f32 %v3835, %v3240
      %v3837 = vadd.f32 %v3836, %v3242
      %v3838 = vadd.f32 %v3837, %v3244
      %v3839 = vadd.f32 %v3838, %v3246
      %v3840 = vadd.f32 %v3839, %v3248
      %v3841 = vadd.f32 %v3840, %v3250
      %v3842 = vadd.f32 %v3841, %v3252
      %v3843 = vadd.f32 %v3842, %v3254
      %v3844 = vadd.f32 %v3843, %v3256
      %v3845 = vadd.f32 %v3844, %v3258
      %v3846 = vadd.f32 %v3845, %v3260
      %v3847 = vadd.f32 %v3846, %v3262
      %v3848 = vadd.f32 %v3847, %v3264
      %v3849 = vadd.f32 %v3848, %v3266
      %v3850 = vadd.f32 %v3849, %v3268
      %v3851 = vadd.f32 %v3850, %v3270
      %v3852 = vadd.f32 %v3851, %v3272
      %v3853 = vadd.f32 %v3852, %v3274
      %v3854 = vadd.f32 %v3853, %v3276
      %v3855 = vadd.f32 %v3854, %v3278
      %v3856 = vadd.f32 %v3855, %v3280
      %v3857 = vrot.slane %v3856, 4
      %v3858 = vadd.f32 %v3856, %v3857
      %v3859 = vrot.slane %v3858, 2
      %v3860 = vadd.f32 %v3858, %v3859
      %v3861 = vrot.slane %v3860, 1
      %v3862 = vadd.f32 %v3860, %v3861
      %v3863 = vadd.f32 %v3281, %v3283
      %v3864 = vadd.f32 %v3863, %v3285
      %v3865 = vadd.f32 %v3864, %v3287
      %v3866 = vadd.f32 %v3865, %v3289
      %v3867 = vadd.f32 %v3866, %v3291
      %v3868 = vadd.f32 %v3867, %v3293
      %v3869 = vadd.f32 %v3868, %v3295
      %v3870 = vadd.f32 %v3869, %v3297
      %v3871 = vadd.f32 %v3870, %v3299
      %v3872 = vadd.f32 %v3871, %v3301
      %v3873 = vadd.f32 %v3872, %v3303
      %v3874 = vadd.f32 %v3873, %v3305
      %v3875 = vadd.f32 %v3874, %v3307
      %v3876 = vadd.f32 %v3875, %v3309
      %v3877 = vadd.f32 %v3876, %v3311
      %v3878 = vadd.f32 %v3877, %v3313
      %v3879 = vadd.f32 %v3878, %v3315
      %v3880 = vadd.f32 %v3879, %v3317
      %v3881 = vadd.f32 %v3880, %v3319
      %v3882 = vadd.f32 %v3881, %v3321
      %v3883 = vadd.f32 %v3882, %v3323
      %v3884 = vadd.f32 %v3883, %v3325
      %v3885 = vadd.f32 %v3884, %v3327
      %v3886 = vadd.f32 %v3885, %v3329
      %v3887 = vadd.f32 %v3886, %v3331
      %v3888 = vadd.f32 %v3887, %v3333
      %v3889 = vadd.f32 %v3888, %v3335
      %v3890 = vadd.f32 %v3889, %v3337
      %v3891 = vadd.f32 %v3890, %v3339
      %v3892 = vadd.f32 %v3891, %v3341
      %v3893 = vadd.f32 %v3892, %v3343
      %v3894 = vrot.slane %v3893, 4
      %v3895 = vadd.f32 %v3893, %v3894
      %v3896 = vrot.slane %v3895, 2
      %v3897 = vadd.f32 %v3895, %v3896
      %v3898 = vrot.slane %v3897, 1
      %v3899 = vadd.f32 %v3897, %v3898
      %v3900 = vadd.f32 %v3282, %v3284
      %v3901 = vadd.f32 %v3900, %v3286
      %v3902 = vadd.f32 %v3901, %v3288
      %v3903 = vadd.f32 %v3902, %v3290
      %v3904 = vadd.f32 %v3903, %v3292
      %v3905 = vadd.f32 %v3904, %v3294
      %v3906 = vadd.f32 %v3905, %v3296
      %v3907 = vadd.f32 %v3906, %v3298
      %v3908 = vadd.f32 %v3907, %v3300
      %v3909 = vadd.f32 %v3908, %v3302
      %v3910 = vadd.f32 %v3909, %v3304
      %v3911 = vadd.f32 %v3910, %v3306
      %v3912 = vadd.f32 %v3911, %v3308
      %v3913 = vadd.f32 %v3912, %v3310
      %v3914 = vadd.f32 %v3913, %v3312
      %v3915 = vadd.f32 %v3914, %v3314
      %v3916 = vadd.f32 %v3915, %v3316
      %v3917 = vadd.f32 %v3916, %v3318
      %v3918 = vadd.f32 %v3917, %v3320
      %v3919 = vadd.f32 %v3918, %v3322
      %v3920 = vadd.f32 %v3919, %v3324
      %v3921 = vadd.f32 %v3920, %v3326
      %v3922 = vadd.f32 %v3921, %v3328
      %v3923 = vadd.f32 %v3922, %v3330
      %v3924 = vadd.f32 %v3923, %v3332
      %v3925 = vadd.f32 %v3924, %v3334
      %v3926 = vadd.f32 %v3925, %v3336
      %v3927 = vadd.f32 %v3926, %v3338
      %v3928 = vadd.f32 %v3927, %v3340
      %v3929 = vadd.f32 %v3928, %v3342
      %v3930 = vadd.f32 %v3929, %v3344
      %v3931 = vrot.slane %v3930, 4
      %v3932 = vadd.f32 %v3930, %v3931
      %v3933 = vrot.slane %v3932, 2
      %v3934 = vadd.f32 %v3932, %v3933
      %v3935 = vrot.slane %v3934, 1
      %v3936 = vadd.f32 %v3934, %v3935
      %v3937 = vrcp.pop 256.0
      %v3938 = vmul.f32 %v3381, %v3937
      %v3939 = vmul.f32 %v3418, %v3937
      %v3940 = vmul.f32 %v3455, %v3937
      %v3941 = vmul.f32 %v3492, %v3937
      %v3942 = vmul.f32 %v3529, %v3937
      %v3943 = vmul.f32 %v3566, %v3937
      %v3944 = vmul.f32 %v3603, %v3937
      %v3945 = vmul.f32 %v3640, %v3937
      %v3946 = vmul.f32 %v3677, %v3937
      %v3947 = vmul.f32 %v3714, %v3937
      %v3948 = vmul.f32 %v3751, %v3937
      %v3949 = vmul.f32 %v3788, %v3937
      %v3950 = vmul.f32 %v3825, %v3937
      %v3951 = vmul.f32 %v3862, %v3937
      %v3952 = vmul.f32 %v3899, %v3937
      %v3953 = vmul.f32 %v3936, %v3937
      %vm3962 = vcmask 1041409
      %v3963 = vsel %vm3962, %v3940, %v3938
      %vm3964 = vcmask 1042434
      %v3965 = vsel %vm3964, %v3942, %v3963
      %vm3966 = vcmask 1043459
      %v3967 = vsel %vm3966, %v3944, %v3965
      %vm3968 = vcmask 1044484
      %v3969 = vsel %vm3968, %v3946, %v3967
      %vm3970 = vcmask 1045509
      %v3971 = vsel %vm3970, %v3948, %v3969
      %vm3972 = vcmask 1046534
      %v3973 = vsel %vm3972, %v3950, %v3971
      %vm3974 = vcmask 1047559
      %v3975 = vsel %vm3974, %v3952, %v3973
      %3977 = vst [vmem:[%s204] sm:$0xff] %v3975
      %v3986 = vsel %vm3962, %v3941, %v3939
      %v3987 = vsel %vm3964, %v3943, %v3986
      %v3988 = vsel %vm3966, %v3945, %v3987
      %v3989 = vsel %vm3968, %v3947, %v3988
      %v3990 = vsel %vm3970, %v3949, %v3989
      %v3991 = vsel %vm3972, %v3951, %v3990
      %v3992 = vsel %vm3974, %v3953, %v3991
      %3994 = vst [vmem:[%s208] sm:$0xff] %v3992
      %p3995 = scmp.lt.s32.totalorder %s16, 1
      %s3996 = scalar_select %p3995, %s16, 1
      %s3997 = smul.addr %s3996, 8
      %s3998 = scalar_lea.vmem %s3, %s3997
      %p3999 = scmp.lt.s32.totalorder %s16, 1
      %s4000 = scalar_select %p3999, %s16, 1
      %s4001 = smul.addr %s4000, 8
      %s4002 = scalar_lea.vmem %s4, %s4001
      // Predicated region
      $region33: #{byol_forward.3} parent=31 // pred_check
        %p4003 = pneg %p102
      $region34: #{byol_forward.3} parent=31 // pred_check_branch
        %4005 = sbr.rel (%p4003) target = $region36
      $region35: #{byol_forward.3} parent=31 // pred_region
        _
      $region36: #{byol_forward.3} parent=31 // pred_fallthru
        _
      // Predicated region
      $region37: #{byol_forward.3} parent=31 // pred_check
        %p4006 = pneg %p128
      $region38: #{byol_forward.3} parent=31 // pred_check_branch
        %4008 = sbr.rel (%p4006) target = $region40
      $region39: #{byol_forward.3} parent=31 // pred_region
        _
      $region40: #{byol_forward.3} parent=31 // pred_fallthru
        _
    $region32: #{byol_forward.3} parent=5 // pred_fallthru
      _
    %p4009 = scmp.le.s32.totalorder 2, %s11
    // Predicated region
    $region41: #{byol_forward.3} parent=5 // pred_check
      %p4010 = pneg %p4009
    $region42: #{byol_forward.3} parent=5 // pred_check_branch
      %4012 = sbr.rel (%p4010) target = $region44
    $region43: #{byol_forward.3} parent=5 // pred_region
      %s4013 = ssub.s32 %s11, 2
      // Predicated region
      $region45: #{byol_forward.3} parent=43 // pred_check
        %p4014 = pneg %p108
      $region46: #{byol_forward.3} parent=43 // pred_check_branch
        %4016 = sbr.rel (%p4014) target = $region48
      $region47: #{byol_forward.3} parent=43 // pred_region
        %p4017 = scmp.lt.s32.totalorder %s17, 1
        %s4018 = scalar_select %p4017, %s17, 1
        %s4019 = smul.addr %s4018, 8
        %s4020 = scalar_lea.vmem %s3, %s4019
      $region48: #{byol_forward.3} parent=43 // pred_fallthru
        _
      // Predicated region
      $region49: #{byol_forward.3} parent=43 // pred_check
        %p4021 = pneg %p134
      $region50: #{byol_forward.3} parent=43 // pred_check_branch
        %4023 = sbr.rel (%p4021) target = $region52
      $region51: #{byol_forward.3} parent=43 // pred_region
        %p4024 = scmp.lt.s32.totalorder %s17, 1
        %s4025 = scalar_select %p4024, %s17, 1
        %s4026 = smul.addr %s4025, 8
        %s4027 = scalar_lea.vmem %s4, %s4026
      $region52: #{byol_forward.3} parent=43 // pred_fallthru
        _
    $region44: #{byol_forward.3} parent=5 // pred_fallthru
      _
  $region6: #{byol_forward.3} parent=0 // loop_footer
    %s15 = sadd.s32 1, %s11
  $region7: #{byol_forward.3} parent=0 // loop_footer_branch
    %10 = sbr.rel target = $region3
  $region8: #{byol_forward.3} parent=0 // loop_exit
    _

</llo_original>
